<compile_context>
chip_gen: v6e
topology: v6e:2x2x1
jax: 0.10.0
libtpu: 0.0.40
codegen_flags: <defaults>
</compile_context>

<pallas_src>
import functools

import jax
import jax.numpy as jnp
from jax import lax
from jax.experimental import pallas as pl
from jax.experimental.pallas import tpu as pltpu

PAD_ID = 0  # constants.PAD_ID

# Explicit scoped-VMEM cap: safe on v5e/v6e (128 MiB phys) and v7x (64 MiB phys).
_VMEM_LIMIT = 32 * 1024 * 1024


def _largest_divisor(n, candidates):
    for c in candidates:
        if c <= n and n % c == 0:
            return c
    return 1


# ----------------------------------------------------------------------------
# Input-gate precompute: gates_in = e @ W_ih + (b_ih + b_hh), one big matmul.
# ----------------------------------------------------------------------------
def _input_gates_kernel(e_ref, wih_ref, b_ref, g_ref):
    T, B, E = e_ref.shape
    x = e_ref[...].reshape(T * B, E).astype(jnp.bfloat16)
    acc = jnp.dot(x, wih_ref[...], preferred_element_type=jnp.float32)  # (T*B, 4H)
    g_ref[...] = acc.reshape(T, B, acc.shape[-1]) + b_ref[...]


def input_gates_forward(e, w_ih, b):
    """e: (S,B,E) f32; w_ih: (E,4H) bf16; b: (1,4H) f32 -> (S,B,4H) f32."""
    S, B, E = e.shape
    G = w_ih.shape[1]
    ts = _largest_divisor(S, (16, 8, 4, 2, 1))
    cost = pl.CostEstimate(
        flops=2 * S * B * E * G,
        transcendentals=0,
        bytes_accessed=S * B * E * 4 + E * G * 2 + G * 4 + S * B * G * 4)
    return pl.pallas_call(
        _input_gates_kernel,
        out_shape=jax.ShapeDtypeStruct((S, B, G), jnp.float32),
        grid_spec=pltpu.PrefetchScalarGridSpec(
            num_scalar_prefetch=0,
            grid=(S // ts,),
            in_specs=[
                pl.BlockSpec((ts, B, E), lambda i: (i, 0, 0)),
                # grid-invariant weights: single-buffered to halve resident VMEM
                pl.BlockSpec((E, G), lambda i: (0, 0),
                             pipeline_mode=pl.Buffered(1)),
                pl.BlockSpec((1, G), lambda i: (0, 0),
                             pipeline_mode=pl.Buffered(1)),
            ],
            out_specs=pl.BlockSpec((ts, B, G), lambda i: (i, 0, 0)),
        ),
        compiler_params=pltpu.CompilerParams(
            dimension_semantics=("parallel",),
            vmem_limit_bytes=_VMEM_LIMIT),
        cost_estimate=cost,
    )(e, w_ih, b)


# ----------------------------------------------------------------------------
# LSTM recurrence: grid = (batch_split, time_chunks); per step only h @ W_hh.
# ----------------------------------------------------------------------------
def _lstm_kernel(gin_ref, whh_ref, h_out_ref, h_sc, c_sc):
    # New (half-)batch sequence begins at the first time chunk: reset state.
    @pl.when(pl.program_id(1) == 0)
    def _():
        h_sc[...] = jnp.zeros_like(h_sc)
        c_sc[...] = jnp.zeros_like(c_sc)

    T = gin_ref.shape[0]
    H = h_sc.shape[-1]

    def step(t, carry):
        # bias + x@W_ih already folded into gin; only the recurrent matmul here.
        gates = gin_ref[t] + jnp.dot(
            h_sc[...].astype(jnp.bfloat16), whh_ref[...],
            preferred_element_type=jnp.float32)                       # (Bh, 4H)
        # H is a multiple of 128 -> gate slices land on lane-tile boundaries.
        i = jax.nn.sigmoid(gates[:, 0 * H:1 * H])
        f = jax.nn.sigmoid(gates[:, 1 * H:2 * H])
        g = jnp.tanh(gates[:, 2 * H:3 * H])
        o = jax.nn.sigmoid(gates[:, 3 * H:4 * H])
        c = f * c_sc[...] + i * g
        h = o * jnp.tanh(c)
        c_sc[...] = c
        h_sc[...] = h
        h_out_ref[t] = h
        return carry

    lax.fori_loop(0, T, step, 0, unroll=True)


def lstm_forward(gates_in, w_hh):
    """gates_in: (S,B,4H) f32; w_hh: (H,4H) bf16 -> (S,B,H) f32."""
    S, B, G = gates_in.shape
    H = w_hh.shape[0]
    # v7x megacore: split batch across 2 TCs (no-op loop-split on v5e/v6e).
    bs = 2 if (B >= 16 and B % 16 == 0) else 1
    bh = B // bs
    tc = _largest_divisor(S, (8, 4, 2, 1))  # time chunk amortizes grid overhead
    cost = pl.CostEstimate(
        flops=2 * S * B * H * G + 10 * S * B * H,
        transcendentals=5 * S * B * H,
        bytes_accessed=S * B * G * 4 + H * G * 2 + S * B * H * 4)
    return pl.pallas_call(
        _lstm_kernel,
        out_shape=jax.ShapeDtypeStruct((S, B, H), jnp.float32),
        grid_spec=pltpu.PrefetchScalarGridSpec(
            num_scalar_prefetch=0,
            grid=(bs, S // tc),
            in_specs=[
                pl.BlockSpec((tc, bh, G), lambda b, c: (c, b, 0)),
                pl.BlockSpec((H, G), lambda b, c: (0, 0),
                             pipeline_mode=pl.Buffered(1)),
            ],
            out_specs=pl.BlockSpec((tc, bh, H), lambda b, c: (c, b, 0)),
            scratch_shapes=[
                pltpu.VMEM((bh, H), jnp.float32),  # h state
                pltpu.VMEM((bh, H), jnp.float32),  # c state
            ],
        ),
        compiler_params=pltpu.CompilerParams(
            dimension_semantics=("parallel", "arbitrary"),
            vmem_limit_bytes=_VMEM_LIMIT),
        cost_estimate=cost,
    )(gates_in, w_hh)


# ----------------------------------------------------------------------------
# Projection: logits = h @ W_t + bias[inds], flattened (T*B, H)@(H, TV) tiles.
# ----------------------------------------------------------------------------
def _proj_kernel(h_ref, w_ref, b_ref, o_ref):
    T, B, H = h_ref.shape
    hm = h_ref[...].reshape(T * B, H).astype(jnp.bfloat16)
    acc = jnp.dot(hm, w_ref[...], preferred_element_type=jnp.float32)  # (T*B, TV)
    o_ref[...] = acc.reshape(T, B, acc.shape[-1]) + b_ref[...]


def projection_forward(h, w_t, bias_per_batch):
    """h: (S,B,H) f32; w_t: (H,V) bf16 (pre-transposed); bias: (B,V) f32."""
    S, B, H = h.shape
    V = w_t.shape[1]
    ts = _largest_divisor(S, (16, 8, 4, 2, 1))
    # Vocab tile: multiple of 128 -> unmasked lane-dense stores; keeps the
    # (H, TV) weight tile small enough for v7x's 64 MiB VMEM at real sizes.
    tv = _largest_divisor(V, (1024, 512, 256, 128))
    cost = pl.CostEstimate(
        flops=2 * S * B * H * V,
        transcendentals=0,
        bytes_accessed=S * B * H * 4 + H * V * 2 + B * V * 4 + S * B * V * 4)
    return pl.pallas_call(
        _proj_kernel,
        out_shape=jax.ShapeDtypeStruct((S, B, V), jnp.float32),
        grid_spec=pltpu.PrefetchScalarGridSpec(
            num_scalar_prefetch=0,
            grid=(S // ts, V // tv),
            in_specs=[
                pl.BlockSpec((ts, B, H), lambda i, j: (i, 0, 0)),
                pl.BlockSpec((H, tv), lambda i, j: (0, j)),
                pl.BlockSpec((B, tv), lambda i, j: (0, j)),
            ],
            out_specs=pl.BlockSpec((ts, B, tv), lambda i, j: (i, 0, j)),
        ),
        compiler_params=pltpu.CompilerParams(
            dimension_semantics=("parallel", "parallel"),
            vmem_limit_bytes=_VMEM_LIMIT),
        cost_estimate=cost,
    )(h, w_t, bias_per_batch)


# ----------------------------------------------------------------------------
# Parameters / glue
# ----------------------------------------------------------------------------
def init_params(key, vocab_size, emb_size, hid_size, num_bias, tie_weights):
    ks = jax.random.split(key, 6)
    scale = 0.1
    emb_w = scale * jax.random.normal(ks[0], (vocab_size, emb_size), jnp.float32)
    emb_w = emb_w.at[PAD_ID].set(0.0)  # padding_idx row
    # LSTM params stored pre-transposed for x @ W, weights in bf16 (MXU-native).
    w_ih = scale * jax.random.normal(ks[1], (emb_size, 4 * hid_size), jnp.float32)
    w_hh = scale * jax.random.normal(ks[2], (hid_size, 4 * hid_size), jnp.float32)
    b_ih = scale * jax.random.normal(ks[3], (4 * hid_size,), jnp.float32)
    b_hh = scale * jax.random.normal(ks[4], (4 * hid_size,), jnp.float32)
    b = (b_ih + b_hh).reshape(1, 4 * hid_size)
    if tie_weights:
        assert emb_size == hid_size, "tied weights require emb_size == hid_size"
        proj_w_t = emb_w.T  # transposed ONCE at init, never per forward call
        # TODO(synk): PyTorch's max_norm renormalizes the shared table in place;
        # here the tied projection uses the un-renormalized rows.
    else:
        proj_w_t = scale * jax.random.normal(
            ks[5], (hid_size, vocab_size), jnp.float32)
    proj_b = 0.01 * jnp.arange(num_bias * vocab_size, dtype=jnp.float32).reshape(
        num_bias, vocab_size)
    return dict(
        emb_w=emb_w,
        w_ih=w_ih.astype(jnp.bfloat16),
        w_hh=w_hh.astype(jnp.bfloat16),
        b=b,
        proj_w_t=proj_w_t.astype(jnp.bfloat16),  # (H, V), pre-transposed
        proj_b=proj_b,
    )


def embedding_lookup(emb_w, x, max_norm):
    # glue: gather + max_norm renormalization (mirrors nn.Embedding(max_norm=...))
    e = jnp.take(emb_w, x, axis=0)  # (S, B, E)
    norm = jnp.linalg.norm(e, axis=-1, keepdims=True)
    scale = jnp.where(norm > max_norm, max_norm / (norm + 1e-7), 1.0)
    return e * scale


@functools.partial(jax.jit, static_argnames=("emb_max_norm",))
def rnn_lm_forward(params, x, inds, emb_max_norm=1.0):
    """x: (S, B) int32 token ids; inds: (B,) int32 bias selector."""
    S, B = x.shape
    E = params["emb_w"].shape[1]
    H = params["w_hh"].shape[0]
    V = params["proj_w_t"].shape[1]
    assert E % 128 == 0 and H % 128 == 0 and V % 128 == 0, (
        "feature dims must be 128-aligned")
    # TODO(synk): pad E/H/V to 128 multiples for arbitrary configs.

    # Pad batch to a multiple of 8 (full f32 sublanes / MXU M utilization).
    pad_b = (-B) % 8
    if pad_b:
        x = jnp.concatenate(
            [x, jnp.full((S, pad_b), PAD_ID, x.dtype)], axis=1)
        inds = jnp.concatenate(
            [inds, jnp.zeros((pad_b,), inds.dtype)], axis=0)

    e = embedding_lookup(params["emb_w"], x, emb_max_norm)            # (S,Bp,E)
    gates_in = input_gates_forward(e, params["w_ih"], params["b"])    # (S,Bp,4H)
    h = lstm_forward(gates_in, params["w_hh"])                        # (S,Bp,H)
    # dropout: identity in eval mode
    bias_per_batch = jnp.take(params["proj_b"], inds, axis=0)         # (Bp,V)
    logits = projection_forward(h, params["proj_w_t"], bias_per_batch)  # (S,Bp,V)
    if pad_b:
        logits = logits[:, :B]
    return logits


if __name__ == "__main__":
    vocab_size, emb_size, hid_size = 256, 128, 128
    num_bias = 3
    seq, batch = 16, 16
    emb_max_norm = 1.0
    tie_weights = False

    key = jax.random.PRNGKey(0)
    kp, kx, ki = jax.random.split(key, 3)
    params = init_params(kp, vocab_size, emb_size, hid_size, num_bias, tie_weights)

    x = jax.random.randint(kx, (seq, batch), 0, vocab_size, dtype=jnp.int32)
    inds = jax.random.randint(ki, (batch,), 0, num_bias, dtype=jnp.int32)

    logits = rnn_lm_forward(params, x, inds, emb_max_norm=emb_max_norm)
    logits = jax.block_until_ready(logits)

    assert logits.shape == (seq, batch, vocab_size)
    assert bool(jnp.all(jnp.isfinite(logits)))
    print("KERNEL_OK")
</pallas_src>

<mosaic_0001>
module attributes {stable_mosaic.version = 11 : i64} {
  func.func @_input_gates_kernel(%arg0: i32, %arg1: memref<16x16x128xf32, #tpu.memory_space<vmem>>, %arg2: memref<128x512xbf16, #tpu.memory_space<vmem>>, %arg3: memref<1x512xf32, #tpu.memory_space<vmem>>, %arg4: memref<16x16x512xf32, #tpu.memory_space<vmem>>) attributes {dimension_semantics = [#tpu.dimension_semantics<parallel>], iteration_bounds = array<i64: 1>, scalar_prefetch = 0 : i64, scratch_operands = 0 : i64, tpu.core_type = #tpu.core_type<tc>, window_params = [{transform_indices = @transform_0, window_bounds = array<i64: 16, 16, 128>}, {pipeline_mode = #tpu.pipeline_mode<synchronous>, transform_indices = @transform_1, window_bounds = array<i64: 128, 512>}, {pipeline_mode = #tpu.pipeline_mode<synchronous>, transform_indices = @transform_2, window_bounds = array<i64: 1, 512>}, {transform_indices = @transform_3, window_bounds = array<i64: 16, 16, 512>}]} {
    %c0 = arith.constant 0 : index
    %c0_0 = arith.constant 0 : index
    %c0_1 = arith.constant 0 : index
    %0 = vector.load %arg1[%c0, %c0_0, %c0_1] : memref<16x16x128xf32, #tpu.memory_space<vmem>>, vector<16x16x128xf32>
    %1 = vector.shape_cast %0 : vector<16x16x128xf32> to vector<256x128xf32>
    %2 = arith.truncf %1 : vector<256x128xf32> to vector<256x128xbf16>
    %c0_2 = arith.constant 0 : index
    %c0_3 = arith.constant 0 : index
    %3 = vector.load %arg2[%c0_2, %c0_3] : memref<128x512xbf16, #tpu.memory_space<vmem>>, vector<128x512xbf16>
    %cst = arith.constant dense<0.000000e+00> : vector<256x512xf32>
    %4 = tpu.matmul %2, %3, %cst {dimension_numbers = #tpu.dot_dimension_numbers<[1], [0], [0], [1], [0, 0, 1, 1], [], []>} : vector<256x128xbf16>, vector<128x512xbf16>, vector<256x512xf32> -> vector<256x512xf32>
    %5 = vector.shape_cast %4 : vector<256x512xf32> to vector<16x16x512xf32>
    %c0_4 = arith.constant 0 : index
    %c0_5 = arith.constant 0 : index
    %6 = vector.load %arg3[%c0_4, %c0_5] : memref<1x512xf32, #tpu.memory_space<vmem>>, vector<1x512xf32>
    %7 = vector.shape_cast %6 : vector<1x512xf32> to vector<1x1x512xf32>
    %8 = vector.broadcast %7 : vector<1x1x512xf32> to vector<16x16x512xf32>
    %9 = arith.addf %5, %8 : vector<16x16x512xf32>
    %c0_6 = arith.constant 0 : index
    %c0_7 = arith.constant 0 : index
    %c0_8 = arith.constant 0 : index
    %10 = vector.load %arg4[%c0_6, %c0_7, %c0_8] : memref<16x16x512xf32, #tpu.memory_space<vmem>>, vector<16x16x512xf32>
    tpu.vector_store %arg4[%c0_6, %c0_7, %c0_8], %9 {strides = array<i32>} : memref<16x16x512xf32, #tpu.memory_space<vmem>>, vector<16x16x512xf32>,
    return
  }
  func.func @transform_0(%arg0: i32) -> (i32, i32, i32) {
    %c0_i32 = arith.constant 0 : i32
    %c0_i32_0 = arith.constant 0 : i32
    %c0_i32_1 = arith.constant 0 : i32
    return %arg0, %c0_i32, %c0_i32_0 : i32, i32, i32
  }
  func.func @transform_1(%arg0: i32) -> (i32, i32) {
    %c0_i32 = arith.constant 0 : i32
    %c0_i32_0 = arith.constant 0 : i32
    %c0_i32_1 = arith.constant 0 : i32
    return %c0_i32, %c0_i32_0 : i32, i32
  }
  func.func @transform_2(%arg0: i32) -> (i32, i32) {
    %c0_i32 = arith.constant 0 : i32
    %c0_i32_0 = arith.constant 0 : i32
    %c0_i32_1 = arith.constant 0 : i32
    return %c0_i32, %c0_i32_0 : i32, i32
  }
  func.func @transform_3(%arg0: i32) -> (i32, i32, i32) {
    %c0_i32 = arith.constant 0 : i32
    %c0_i32_0 = arith.constant 0 : i32
    %c0_i32_1 = arith.constant 0 : i32
    return %arg0, %c0_i32, %c0_i32_0 : i32, i32, i32
  }
}

module attributes {stable_mosaic.version = 11 : i64} {
  func.func @_lstm_kernel(%arg0: i32, %arg1: i32, %arg2: memref<8x8x512xf32, #tpu.memory_space<vmem>>, %arg3: memref<128x512xbf16, #tpu.memory_space<vmem>>, %arg4: memref<8x8x128xf32, #tpu.memory_space<vmem>>, %arg5: memref<8x128xf32, #tpu.memory_space<vmem>>, %arg6: memref<8x128xf32, #tpu.memory_space<vmem>>) attributes {dimension_semantics = [#tpu.dimension_semantics<parallel>, #tpu.dimension_semantics<arbitrary>], iteration_bounds = array<i64: 2, 2>, scalar_prefetch = 0 : i64, scratch_operands = 2 : i64, tpu.core_type = #tpu.core_type<tc>, window_params = [{transform_indices = @transform_0, window_bounds = array<i64: 8, 8, 512>}, {pipeline_mode = #tpu.pipeline_mode<synchronous>, transform_indices = @transform_1, window_bounds = array<i64: 128, 512>}, {transform_indices = @transform_2, window_bounds = array<i64: 8, 8, 128>}]} {
    %c0_i32 = arith.constant 0 : i32
    %0 = arith.cmpi eq, %arg1, %c0_i32 : i32
    %1 = arith.extui %0 : i1 to i32
    %c0_i32_0 = arith.constant 0 : i32
    %2 = arith.cmpi ne, %1, %c0_i32_0 : i32
    scf.if %2 {
      %cst_144 = arith.constant 0.000000e+00 : f32
      %323 = vector.broadcast %cst_144 : f32 to vector<8x128xf32>
      %c0_145 = arith.constant 0 : index
      %c0_146 = arith.constant 0 : index
      %324 = vector.load %arg5[%c0_145, %c0_146] : memref<8x128xf32, #tpu.memory_space<vmem>>, vector<8x128xf32>
      tpu.vector_store %arg5[%c0_145, %c0_146], %323 {strides = array<i32>} : memref<8x128xf32, #tpu.memory_space<vmem>>, vector<8x128xf32>,
      %cst_147 = arith.constant 0.000000e+00 : f32
      %325 = vector.broadcast %cst_147 : f32 to vector<8x128xf32>
      %c0_148 = arith.constant 0 : index
      %c0_149 = arith.constant 0 : index
      %326 = vector.load %arg6[%c0_148, %c0_149] : memref<8x128xf32, #tpu.memory_space<vmem>>, vector<8x128xf32>
      tpu.vector_store %arg6[%c0_148, %c0_149], %325 {strides = array<i32>} : memref<8x128xf32, #tpu.memory_space<vmem>>, vector<8x128xf32>,
    } else {
    }
    %c0_i32_1 = arith.constant 0 : i32
    %3 = arith.index_cast %c0_i32_1 : i32 to index
    %c0 = arith.constant 0 : index
    %c0_2 = arith.constant 0 : index
    %4 = vector.load %arg2[%3, %c0, %c0_2] : memref<8x8x512xf32, #tpu.memory_space<vmem>>, vector<1x8x512xf32>
    %5 = vector.shape_cast %4 : vector<1x8x512xf32> to vector<8x512xf32>
    %c0_3 = arith.constant 0 : index
    %c0_4 = arith.constant 0 : index
    %6 = vector.load %arg5[%c0_3, %c0_4] : memref<8x128xf32, #tpu.memory_space<vmem>>, vector<8x128xf32>
    %7 = arith.truncf %6 : vector<8x128xf32> to vector<8x128xbf16>
    %c0_5 = arith.constant 0 : index
    %c0_6 = arith.constant 0 : index
    %8 = vector.load %arg3[%c0_5, %c0_6] : memref<128x512xbf16, #tpu.memory_space<vmem>>, vector<128x512xbf16>
    %cst = arith.constant dense<0.000000e+00> : vector<8x512xf32>
    %9 = tpu.matmul %7, %8, %cst {dimension_numbers = #tpu.dot_dimension_numbers<[1], [0], [0], [1], [0, 0, 1, 1], [], []>} : vector<8x128xbf16>, vector<128x512xbf16>, vector<8x512xf32> -> vector<8x512xf32>
    %10 = arith.addf %5, %9 : vector<8x512xf32>
    %11 = vector.extract_strided_slice %10 {offsets = [0, 0], sizes = [8, 128], strides = [1, 1]} : vector<8x512xf32> to vector<8x128xf32>
    %12 = arith.negf %11 : vector<8x128xf32>
    %13 = math.exp %12 : vector<8x128xf32>
    %cst_7 = arith.constant 1.000000e+00 : f32
    %14 = vector.broadcast %cst_7 : f32 to vector<8x128xf32>
    %15 = arith.addf %14, %13 : vector<8x128xf32>
    %16 = arith.divf %14, %15 : vector<8x128xf32>
    %17 = vector.extract_strided_slice %10 {offsets = [0, 128], sizes = [8, 128], strides = [1, 1]} : vector<8x512xf32> to vector<8x128xf32>
    %18 = arith.negf %17 : vector<8x128xf32>
    %19 = math.exp %18 : vector<8x128xf32>
    %cst_8 = arith.constant 1.000000e+00 : f32
    %20 = vector.broadcast %cst_8 : f32 to vector<8x128xf32>
    %21 = arith.addf %20, %19 : vector<8x128xf32>
    %22 = arith.divf %20, %21 : vector<8x128xf32>
    %23 = vector.extract_strided_slice %10 {offsets = [0, 256], sizes = [8, 128], strides = [1, 1]} : vector<8x512xf32> to vector<8x128xf32>
    %24 = math.tanh %23 : vector<8x128xf32>
    %25 = vector.extract_strided_slice %10 {offsets = [0, 384], sizes = [8, 128], strides = [1, 1]} : vector<8x512xf32> to vector<8x128xf32>
    %26 = arith.negf %25 : vector<8x128xf32>
    %27 = math.exp %26 : vector<8x128xf32>
    %cst_9 = arith.constant 1.000000e+00 : f32
    %28 = vector.broadcast %cst_9 : f32 to vector<8x128xf32>
    %29 = arith.addf %28, %27 : vector<8x128xf32>
    %30 = arith.divf %28, %29 : vector<8x128xf32>
    %c0_10 = arith.constant 0 : index
    %c0_11 = arith.constant 0 : index
    %31 = vector.load %arg6[%c0_10, %c0_11] : memref<8x128xf32, #tpu.memory_space<vmem>>, vector<8x128xf32>
    %32 = arith.mulf %22, %31 : vector<8x128xf32>
    %33 = arith.mulf %16, %24 : vector<8x128xf32>
    %34 = arith.addf %32, %33 : vector<8x128xf32>
    %35 = math.tanh %34 : vector<8x128xf32>
    %36 = arith.mulf %30, %35 : vector<8x128xf32>
    %c0_12 = arith.constant 0 : index
    %c0_13 = arith.constant 0 : index
    %37 = vector.load %arg6[%c0_12, %c0_13] : memref<8x128xf32, #tpu.memory_space<vmem>>, vector<8x128xf32>
    tpu.vector_store %arg6[%c0_12, %c0_13], %34 {strides = array<i32>} : memref<8x128xf32, #tpu.memory_space<vmem>>, vector<8x128xf32>,
    %c0_14 = arith.constant 0 : index
    %c0_15 = arith.constant 0 : index
    %38 = vector.load %arg5[%c0_14, %c0_15] : memref<8x128xf32, #tpu.memory_space<vmem>>, vector<8x128xf32>
    tpu.vector_store %arg5[%c0_14, %c0_15], %36 {strides = array<i32>} : memref<8x128xf32, #tpu.memory_space<vmem>>, vector<8x128xf32>,
    %39 = arith.index_cast %c0_i32_1 : i32 to index
    %c0_16 = arith.constant 0 : index
    %c0_17 = arith.constant 0 : index
    %40 = vector.load %arg4[%39, %c0_16, %c0_17] : memref<8x8x128xf32, #tpu.memory_space<vmem>>, vector<1x8x128xf32>
    %41 = vector.shape_cast %40 : vector<1x8x128xf32> to vector<8x128xf32>
    %42 = vector.shape_cast %36 : vector<8x128xf32> to vector<1x8x128xf32>
    tpu.vector_store %arg4[%39, %c0_16, %c0_17], %42 {strides = array<i32>} : memref<8x8x128xf32, #tpu.memory_space<vmem>>, vector<1x8x128xf32>,
    %c1_i32 = arith.constant 1 : i32
    %43 = arith.index_cast %c1_i32 : i32 to index
    %c0_18 = arith.constant 0 : index
    %c0_19 = arith.constant 0 : index
    %44 = vector.load %arg2[%43, %c0_18, %c0_19] : memref<8x8x512xf32, #tpu.memory_space<vmem>>, vector<1x8x512xf32>
    %45 = vector.shape_cast %44 : vector<1x8x512xf32> to vector<8x512xf32>
    %c0_20 = arith.constant 0 : index
    %c0_21 = arith.constant 0 : index
    %46 = vector.load %arg5[%c0_20, %c0_21] : memref<8x128xf32, #tpu.memory_space<vmem>>, vector<8x128xf32>
    %47 = arith.truncf %46 : vector<8x128xf32> to vector<8x128xbf16>
    %c0_22 = arith.constant 0 : index
    %c0_23 = arith.constant 0 : index
    %48 = vector.load %arg3[%c0_22, %c0_23] : memref<128x512xbf16, #tpu.memory_space<vmem>>, vector<128x512xbf16>
    %cst_24 = arith.constant dense<0.000000e+00> : vector<8x512xf32>
    %49 = tpu.matmul %47, %48, %cst_24 {dimension_numbers = #tpu.dot_dimension_numbers<[1], [0], [0], [1], [0, 0, 1, 1], [], []>} : vector<8x128xbf16>, vector<128x512xbf16>, vector<8x512xf32> -> vector<8x512xf32>
    %50 = arith.addf %45, %49 : vector<8x512xf32>
    %51 = vector.extract_strided_slice %50 {offsets = [0, 0], sizes = [8, 128], strides = [1, 1]} : vector<8x512xf32> to vector<8x128xf32>
    %52 = arith.negf %51 : vector<8x128xf32>
    %53 = math.exp %52 : vector<8x128xf32>
    %cst_25 = arith.constant 1.000000e+00 : f32
    %54 = vector.broadcast %cst_25 : f32 to vector<8x128xf32>
    %55 = arith.addf %54, %53 : vector<8x128xf32>
    %56 = arith.divf %54, %55 : vector<8x128xf32>
    %57 = vector.extract_strided_slice %50 {offsets = [0, 128], sizes = [8, 128], strides = [1, 1]} : vector<8x512xf32> to vector<8x128xf32>
    %58 = arith.negf %57 : vector<8x128xf32>
    %59 = math.exp %58 : vector<8x128xf32>
    %cst_26 = arith.constant 1.000000e+00 : f32
    %60 = vector.broadcast %cst_26 : f32 to vector<8x128xf32>
    %61 = arith.addf %60, %59 : vector<8x128xf32>
    %62 = arith.divf %60, %61 : vector<8x128xf32>
    %63 = vector.extract_strided_slice %50 {offsets = [0, 256], sizes = [8, 128], strides = [1, 1]} : vector<8x512xf32> to vector<8x128xf32>
    %64 = math.tanh %63 : vector<8x128xf32>
    %65 = vector.extract_strided_slice %50 {offsets = [0, 384], sizes = [8, 128], strides = [1, 1]} : vector<8x512xf32> to vector<8x128xf32>
    %66 = arith.negf %65 : vector<8x128xf32>
    %67 = math.exp %66 : vector<8x128xf32>
    %cst_27 = arith.constant 1.000000e+00 : f32
    %68 = vector.broadcast %cst_27 : f32 to vector<8x128xf32>
    %69 = arith.addf %68, %67 : vector<8x128xf32>
    %70 = arith.divf %68, %69 : vector<8x128xf32>
    %c0_28 = arith.constant 0 : index
    %c0_29 = arith.constant 0 : index
    %71 = vector.load %arg6[%c0_28, %c0_29] : memref<8x128xf32, #tpu.memory_space<vmem>>, vector<8x128xf32>
    %72 = arith.mulf %62, %71 : vector<8x128xf32>
    %73 = arith.mulf %56, %64 : vector<8x128xf32>
    %74 = arith.addf %72, %73 : vector<8x128xf32>
    %75 = math.tanh %74 : vector<8x128xf32>
    %76 = arith.mulf %70, %75 : vector<8x128xf32>
    %c0_30 = arith.constant 0 : index
    %c0_31 = arith.constant 0 : index
    %77 = vector.load %arg6[%c0_30, %c0_31] : memref<8x128xf32, #tpu.memory_space<vmem>>, vector<8x128xf32>
    tpu.vector_store %arg6[%c0_30, %c0_31], %74 {strides = array<i32>} : memref<8x128xf32, #tpu.memory_space<vmem>>, vector<8x128xf32>,
    %c0_32 = arith.constant 0 : index
    %c0_33 = arith.constant 0 : index
    %78 = vector.load %arg5[%c0_32, %c0_33] : memref<8x128xf32, #tpu.memory_space<vmem>>, vector<8x128xf32>
    tpu.vector_store %arg5[%c0_32, %c0_33], %76 {strides = array<i32>} : memref<8x128xf32, #tpu.memory_space<vmem>>, vector<8x128xf32>,
    %79 = arith.index_cast %c1_i32 : i32 to index
    %c0_34 = arith.constant 0 : index
    %c0_35 = arith.constant 0 : index
    %80 = vector.load %arg4[%79, %c0_34, %c0_35] : memref<8x8x128xf32, #tpu.memory_space<vmem>>, vector<1x8x128xf32>
    %81 = vector.shape_cast %80 : vector<1x8x128xf32> to vector<8x128xf32>
    %82 = vector.shape_cast %76 : vector<8x128xf32> to vector<1x8x128xf32>
    tpu.vector_store %arg4[%79, %c0_34, %c0_35], %82 {strides = array<i32>} : memref<8x8x128xf32, #tpu.memory_space<vmem>>, vector<1x8x128xf32>,
    %c2_i32 = arith.constant 2 : i32
    %83 = arith.index_cast %c2_i32 : i32 to index
    %c0_36 = arith.constant 0 : index
    %c0_37 = arith.constant 0 : index
    %84 = vector.load %arg2[%83, %c0_36, %c0_37] : memref<8x8x512xf32, #tpu.memory_space<vmem>>, vector<1x8x512xf32>
    %85 = vector.shape_cast %84 : vector<1x8x512xf32> to vector<8x512xf32>
    %c0_38 = arith.constant 0 : index
    %c0_39 = arith.constant 0 : index
    %86 = vector.load %arg5[%c0_38, %c0_39] : memref<8x128xf32, #tpu.memory_space<vmem>>, vector<8x128xf32>
    %87 = arith.truncf %86 : vector<8x128xf32> to vector<8x128xbf16>
    %c0_40 = arith.constant 0 : index
    %c0_41 = arith.constant 0 : index
    %88 = vector.load %arg3[%c0_40, %c0_41] : memref<128x512xbf16, #tpu.memory_space<vmem>>, vector<128x512xbf16>
    %cst_42 = arith.constant dense<0.000000e+00> : vector<8x512xf32>
    %89 = tpu.matmul %87, %88, %cst_42 {dimension_numbers = #tpu.dot_dimension_numbers<[1], [0], [0], [1], [0, 0, 1, 1], [], []>} : vector<8x128xbf16>, vector<128x512xbf16>, vector<8x512xf32> -> vector<8x512xf32>
    %90 = arith.addf %85, %89 : vector<8x512xf32>
    %91 = vector.extract_strided_slice %90 {offsets = [0, 0], sizes = [8, 128], strides = [1, 1]} : vector<8x512xf32> to vector<8x128xf32>
    %92 = arith.negf %91 : vector<8x128xf32>
    %93 = math.exp %92 : vector<8x128xf32>
    %cst_43 = arith.constant 1.000000e+00 : f32
    %94 = vector.broadcast %cst_43 : f32 to vector<8x128xf32>
    %95 = arith.addf %94, %93 : vector<8x128xf32>
    %96 = arith.divf %94, %95 : vector<8x128xf32>
    %97 = vector.extract_strided_slice %90 {offsets = [0, 128], sizes = [8, 128], strides = [1, 1]} : vector<8x512xf32> to vector<8x128xf32>
    %98 = arith.negf %97 : vector<8x128xf32>
    %99 = math.exp %98 : vector<8x128xf32>
    %cst_44 = arith.constant 1.000000e+00 : f32
    %100 = vector.broadcast %cst_44 : f32 to vector<8x128xf32>
    %101 = arith.addf %100, %99 : vector<8x128xf32>
    %102 = arith.divf %100, %101 : vector<8x128xf32>
    %103 = vector.extract_strided_slice %90 {offsets = [0, 256], sizes = [8, 128], strides = [1, 1]} : vector<8x512xf32> to vector<8x128xf32>
    %104 = math.tanh %103 : vector<8x128xf32>
    %105 = vector.extract_strided_slice %90 {offsets = [0, 384], sizes = [8, 128], strides = [1, 1]} : vector<8x512xf32> to vector<8x128xf32>
    %106 = arith.negf %105 : vector<8x128xf32>
    %107 = math.exp %106 : vector<8x128xf32>
    %cst_45 = arith.constant 1.000000e+00 : f32
    %108 = vector.broadcast %cst_45 : f32 to vector<8x128xf32>
    %109 = arith.addf %108, %107 : vector<8x128xf32>
    %110 = arith.divf %108, %109 : vector<8x128xf32>
    %c0_46 = arith.constant 0 : index
    %c0_47 = arith.constant 0 : index
    %111 = vector.load %arg6[%c0_46, %c0_47] : memref<8x128xf32, #tpu.memory_space<vmem>>, vector<8x128xf32>
    %112 = arith.mulf %102, %111 : vector<8x128xf32>
    %113 = arith.mulf %96, %104 : vector<8x128xf32>
    %114 = arith.addf %112, %113 : vector<8x128xf32>
    %115 = math.tanh %114 : vector<8x128xf32>
    %116 = arith.mulf %110, %115 : vector<8x128xf32>
    %c0_48 = arith.constant 0 : index
    %c0_49 = arith.constant 0 : index
    %117 = vector.load %arg6[%c0_48, %c0_49] : memref<8x128xf32, #tpu.memory_space<vmem>>, vector<8x128xf32>
    tpu.vector_store %arg6[%c0_48, %c0_49], %114 {strides = array<i32>} : memref<8x128xf32, #tpu.memory_space<vmem>>, vector<8x128xf32>,
    %c0_50 = arith.constant 0 : index
    %c0_51 = arith.constant 0 : index
    %118 = vector.load %arg5[%c0_50, %c0_51] : memref<8x128xf32, #tpu.memory_space<vmem>>, vector<8x128xf32>
    tpu.vector_store %arg5[%c0_50, %c0_51], %116 {strides = array<i32>} : memref<8x128xf32, #tpu.memory_space<vmem>>, vector<8x128xf32>,
    %119 = arith.index_cast %c2_i32 : i32 to index
    %c0_52 = arith.constant 0 : index
    %c0_53 = arith.constant 0 : index
    %120 = vector.load %arg4[%119, %c0_52, %c0_53] : memref<8x8x128xf32, #tpu.memory_space<vmem>>, vector<1x8x128xf32>
    %121 = vector.shape_cast %120 : vector<1x8x128xf32> to vector<8x128xf32>
    %122 = vector.shape_cast %116 : vector<8x128xf32> to vector<1x8x128xf32>
    tpu.vector_store %arg4[%119, %c0_52, %c0_53], %122 {strides = array<i32>} : memref<8x8x128xf32, #tpu.memory_space<vmem>>, vector<1x8x128xf32>,
    %c3_i32 = arith.constant 3 : i32
    %123 = arith.index_cast %c3_i32 : i32 to index
    %c0_54 = arith.constant 0 : index
    %c0_55 = arith.constant 0 : index
    %124 = vector.load %arg2[%123, %c0_54, %c0_55] : memref<8x8x512xf32, #tpu.memory_space<vmem>>, vector<1x8x512xf32>
    %125 = vector.shape_cast %124 : vector<1x8x512xf32> to vector<8x512xf32>
    %c0_56 = arith.constant 0 : index
    %c0_57 = arith.constant 0 : index
    %126 = vector.load %arg5[%c0_56, %c0_57] : memref<8x128xf32, #tpu.memory_space<vmem>>, vector<8x128xf32>
    %127 = arith.truncf %126 : vector<8x128xf32> to vector<8x128xbf16>
    %c0_58 = arith.constant 0 : index
    %c0_59 = arith.constant 0 : index
    %128 = vector.load %arg3[%c0_58, %c0_59] : memref<128x512xbf16, #tpu.memory_space<vmem>>, vector<128x512xbf16>
    %cst_60 = arith.constant dense<0.000000e+00> : vector<8x512xf32>
    %129 = tpu.matmul %127, %128, %cst_60 {dimension_numbers = #tpu.dot_dimension_numbers<[1], [0], [0], [1], [0, 0, 1, 1], [], []>} : vector<8x128xbf16>, vector<128x512xbf16>, vector<8x512xf32> -> vector<8x512xf32>
    %130 = arith.addf %125, %129 : vector<8x512xf32>
    %131 = vector.extract_strided_slice %130 {offsets = [0, 0], sizes = [8, 128], strides = [1, 1]} : vector<8x512xf32> to vector<8x128xf32>
    %132 = arith.negf %131 : vector<8x128xf32>
    %133 = math.exp %132 : vector<8x128xf32>
    %cst_61 = arith.constant 1.000000e+00 : f32
    %134 = vector.broadcast %cst_61 : f32 to vector<8x128xf32>
    %135 = arith.addf %134, %133 : vector<8x128xf32>
    %136 = arith.divf %134, %135 : vector<8x128xf32>
    %137 = vector.extract_strided_slice %130 {offsets = [0, 128], sizes = [8, 128], strides = [1, 1]} : vector<8x512xf32> to vector<8x128xf32>
    %138 = arith.negf %137 : vector<8x128xf32>
    %139 = math.exp %138 : vector<8x128xf32>
    %cst_62 = arith.constant 1.000000e+00 : f32
    %140 = vector.broadcast %cst_62 : f32 to vector<8x128xf32>
    %141 = arith.addf %140, %139 : vector<8x128xf32>
    %142 = arith.divf %140, %141 : vector<8x128xf32>
    %143 = vector.extract_strided_slice %130 {offsets = [0, 256], sizes = [8, 128], strides = [1, 1]} : vector<8x512xf32> to vector<8x128xf32>
    %144 = math.tanh %143 : vector<8x128xf32>
    %145 = vector.extract_strided_slice %130 {offsets = [0, 384], sizes = [8, 128], strides = [1, 1]} : vector<8x512xf32> to vector<8x128xf32>
    %146 = arith.negf %145 : vector<8x128xf32>
    %147 = math.exp %146 : vector<8x128xf32>
    %cst_63 = arith.constant 1.000000e+00 : f32
    %148 = vector.broadcast %cst_63 : f32 to vector<8x128xf32>
    %149 = arith.addf %148, %147 : vector<8x128xf32>
    %150 = arith.divf %148, %149 : vector<8x128xf32>
    %c0_64 = arith.constant 0 : index
    %c0_65 = arith.constant 0 : index
    %151 = vector.load %arg6[%c0_64, %c0_65] : memref<8x128xf32, #tpu.memory_space<vmem>>, vector<8x128xf32>
    %152 = arith.mulf %142, %151 : vector<8x128xf32>
    %153 = arith.mulf %136, %144 : vector<8x128xf32>
    %154 = arith.addf %152, %153 : vector<8x128xf32>
    %155 = math.tanh %154 : vector<8x128xf32>
    %156 = arith.mulf %150, %155 : vector<8x128xf32>
    %c0_66 = arith.constant 0 : index
    %c0_67 = arith.constant 0 : index
    %157 = vector.load %arg6[%c0_66, %c0_67] : memref<8x128xf32, #tpu.memory_space<vmem>>, vector<8x128xf32>
    tpu.vector_store %arg6[%c0_66, %c0_67], %154 {strides = array<i32>} : memref<8x128xf32, #tpu.memory_space<vmem>>, vector<8x128xf32>,
    %c0_68 = arith.constant 0 : index
    %c0_69 = arith.constant 0 : index
    %158 = vector.load %arg5[%c0_68, %c0_69] : memref<8x128xf32, #tpu.memory_space<vmem>>, vector<8x128xf32>
    tpu.vector_store %arg5[%c0_68, %c0_69], %156 {strides = array<i32>} : memref<8x128xf32, #tpu.memory_space<vmem>>, vector<8x128xf32>,
    %159 = arith.index_cast %c3_i32 : i32 to index
    %c0_70 = arith.constant 0 : index
    %c0_71 = arith.constant 0 : index
    %160 = vector.load %arg4[%159, %c0_70, %c0_71] : memref<8x8x128xf32, #tpu.memory_space<vmem>>, vector<1x8x128xf32>
    %161 = vector.shape_cast %160 : vector<1x8x128xf32> to vector<8x128xf32>
    %162 = vector.shape_cast %156 : vector<8x128xf32> to vector<1x8x128xf32>
    tpu.vector_store %arg4[%159, %c0_70, %c0_71], %162 {strides = array<i32>} : memref<8x8x128xf32, #tpu.memory_space<vmem>>, vector<1x8x128xf32>,
    %c4_i32 = arith.constant 4 : i32
    %163 = arith.index_cast %c4_i32 : i32 to index
    %c0_72 = arith.constant 0 : index
    %c0_73 = arith.constant 0 : index
    %164 = vector.load %arg2[%163, %c0_72, %c0_73] : memref<8x8x512xf32, #tpu.memory_space<vmem>>, vector<1x8x512xf32>
    %165 = vector.shape_cast %164 : vector<1x8x512xf32> to vector<8x512xf32>
    %c0_74 = arith.constant 0 : index
    %c0_75 = arith.constant 0 : index
    %166 = vector.load %arg5[%c0_74, %c0_75] : memref<8x128xf32, #tpu.memory_space<vmem>>, vector<8x128xf32>
    %167 = arith.truncf %166 : vector<8x128xf32> to vector<8x128xbf16>
    %c0_76 = arith.constant 0 : index
    %c0_77 = arith.constant 0 : index
    %168 = vector.load %arg3[%c0_76, %c0_77] : memref<128x512xbf16, #tpu.memory_space<vmem>>, vector<128x512xbf16>
    %cst_78 = arith.constant dense<0.000000e+00> : vector<8x512xf32>
    %169 = tpu.matmul %167, %168, %cst_78 {dimension_numbers = #tpu.dot_dimension_numbers<[1], [0], [0], [1], [0, 0, 1, 1], [], []>} : vector<8x128xbf16>, vector<128x512xbf16>, vector<8x512xf32> -> vector<8x512xf32>
    %170 = arith.addf %165, %169 : vector<8x512xf32>
    %171 = vector.extract_strided_slice %170 {offsets = [0, 0], sizes = [8, 128], strides = [1, 1]} : vector<8x512xf32> to vector<8x128xf32>
    %172 = arith.negf %171 : vector<8x128xf32>
    %173 = math.exp %172 : vector<8x128xf32>
    %cst_79 = arith.constant 1.000000e+00 : f32
    %174 = vector.broadcast %cst_79 : f32 to vector<8x128xf32>
    %175 = arith.addf %174, %173 : vector<8x128xf32>
    %176 = arith.divf %174, %175 : vector<8x128xf32>
    %177 = vector.extract_strided_slice %170 {offsets = [0, 128], sizes = [8, 128], strides = [1, 1]} : vector<8x512xf32> to vector<8x128xf32>
    %178 = arith.negf %177 : vector<8x128xf32>
    %179 = math.exp %178 : vector<8x128xf32>
    %cst_80 = arith.constant 1.000000e+00 : f32
    %180 = vector.broadcast %cst_80 : f32 to vector<8x128xf32>
    %181 = arith.addf %180, %179 : vector<8x128xf32>
    %182 = arith.divf %180, %181 : vector<8x128xf32>
    %183 = vector.extract_strided_slice %170 {offsets = [0, 256], sizes = [8, 128], strides = [1, 1]} : vector<8x512xf32> to vector<8x128xf32>
    %184 = math.tanh %183 : vector<8x128xf32>
    %185 = vector.extract_strided_slice %170 {offsets = [0, 384], sizes = [8, 128], strides = [1, 1]} : vector<8x512xf32> to vector<8x128xf32>
    %186 = arith.negf %185 : vector<8x128xf32>
    %187 = math.exp %186 : vector<8x128xf32>
    %cst_81 = arith.constant 1.000000e+00 : f32
    %188 = vector.broadcast %cst_81 : f32 to vector<8x128xf32>
    %189 = arith.addf %188, %187 : vector<8x128xf32>
    %190 = arith.divf %188, %189 : vector<8x128xf32>
    %c0_82 = arith.constant 0 : index
    %c0_83 = arith.constant 0 : index
    %191 = vector.load %arg6[%c0_82, %c0_83] : memref<8x128xf32, #tpu.memory_space<vmem>>, vector<8x128xf32>
    %192 = arith.mulf %182, %191 : vector<8x128xf32>
    %193 = arith.mulf %176, %184 : vector<8x128xf32>
    %194 = arith.addf %192, %193 : vector<8x128xf32>
    %195 = math.tanh %194 : vector<8x128xf32>
    %196 = arith.mulf %190, %195 : vector<8x128xf32>
    %c0_84 = arith.constant 0 : index
    %c0_85 = arith.constant 0 : index
    %197 = vector.load %arg6[%c0_84, %c0_85] : memref<8x128xf32, #tpu.memory_space<vmem>>, vector<8x128xf32>
    tpu.vector_store %arg6[%c0_84, %c0_85], %194 {strides = array<i32>} : memref<8x128xf32, #tpu.memory_space<vmem>>, vector<8x128xf32>,
    %c0_86 = arith.constant 0 : index
    %c0_87 = arith.constant 0 : index
    %198 = vector.load %arg5[%c0_86, %c0_87] : memref<8x128xf32, #tpu.memory_space<vmem>>, vector<8x128xf32>
    tpu.vector_store %arg5[%c0_86, %c0_87], %196 {strides = array<i32>} : memref<8x128xf32, #tpu.memory_space<vmem>>, vector<8x128xf32>,
    %199 = arith.index_cast %c4_i32 : i32 to index
    %c0_88 = arith.constant 0 : index
    %c0_89 = arith.constant 0 : index
    %200 = vector.load %arg4[%199, %c0_88, %c0_89] : memref<8x8x128xf32, #tpu.memory_space<vmem>>, vector<1x8x128xf32>
    %201 = vector.shape_cast %200 : vector<1x8x128xf32> to vector<8x128xf32>
    %202 = vector.shape_cast %196 : vector<8x128xf32> to vector<1x8x128xf32>
    tpu.vector_store %arg4[%199, %c0_88, %c0_89], %202 {strides = array<i32>} : memref<8x8x128xf32, #tpu.memory_space<vmem>>, vector<1x8x128xf32>,
    %c5_i32 = arith.constant 5 : i32
    %203 = arith.index_cast %c5_i32 : i32 to index
    %c0_90 = arith.constant 0 : index
    %c0_91 = arith.constant 0 : index
    %204 = vector.load %arg2[%203, %c0_90, %c0_91] : memref<8x8x512xf32, #tpu.memory_space<vmem>>, vector<1x8x512xf32>
    %205 = vector.shape_cast %204 : vector<1x8x512xf32> to vector<8x512xf32>
    %c0_92 = arith.constant 0 : index
    %c0_93 = arith.constant 0 : index
    %206 = vector.load %arg5[%c0_92, %c0_93] : memref<8x128xf32, #tpu.memory_space<vmem>>, vector<8x128xf32>
    %207 = arith.truncf %206 : vector<8x128xf32> to vector<8x128xbf16>
    %c0_94 = arith.constant 0 : index
    %c0_95 = arith.constant 0 : index
    %208 = vector.load %arg3[%c0_94, %c0_95] : memref<128x512xbf16, #tpu.memory_space<vmem>>, vector<128x512xbf16>
    %cst_96 = arith.constant dense<0.000000e+00> : vector<8x512xf32>
    %209 = tpu.matmul %207, %208, %cst_96 {dimension_numbers = #tpu.dot_dimension_numbers<[1], [0], [0], [1], [0, 0, 1, 1], [], []>} : vector<8x128xbf16>, vector<128x512xbf16>, vector<8x512xf32> -> vector<8x512xf32>
    %210 = arith.addf %205, %209 : vector<8x512xf32>
    %211 = vector.extract_strided_slice %210 {offsets = [0, 0], sizes = [8, 128], strides = [1, 1]} : vector<8x512xf32> to vector<8x128xf32>
    %212 = arith.negf %211 : vector<8x128xf32>
    %213 = math.exp %212 : vector<8x128xf32>
    %cst_97 = arith.constant 1.000000e+00 : f32
    %214 = vector.broadcast %cst_97 : f32 to vector<8x128xf32>
    %215 = arith.addf %214, %213 : vector<8x128xf32>
    %216 = arith.divf %214, %215 : vector<8x128xf32>
    %217 = vector.extract_strided_slice %210 {offsets = [0, 128], sizes = [8, 128], strides = [1, 1]} : vector<8x512xf32> to vector<8x128xf32>
    %218 = arith.negf %217 : vector<8x128xf32>
    %219 = math.exp %218 : vector<8x128xf32>
    %cst_98 = arith.constant 1.000000e+00 : f32
    %220 = vector.broadcast %cst_98 : f32 to vector<8x128xf32>
    %221 = arith.addf %220, %219 : vector<8x128xf32>
    %222 = arith.divf %220, %221 : vector<8x128xf32>
    %223 = vector.extract_strided_slice %210 {offsets = [0, 256], sizes = [8, 128], strides = [1, 1]} : vector<8x512xf32> to vector<8x128xf32>
    %224 = math.tanh %223 : vector<8x128xf32>
    %225 = vector.extract_strided_slice %210 {offsets = [0, 384], sizes = [8, 128], strides = [1, 1]} : vector<8x512xf32> to vector<8x128xf32>
    %226 = arith.negf %225 : vector<8x128xf32>
    %227 = math.exp %226 : vector<8x128xf32>
    %cst_99 = arith.constant 1.000000e+00 : f32
    %228 = vector.broadcast %cst_99 : f32 to vector<8x128xf32>
    %229 = arith.addf %228, %227 : vector<8x128xf32>
    %230 = arith.divf %228, %229 : vector<8x128xf32>
    %c0_100 = arith.constant 0 : index
    %c0_101 = arith.constant 0 : index
    %231 = vector.load %arg6[%c0_100, %c0_101] : memref<8x128xf32, #tpu.memory_space<vmem>>, vector<8x128xf32>
    %232 = arith.mulf %222, %231 : vector<8x128xf32>
    %233 = arith.mulf %216, %224 : vector<8x128xf32>
    %234 = arith.addf %232, %233 : vector<8x128xf32>
    %235 = math.tanh %234 : vector<8x128xf32>
    %236 = arith.mulf %230, %235 : vector<8x128xf32>
    %c0_102 = arith.constant 0 : index
    %c0_103 = arith.constant 0 : index
    %237 = vector.load %arg6[%c0_102, %c0_103] : memref<8x128xf32, #tpu.memory_space<vmem>>, vector<8x128xf32>
    tpu.vector_store %arg6[%c0_102, %c0_103], %234 {strides = array<i32>} : memref<8x128xf32, #tpu.memory_space<vmem>>, vector<8x128xf32>,
    %c0_104 = arith.constant 0 : index
    %c0_105 = arith.constant 0 : index
    %238 = vector.load %arg5[%c0_104, %c0_105] : memref<8x128xf32, #tpu.memory_space<vmem>>, vector<8x128xf32>
    tpu.vector_store %arg5[%c0_104, %c0_105], %236 {strides = array<i32>} : memref<8x128xf32, #tpu.memory_space<vmem>>, vector<8x128xf32>,
    %239 = arith.index_cast %c5_i32 : i32 to index
    %c0_106 = arith.constant 0 : index
    %c0_107 = arith.constant 0 : index
    %240 = vector.load %arg4[%239, %c0_106, %c0_107] : memref<8x8x128xf32, #tpu.memory_space<vmem>>, vector<1x8x128xf32>
    %241 = vector.shape_cast %240 : vector<1x8x128xf32> to vector<8x128xf32>
    %242 = vector.shape_cast %236 : vector<8x128xf32> to vector<1x8x128xf32>
    tpu.vector_store %arg4[%239, %c0_106, %c0_107], %242 {strides = array<i32>} : memref<8x8x128xf32, #tpu.memory_space<vmem>>, vector<1x8x128xf32>,
    %c6_i32 = arith.constant 6 : i32
    %243 = arith.index_cast %c6_i32 : i32 to index
    %c0_108 = arith.constant 0 : index
    %c0_109 = arith.constant 0 : index
    %244 = vector.load %arg2[%243, %c0_108, %c0_109] : memref<8x8x512xf32, #tpu.memory_space<vmem>>, vector<1x8x512xf32>
    %245 = vector.shape_cast %244 : vector<1x8x512xf32> to vector<8x512xf32>
    %c0_110 = arith.constant 0 : index
    %c0_111 = arith.constant 0 : index
    %246 = vector.load %arg5[%c0_110, %c0_111] : memref<8x128xf32, #tpu.memory_space<vmem>>, vector<8x128xf32>
    %247 = arith.truncf %246 : vector<8x128xf32> to vector<8x128xbf16>
    %c0_112 = arith.constant 0 : index
    %c0_113 = arith.constant 0 : index
    %248 = vector.load %arg3[%c0_112, %c0_113] : memref<128x512xbf16, #tpu.memory_space<vmem>>, vector<128x512xbf16>
    %cst_114 = arith.constant dense<0.000000e+00> : vector<8x512xf32>
    %249 = tpu.matmul %247, %248, %cst_114 {dimension_numbers = #tpu.dot_dimension_numbers<[1], [0], [0], [1], [0, 0, 1, 1], [], []>} : vector<8x128xbf16>, vector<128x512xbf16>, vector<8x512xf32> -> vector<8x512xf32>
    %250 = arith.addf %245, %249 : vector<8x512xf32>
    %251 = vector.extract_strided_slice %250 {offsets = [0, 0], sizes = [8, 128], strides = [1, 1]} : vector<8x512xf32> to vector<8x128xf32>
    %252 = arith.negf %251 : vector<8x128xf32>
    %253 = math.exp %252 : vector<8x128xf32>
    %cst_115 = arith.constant 1.000000e+00 : f32
    %254 = vector.broadcast %cst_115 : f32 to vector<8x128xf32>
    %255 = arith.addf %254, %253 : vector<8x128xf32>
    %256 = arith.divf %254, %255 : vector<8x128xf32>
    %257 = vector.extract_strided_slice %250 {offsets = [0, 128], sizes = [8, 128], strides = [1, 1]} : vector<8x512xf32> to vector<8x128xf32>
    %258 = arith.negf %257 : vector<8x128xf32>
    %259 = math.exp %258 : vector<8x128xf32>
    %cst_116 = arith.constant 1.000000e+00 : f32
    %260 = vector.broadcast %cst_116 : f32 to vector<8x128xf32>
    %261 = arith.addf %260, %259 : vector<8x128xf32>
    %262 = arith.divf %260, %261 : vector<8x128xf32>
    %263 = vector.extract_strided_slice %250 {offsets = [0, 256], sizes = [8, 128], strides = [1, 1]} : vector<8x512xf32> to vector<8x128xf32>
    %264 = math.tanh %263 : vector<8x128xf32>
    %265 = vector.extract_strided_slice %250 {offsets = [0, 384], sizes = [8, 128], strides = [1, 1]} : vector<8x512xf32> to vector<8x128xf32>
    %266 = arith.negf %265 : vector<8x128xf32>
    %267 = math.exp %266 : vector<8x128xf32>
    %cst_117 = arith.constant 1.000000e+00 : f32
    %268 = vector.broadcast %cst_117 : f32 to vector<8x128xf32>
    %269 = arith.addf %268, %267 : vector<8x128xf32>
    %270 = arith.divf %268, %269 : vector<8x128xf32>
    %c0_118 = arith.constant 0 : index
    %c0_119 = arith.constant 0 : index
    %271 = vector.load %arg6[%c0_118, %c0_119] : memref<8x128xf32, #tpu.memory_space<vmem>>, vector<8x128xf32>
    %272 = arith.mulf %262, %271 : vector<8x128xf32>
    %273 = arith.mulf %256, %264 : vector<8x128xf32>
    %274 = arith.addf %272, %273 : vector<8x128xf32>
    %275 = math.tanh %274 : vector<8x128xf32>
    %276 = arith.mulf %270, %275 : vector<8x128xf32>
    %c0_120 = arith.constant 0 : index
    %c0_121 = arith.constant 0 : index
    %277 = vector.load %arg6[%c0_120, %c0_121] : memref<8x128xf32, #tpu.memory_space<vmem>>, vector<8x128xf32>
    tpu.vector_store %arg6[%c0_120, %c0_121], %274 {strides = array<i32>} : memref<8x128xf32, #tpu.memory_space<vmem>>, vector<8x128xf32>,
    %c0_122 = arith.constant 0 : index
    %c0_123 = arith.constant 0 : index
    %278 = vector.load %arg5[%c0_122, %c0_123] : memref<8x128xf32, #tpu.memory_space<vmem>>, vector<8x128xf32>
    tpu.vector_store %arg5[%c0_122, %c0_123], %276 {strides = array<i32>} : memref<8x128xf32, #tpu.memory_space<vmem>>, vector<8x128xf32>,
    %279 = arith.index_cast %c6_i32 : i32 to index
    %c0_124 = arith.constant 0 : index
    %c0_125 = arith.constant 0 : index
    %280 = vector.load %arg4[%279, %c0_124, %c0_125] : memref<8x8x128xf32, #tpu.memory_space<vmem>>, vector<1x8x128xf32>
    %281 = vector.shape_cast %280 : vector<1x8x128xf32> to vector<8x128xf32>
    %282 = vector.shape_cast %276 : vector<8x128xf32> to vector<1x8x128xf32>
    tpu.vector_store %arg4[%279, %c0_124, %c0_125], %282 {strides = array<i32>} : memref<8x8x128xf32, #tpu.memory_space<vmem>>, vector<1x8x128xf32>,
    %c7_i32 = arith.constant 7 : i32
    %283 = arith.index_cast %c7_i32 : i32 to index
    %c0_126 = arith.constant 0 : index
    %c0_127 = arith.constant 0 : index
    %284 = vector.load %arg2[%283, %c0_126, %c0_127] : memref<8x8x512xf32, #tpu.memory_space<vmem>>, vector<1x8x512xf32>
    %285 = vector.shape_cast %284 : vector<1x8x512xf32> to vector<8x512xf32>
    %c0_128 = arith.constant 0 : index
    %c0_129 = arith.constant 0 : index
    %286 = vector.load %arg5[%c0_128, %c0_129] : memref<8x128xf32, #tpu.memory_space<vmem>>, vector<8x128xf32>
    %287 = arith.truncf %286 : vector<8x128xf32> to vector<8x128xbf16>
    %c0_130 = arith.constant 0 : index
    %c0_131 = arith.constant 0 : index
    %288 = vector.load %arg3[%c0_130, %c0_131] : memref<128x512xbf16, #tpu.memory_space<vmem>>, vector<128x512xbf16>
    %cst_132 = arith.constant dense<0.000000e+00> : vector<8x512xf32>
    %289 = tpu.matmul %287, %288, %cst_132 {dimension_numbers = #tpu.dot_dimension_numbers<[1], [0], [0], [1], [0, 0, 1, 1], [], []>} : vector<8x128xbf16>, vector<128x512xbf16>, vector<8x512xf32> -> vector<8x512xf32>
    %290 = arith.addf %285, %289 : vector<8x512xf32>
    %291 = vector.extract_strided_slice %290 {offsets = [0, 0], sizes = [8, 128], strides = [1, 1]} : vector<8x512xf32> to vector<8x128xf32>
    %292 = arith.negf %291 : vector<8x128xf32>
    %293 = math.exp %292 : vector<8x128xf32>
    %cst_133 = arith.constant 1.000000e+00 : f32
    %294 = vector.broadcast %cst_133 : f32 to vector<8x128xf32>
    %295 = arith.addf %294, %293 : vector<8x128xf32>
    %296 = arith.divf %294, %295 : vector<8x128xf32>
    %297 = vector.extract_strided_slice %290 {offsets = [0, 128], sizes = [8, 128], strides = [1, 1]} : vector<8x512xf32> to vector<8x128xf32>
    %298 = arith.negf %297 : vector<8x128xf32>
    %299 = math.exp %298 : vector<8x128xf32>
    %cst_134 = arith.constant 1.000000e+00 : f32
    %300 = vector.broadcast %cst_134 : f32 to vector<8x128xf32>
    %301 = arith.addf %300, %299 : vector<8x128xf32>
    %302 = arith.divf %300, %301 : vector<8x128xf32>
    %303 = vector.extract_strided_slice %290 {offsets = [0, 256], sizes = [8, 128], strides = [1, 1]} : vector<8x512xf32> to vector<8x128xf32>
    %304 = math.tanh %303 : vector<8x128xf32>
    %305 = vector.extract_strided_slice %290 {offsets = [0, 384], sizes = [8, 128], strides = [1, 1]} : vector<8x512xf32> to vector<8x128xf32>
    %306 = arith.negf %305 : vector<8x128xf32>
    %307 = math.exp %306 : vector<8x128xf32>
    %cst_135 = arith.constant 1.000000e+00 : f32
    %308 = vector.broadcast %cst_135 : f32 to vector<8x128xf32>
    %309 = arith.addf %308, %307 : vector<8x128xf32>
    %310 = arith.divf %308, %309 : vector<8x128xf32>
    %c0_136 = arith.constant 0 : index
    %c0_137 = arith.constant 0 : index
    %311 = vector.load %arg6[%c0_136, %c0_137] : memref<8x128xf32, #tpu.memory_space<vmem>>, vector<8x128xf32>
    %312 = arith.mulf %302, %311 : vector<8x128xf32>
    %313 = arith.mulf %296, %304 : vector<8x128xf32>
    %314 = arith.addf %312, %313 : vector<8x128xf32>
    %315 = math.tanh %314 : vector<8x128xf32>
    %316 = arith.mulf %310, %315 : vector<8x128xf32>
    %c0_138 = arith.constant 0 : index
    %c0_139 = arith.constant 0 : index
    %317 = vector.load %arg6[%c0_138, %c0_139] : memref<8x128xf32, #tpu.memory_space<vmem>>, vector<8x128xf32>
    tpu.vector_store %arg6[%c0_138, %c0_139], %314 {strides = array<i32>} : memref<8x128xf32, #tpu.memory_space<vmem>>, vector<8x128xf32>,
    %c0_140 = arith.constant 0 : index
    %c0_141 = arith.constant 0 : index
    %318 = vector.load %arg5[%c0_140, %c0_141] : memref<8x128xf32, #tpu.memory_space<vmem>>, vector<8x128xf32>
    tpu.vector_store %arg5[%c0_140, %c0_141], %316 {strides = array<i32>} : memref<8x128xf32, #tpu.memory_space<vmem>>, vector<8x128xf32>,
    %319 = arith.index_cast %c7_i32 : i32 to index
    %c0_142 = arith.constant 0 : index
    %c0_143 = arith.constant 0 : index
    %320 = vector.load %arg4[%319, %c0_142, %c0_143] : memref<8x8x128xf32, #tpu.memory_space<vmem>>, vector<1x8x128xf32>
    %321 = vector.shape_cast %320 : vector<1x8x128xf32> to vector<8x128xf32>
    %322 = vector.shape_cast %316 : vector<8x128xf32> to vector<1x8x128xf32>
    tpu.vector_store %arg4[%319, %c0_142, %c0_143], %322 {strides = array<i32>} : memref<8x8x128xf32, #tpu.memory_space<vmem>>, vector<1x8x128xf32>,
    %c8_i32 = arith.constant 8 : i32
    return
  }
  func.func @transform_0(%arg0: i32, %arg1: i32) -> (i32, i32, i32) {
    %c0_i32 = arith.constant 0 : i32
    %c0_i32_0 = arith.constant 0 : i32
    return %arg1, %arg0, %c0_i32 : i32, i32, i32
  }
  func.func @transform_1(%arg0: i32, %arg1: i32) -> (i32, i32) {
    %c0_i32 = arith.constant 0 : i32
    %c0_i32_0 = arith.constant 0 : i32
    %c0_i32_1 = arith.constant 0 : i32
    return %c0_i32, %c0_i32_0 : i32, i32
  }
  func.func @transform_2(%arg0: i32, %arg1: i32) -> (i32, i32, i32) {
    %c0_i32 = arith.constant 0 : i32
    %c0_i32_0 = arith.constant 0 : i32
    return %arg1, %arg0, %c0_i32 : i32, i32, i32
  }
}

module attributes {stable_mosaic.version = 11 : i64} {
  func.func @_proj_kernel(%arg0: i32, %arg1: i32, %arg2: memref<16x16x128xf32, #tpu.memory_space<vmem>>, %arg3: memref<128x256xbf16, #tpu.memory_space<vmem>>, %arg4: memref<16x256xf32, #tpu.memory_space<vmem>>, %arg5: memref<16x16x256xf32, #tpu.memory_space<vmem>>) attributes {dimension_semantics = [#tpu.dimension_semantics<parallel>, #tpu.dimension_semantics<parallel>], iteration_bounds = array<i64: 1, 1>, scalar_prefetch = 0 : i64, scratch_operands = 0 : i64, tpu.core_type = #tpu.core_type<tc>, window_params = [{transform_indices = @transform_0, window_bounds = array<i64: 16, 16, 128>}, {transform_indices = @transform_1, window_bounds = array<i64: 128, 256>}, {transform_indices = @transform_2, window_bounds = array<i64: 16, 256>}, {transform_indices = @transform_3, window_bounds = array<i64: 16, 16, 256>}]} {
    %c0 = arith.constant 0 : index
    %c0_0 = arith.constant 0 : index
    %c0_1 = arith.constant 0 : index
    %0 = vector.load %arg2[%c0, %c0_0, %c0_1] : memref<16x16x128xf32, #tpu.memory_space<vmem>>, vector<16x16x128xf32>
    %1 = vector.shape_cast %0 : vector<16x16x128xf32> to vector<256x128xf32>
    %2 = arith.truncf %1 : vector<256x128xf32> to vector<256x128xbf16>
    %c0_2 = arith.constant 0 : index
    %c0_3 = arith.constant 0 : index
    %3 = vector.load %arg3[%c0_2, %c0_3] : memref<128x256xbf16, #tpu.memory_space<vmem>>, vector<128x256xbf16>
    %cst = arith.constant dense<0.000000e+00> : vector<256x256xf32>
    %4 = tpu.matmul %2, %3, %cst {dimension_numbers = #tpu.dot_dimension_numbers<[1], [0], [0], [1], [0, 0, 1, 1], [], []>} : vector<256x128xbf16>, vector<128x256xbf16>, vector<256x256xf32> -> vector<256x256xf32>
    %5 = vector.shape_cast %4 : vector<256x256xf32> to vector<16x16x256xf32>
    %c0_4 = arith.constant 0 : index
    %c0_5 = arith.constant 0 : index
    %6 = vector.load %arg4[%c0_4, %c0_5] : memref<16x256xf32, #tpu.memory_space<vmem>>, vector<16x256xf32>
    %7 = vector.shape_cast %6 : vector<16x256xf32> to vector<1x16x256xf32>
    %8 = vector.broadcast %7 : vector<1x16x256xf32> to vector<16x16x256xf32>
    %9 = arith.addf %5, %8 : vector<16x16x256xf32>
    %c0_6 = arith.constant 0 : index
    %c0_7 = arith.constant 0 : index
    %c0_8 = arith.constant 0 : index
    %10 = vector.load %arg5[%c0_6, %c0_7, %c0_8] : memref<16x16x256xf32, #tpu.memory_space<vmem>>, vector<16x16x256xf32>
    tpu.vector_store %arg5[%c0_6, %c0_7, %c0_8], %9 {strides = array<i32>} : memref<16x16x256xf32, #tpu.memory_space<vmem>>, vector<16x16x256xf32>,
    return
  }
  func.func @transform_0(%arg0: i32, %arg1: i32) -> (i32, i32, i32) {
    %c0_i32 = arith.constant 0 : i32
    %c0_i32_0 = arith.constant 0 : i32
    %c0_i32_1 = arith.constant 0 : i32
    return %arg0, %c0_i32, %c0_i32_0 : i32, i32, i32
  }
  func.func @transform_1(%arg0: i32, %arg1: i32) -> (i32, i32) {
    %c0_i32 = arith.constant 0 : i32
    %c0_i32_0 = arith.constant 0 : i32
    return %c0_i32, %arg1 : i32, i32
  }
  func.func @transform_2(%arg0: i32, %arg1: i32) -> (i32, i32) {
    %c0_i32 = arith.constant 0 : i32
    %c0_i32_0 = arith.constant 0 : i32
    return %c0_i32, %arg1 : i32, i32
  }
  func.func @transform_3(%arg0: i32, %arg1: i32) -> (i32, i32, i32) {
    %c0_i32 = arith.constant 0 : i32
    %c0_i32_0 = arith.constant 0 : i32
    return %arg0, %c0_i32, %arg1 : i32, i32, i32
  }
}

</mosaic_0001>

<llo_original>
// kernel: rnn_lm_forward.3
$region0: #{rnn_lm_forward.3}
  #allocation0 [shape = 'u32[]', space=smem, size = 0x4, offset = 0x4, fixed_abs, tag = 'smem constant byte address 0x4 - core index']
  #allocation1 [shape = 'u32[144,128]{1,0:T(1,128)}', space=vmem, size = 0x12000, scoped, tag = 'internal scratch']
  %s0 = inlined_call_operand.vmem [shape: f32[16,16,128], index: 0, kind: input, shape index: {}]
  %s1 = inlined_call_operand.vmem [shape: bf16[128,512], index: 1, kind: input, shape index: {}]
  %s2 = inlined_call_operand.vmem [shape: f32[1,512], index: 2, kind: input, shape index: {}]
  %s3 = inlined_call_operand.vmem [shape: f32[16,16,512], index: 3, kind: output, shape index: {}]
  %s4 = sld [smem:[#allocation0]]
  $region22: #{rnn_lm_forward.3} parent=0
    _
  %s6 = ssub.s32 1, %s4
  %s7 = scalar_select 0, %s6, %s4
  // Predicated region
  $region2: #{rnn_lm_forward.3} parent=0 // pred_check
    _
  $region3: #{rnn_lm_forward.3} parent=0 // pred_check_branch
    %9 = sbr.rel (0) target = $region5
  $region4: #{rnn_lm_forward.3} parent=0 // pred_region
    _
  $region5: #{rnn_lm_forward.3} parent=0 // pred_fallthru
    _
  // Predicated region
  $region6: #{rnn_lm_forward.3} parent=0 // pred_check
    _
  $region7: #{rnn_lm_forward.3} parent=0 // pred_check_branch
    %11 = sbr.rel (0) target = $region9
  $region8: #{rnn_lm_forward.3} parent=0 // pred_region
    _
  $region9: #{rnn_lm_forward.3} parent=0 // pred_fallthru
    _
  // Predicated region
  $region10: #{rnn_lm_forward.3} parent=0 // pred_check
    _
  $region11: #{rnn_lm_forward.3} parent=0 // pred_check_branch
    %13 = sbr.rel (0) target = $region13
  $region12: #{rnn_lm_forward.3} parent=0 // pred_region
    _
  $region13: #{rnn_lm_forward.3} parent=0 // pred_fallthru
    _
  %v15 = vld [vmem:[%s0] sm:$0xff]
  %v16 = vld [vmem:[%s0 + $0x8] sm:$0xff]
  %v17 = vld [vmem:[%s0 + $0x10] sm:$0xff]
  %v18 = vld [vmem:[%s0 + $0x18] sm:$0xff]
  %v19 = vld [vmem:[%s0 + $0x20] sm:$0xff]
  %v20 = vld [vmem:[%s0 + $0x28] sm:$0xff]
  %v21 = vld [vmem:[%s0 + $0x30] sm:$0xff]
  %v22 = vld [vmem:[%s0 + $0x38] sm:$0xff]
  %v23 = vld [vmem:[%s0 + $0x40] sm:$0xff]
  %v24 = vld [vmem:[%s0 + $0x48] sm:$0xff]
  %v25 = vld [vmem:[%s0 + $0x50] sm:$0xff]
  %v26 = vld [vmem:[%s0 + $0x58] sm:$0xff]
  %v27 = vld [vmem:[%s0 + $0x60] sm:$0xff]
  %v28 = vld [vmem:[%s0 + $0x68] sm:$0xff]
  %v29 = vld [vmem:[%s0 + $0x70] sm:$0xff]
  %v30 = vld [vmem:[%s0 + $0x78] sm:$0xff]
  %v31 = vld [vmem:[%s0 + $0x80] sm:$0xff]
  %v32 = vld [vmem:[%s0 + $0x88] sm:$0xff]
  %v33 = vld [vmem:[%s0 + $0x90] sm:$0xff]
  %v34 = vld [vmem:[%s0 + $0x98] sm:$0xff]
  %v35 = vld [vmem:[%s0 + $0xa0] sm:$0xff]
  %v36 = vld [vmem:[%s0 + $0xa8] sm:$0xff]
  %v37 = vld [vmem:[%s0 + $0xb0] sm:$0xff]
  %v38 = vld [vmem:[%s0 + $0xb8] sm:$0xff]
  %v39 = vld [vmem:[%s0 + $0xc0] sm:$0xff]
  %v40 = vld [vmem:[%s0 + $0xc8] sm:$0xff]
  %v41 = vld [vmem:[%s0 + $0xd0] sm:$0xff]
  %v42 = vld [vmem:[%s0 + $0xd8] sm:$0xff]
  %v43 = vld [vmem:[%s0 + $0xe0] sm:$0xff]
  %v44 = vld [vmem:[%s0 + $0xe8] sm:$0xff]
  %v45 = vld [vmem:[%s0 + $0xf0] sm:$0xff]
  %v46 = vld [vmem:[%s0 + $0xf8] sm:$0xff]
  %v47 = vpack.c.bf16 %v16, %v15
  %v48 = vpack.c.bf16 %v18, %v17
  %v49 = vpack.c.bf16 %v20, %v19
  %v50 = vpack.c.bf16 %v22, %v21
  %v51 = vpack.c.bf16 %v24, %v23
  %v52 = vpack.c.bf16 %v26, %v25
  %v53 = vpack.c.bf16 %v28, %v27
  %v54 = vpack.c.bf16 %v30, %v29
  %v55 = vpack.c.bf16 %v32, %v31
  %v56 = vpack.c.bf16 %v34, %v33
  %v57 = vpack.c.bf16 %v36, %v35
  %v58 = vpack.c.bf16 %v38, %v37
  %v59 = vpack.c.bf16 %v40, %v39
  %v60 = vpack.c.bf16 %v42, %v41
  %v61 = vpack.c.bf16 %v44, %v43
  %v62 = vpack.c.bf16 %v46, %v45
  %v63 = vld [vmem:[%s1] sm:$0xff]
  %v64 = vld [vmem:[%s1 + $0x8] sm:$0xff]
  %v65 = vld [vmem:[%s1 + $0x10] sm:$0xff]
  %v66 = vld [vmem:[%s1 + $0x18] sm:$0xff]
  %v67 = vld [vmem:[%s1 + $0x20] sm:$0xff]
  %v68 = vld [vmem:[%s1 + $0x28] sm:$0xff]
  %v69 = vld [vmem:[%s1 + $0x30] sm:$0xff]
  %v70 = vld [vmem:[%s1 + $0x38] sm:$0xff]
  %v71 = vld [vmem:[%s1 + $0x40] sm:$0xff]
  %v72 = vld [vmem:[%s1 + $0x48] sm:$0xff]
  %v73 = vld [vmem:[%s1 + $0x50] sm:$0xff]
  %v74 = vld [vmem:[%s1 + $0x58] sm:$0xff]
  %v75 = vld [vmem:[%s1 + $0x60] sm:$0xff]
  %v76 = vld [vmem:[%s1 + $0x68] sm:$0xff]
  %v77 = vld [vmem:[%s1 + $0x70] sm:$0xff]
  %v78 = vld [vmem:[%s1 + $0x78] sm:$0xff]
  %v79 = vld [vmem:[%s1 + $0x80] sm:$0xff]
  %v80 = vld [vmem:[%s1 + $0x88] sm:$0xff]
  %v81 = vld [vmem:[%s1 + $0x90] sm:$0xff]
  %v82 = vld [vmem:[%s1 + $0x98] sm:$0xff]
  %v83 = vld [vmem:[%s1 + $0xa0] sm:$0xff]
  %v84 = vld [vmem:[%s1 + $0xa8] sm:$0xff]
  %v85 = vld [vmem:[%s1 + $0xb0] sm:$0xff]
  %v86 = vld [vmem:[%s1 + $0xb8] sm:$0xff]
  %v87 = vld [vmem:[%s1 + $0xc0] sm:$0xff]
  %v88 = vld [vmem:[%s1 + $0xc8] sm:$0xff]
  %v89 = vld [vmem:[%s1 + $0xd0] sm:$0xff]
  %v90 = vld [vmem:[%s1 + $0xd8] sm:$0xff]
  %v91 = vld [vmem:[%s1 + $0xe0] sm:$0xff]
  %v92 = vld [vmem:[%s1 + $0xe8] sm:$0xff]
  %v93 = vld [vmem:[%s1 + $0xf0] sm:$0xff]
  %v94 = vld [vmem:[%s1 + $0xf8] sm:$0xff]
  %v127 = vunpack.c.l.b16 %v63
  %v128 = vunpack.c.h.b16 %v63
  %v129 = vunpack.c.l.b16 %v64
  %v130 = vunpack.c.h.b16 %v64
  %v131 = vunpack.c.l.b16 %v65
  %v132 = vunpack.c.h.b16 %v65
  %v133 = vunpack.c.l.b16 %v66
  %v134 = vunpack.c.h.b16 %v66
  %v135 = vunpack.c.l.b16 %v67
  %v136 = vunpack.c.h.b16 %v67
  %v137 = vunpack.c.l.b16 %v68
  %v138 = vunpack.c.h.b16 %v68
  %v139 = vunpack.c.l.b16 %v69
  %v140 = vunpack.c.h.b16 %v69
  %v141 = vunpack.c.l.b16 %v70
  %v142 = vunpack.c.h.b16 %v70
  %v143 = vunpack.c.l.b16 %v71
  %v144 = vunpack.c.h.b16 %v71
  %v145 = vunpack.c.l.b16 %v72
  %v146 = vunpack.c.h.b16 %v72
  %v147 = vunpack.c.l.b16 %v73
  %v148 = vunpack.c.h.b16 %v73
  %v149 = vunpack.c.l.b16 %v74
  %v150 = vunpack.c.h.b16 %v74
  %v151 = vunpack.c.l.b16 %v75
  %v152 = vunpack.c.h.b16 %v75
  %v153 = vunpack.c.l.b16 %v76
  %v154 = vunpack.c.h.b16 %v76
  %v155 = vunpack.c.l.b16 %v77
  %v156 = vunpack.c.h.b16 %v77
  %v157 = vunpack.c.l.b16 %v78
  %v158 = vunpack.c.h.b16 %v78
  %v159 = vunpack.c.l.b16 %v79
  %v160 = vunpack.c.h.b16 %v79
  %v161 = vunpack.c.l.b16 %v80
  %v162 = vunpack.c.h.b16 %v80
  %v163 = vunpack.c.l.b16 %v81
  %v164 = vunpack.c.h.b16 %v81
  %v165 = vunpack.c.l.b16 %v82
  %v166 = vunpack.c.h.b16 %v82
  %v167 = vunpack.c.l.b16 %v83
  %v168 = vunpack.c.h.b16 %v83
  %v169 = vunpack.c.l.b16 %v84
  %v170 = vunpack.c.h.b16 %v84
  %v171 = vunpack.c.l.b16 %v85
  %v172 = vunpack.c.h.b16 %v85
  %v173 = vunpack.c.l.b16 %v86
  %v174 = vunpack.c.h.b16 %v86
  %v175 = vunpack.c.l.b16 %v87
  %v176 = vunpack.c.h.b16 %v87
  %v177 = vunpack.c.l.b16 %v88
  %v178 = vunpack.c.h.b16 %v88
  %v179 = vunpack.c.l.b16 %v89
  %v180 = vunpack.c.h.b16 %v89
  %v181 = vunpack.c.l.b16 %v90
  %v182 = vunpack.c.h.b16 %v90
  %v183 = vunpack.c.l.b16 %v91
  %v184 = vunpack.c.h.b16 %v91
  %v185 = vunpack.c.l.b16 %v92
  %v186 = vunpack.c.h.b16 %v92
  %v187 = vunpack.c.l.b16 %v93
  %v188 = vunpack.c.h.b16 %v93
  %v189 = vunpack.c.l.b16 %v94
  %v190 = vunpack.c.h.b16 %v94
  %v191 = vpack.c.b16 %v131, %v127
  %v192 = vpack.c.b16 %v132, %v128
  %v193 = vpack.c.b16 %v133, %v129
  %v194 = vpack.c.b16 %v134, %v130
  %v195 = vpack.c.b16 %v139, %v135
  %v196 = vpack.c.b16 %v140, %v136
  %v197 = vpack.c.b16 %v141, %v137
  %v198 = vpack.c.b16 %v142, %v138
  %v199 = vpack.c.b16 %v147, %v143
  %v200 = vpack.c.b16 %v148, %v144
  %v201 = vpack.c.b16 %v149, %v145
  %v202 = vpack.c.b16 %v150, %v146
  %v203 = vpack.c.b16 %v155, %v151
  %v204 = vpack.c.b16 %v156, %v152
  %v205 = vpack.c.b16 %v157, %v153
  %v206 = vpack.c.b16 %v158, %v154
  %v207 = vpack.c.b16 %v163, %v159
  %v208 = vpack.c.b16 %v164, %v160
  %v209 = vpack.c.b16 %v165, %v161
  %v210 = vpack.c.b16 %v166, %v162
  %v211 = vpack.c.b16 %v171, %v167
  %v212 = vpack.c.b16 %v172, %v168
  %v213 = vpack.c.b16 %v173, %v169
  %v214 = vpack.c.b16 %v174, %v170
  %v215 = vpack.c.b16 %v179, %v175
  %v216 = vpack.c.b16 %v180, %v176
  %v217 = vpack.c.b16 %v181, %v177
  %v218 = vpack.c.b16 %v182, %v178
  %v219 = vpack.c.b16 %v187, %v183
  %v220 = vpack.c.b16 %v188, %v184
  %v221 = vpack.c.b16 %v189, %v185
  %v222 = vpack.c.b16 %v190, %v186
  %255 = vmatprep.subr.bf16.mxu0 %v220
  %256 = vmatpush1.bf16.msra.mxu0 %v219
  %257 = vmatprep.subr.bf16.mxu0 %v216
  %258 = vmatpush1.bf16.msra.mxu0 %v215
  %259 = vmatprep.subr.bf16.mxu0 %v212
  %260 = vmatpush1.bf16.msra.mxu0 %v211
  %261 = vmatprep.subr.bf16.mxu0 %v208
  %262 = vmatpush1.bf16.msra.mxu0 %v207
  %263 = vmatprep.subr.bf16.mxu0 %v204
  %264 = vmatpush1.bf16.msra.mxu0 %v203
  %265 = vmatprep.subr.bf16.mxu0 %v200
  %266 = vmatpush1.bf16.msra.mxu0 %v199
  %267 = vmatprep.subr.bf16.mxu0 %v196
  %268 = vmatpush1.bf16.msra.mxu0 %v195
  %269 = vmatprep.subr.bf16.mxu0 %v192
  %270 = vmatpush1.bf16.msra.mxu0 %v191
  %271 = vmatprep.subr.bf16.mxu0 0
  %272 = vmatpush2.bf16.msra.mxu0 0
  %273 = vmatprep.subr.bf16.mxu0 0
  %274 = vmatpush2.bf16.msra.mxu0 0
  %275 = vmatprep.subr.bf16.mxu0 0
  %276 = vmatpush2.bf16.msra.mxu0 0
  %277 = vmatprep.subr.bf16.mxu0 0
  %278 = vmatpush2.bf16.msra.mxu0 0
  %279 = vmatprep.subr.bf16.mxu0 0
  %280 = vmatpush2.bf16.msra.mxu0 0
  %281 = vmatprep.subr.bf16.mxu0 0
  %282 = vmatpush2.bf16.msra.mxu0 0
  %283 = vmatprep.subr.bf16.mxu0 0
  %284 = vmatpush2.bf16.msra.mxu0 0
  %285 = vmatprep.subr.bf16.mxu0 0
  %286 = vmatpush2.bf16.msra.mxu0 0
  %287 = vmatprep.mubr.bf16.mxu0 0
  %288 = vmatmul.mubr.bf16.gmra.mxu0 %v47
  %v289 = vpop.f32.mrf.mxu0
  %v290 = vadd.f32 0.0, %v289
  %v291 = vpop.f32.mrf.mxu0
  %v292 = vadd.f32 0.0, %v291
  %v293 = vpop.f32.mrf.mxu0
  %v294 = vadd.f32 0.0, %v293
  %v295 = vpop.f32.mrf.mxu0
  %v296 = vadd.f32 0.0, %v295
  %297 = vmatprep.mubr.bf16.mxu0 0
  %298 = vmatmul.mubr.bf16.gmra.mxu0 %v48
  %v299 = vpop.f32.mrf.mxu0
  %v300 = vadd.f32 0.0, %v299
  %v301 = vpop.f32.mrf.mxu0
  %v302 = vadd.f32 0.0, %v301
  %v303 = vpop.f32.mrf.mxu0
  %v304 = vadd.f32 0.0, %v303
  %v305 = vpop.f32.mrf.mxu0
  %v306 = vadd.f32 0.0, %v305
  %307 = vmatprep.mubr.bf16.mxu0 0
  %308 = vmatmul.mubr.bf16.gmra.mxu0 %v49
  %v309 = vpop.f32.mrf.mxu0
  %v310 = vadd.f32 0.0, %v309
  %v311 = vpop.f32.mrf.mxu0
  %v312 = vadd.f32 0.0, %v311
  %v313 = vpop.f32.mrf.mxu0
  %v314 = vadd.f32 0.0, %v313
  %v315 = vpop.f32.mrf.mxu0
  %v316 = vadd.f32 0.0, %v315
  %317 = vmatprep.mubr.bf16.mxu0 0
  %318 = vmatmul.mubr.bf16.gmra.mxu0 %v50
  %v319 = vpop.f32.mrf.mxu0
  %v320 = vadd.f32 0.0, %v319
  %v321 = vpop.f32.mrf.mxu0
  %v322 = vadd.f32 0.0, %v321
  %v323 = vpop.f32.mrf.mxu0
  %v324 = vadd.f32 0.0, %v323
  %v325 = vpop.f32.mrf.mxu0
  %v326 = vadd.f32 0.0, %v325
  %327 = vmatprep.mubr.bf16.mxu0 0
  %328 = vmatmul.mubr.bf16.gmra.mxu0 %v51
  %v329 = vpop.f32.mrf.mxu0
  %v330 = vadd.f32 0.0, %v329
  %v331 = vpop.f32.mrf.mxu0
  %v332 = vadd.f32 0.0, %v331
  %v333 = vpop.f32.mrf.mxu0
  %v334 = vadd.f32 0.0, %v333
  %v335 = vpop.f32.mrf.mxu0
  %v336 = vadd.f32 0.0, %v335
  %337 = vmatprep.mubr.bf16.mxu0 0
  %338 = vmatmul.mubr.bf16.gmra.mxu0 %v52
  %v339 = vpop.f32.mrf.mxu0
  %v340 = vadd.f32 0.0, %v339
  %v341 = vpop.f32.mrf.mxu0
  %v342 = vadd.f32 0.0, %v341
  %v343 = vpop.f32.mrf.mxu0
  %v344 = vadd.f32 0.0, %v343
  %v345 = vpop.f32.mrf.mxu0
  %v346 = vadd.f32 0.0, %v345
  %347 = vmatprep.mubr.bf16.mxu0 0
  %348 = vmatmul.mubr.bf16.gmra.mxu0 %v53
  %v349 = vpop.f32.mrf.mxu0
  %v350 = vadd.f32 0.0, %v349
  %v351 = vpop.f32.mrf.mxu0
  %v352 = vadd.f32 0.0, %v351
  %v353 = vpop.f32.mrf.mxu0
  %v354 = vadd.f32 0.0, %v353
  %v355 = vpop.f32.mrf.mxu0
  %v356 = vadd.f32 0.0, %v355
  %357 = vmatprep.mubr.bf16.mxu0 0
  %358 = vmatmul.mubr.bf16.gmra.mxu0 %v54
  %v359 = vpop.f32.mrf.mxu0
  %v360 = vadd.f32 0.0, %v359
  %v361 = vpop.f32.mrf.mxu0
  %v362 = vadd.f32 0.0, %v361
  %v363 = vpop.f32.mrf.mxu0
  %v364 = vadd.f32 0.0, %v363
  %v365 = vpop.f32.mrf.mxu0
  %v366 = vadd.f32 0.0, %v365
  %367 = vmatprep.mubr.bf16.mxu0 0
  %368 = vmatmul.mubr.bf16.gmra.mxu0 %v55
  %v369 = vpop.f32.mrf.mxu0
  %v370 = vadd.f32 0.0, %v369
  %v371 = vpop.f32.mrf.mxu0
  %v372 = vadd.f32 0.0, %v371
  %v373 = vpop.f32.mrf.mxu0
  %v374 = vadd.f32 0.0, %v373
  %v375 = vpop.f32.mrf.mxu0
  %v376 = vadd.f32 0.0, %v375
  %377 = vmatprep.mubr.bf16.mxu0 0
  %378 = vmatmul.mubr.bf16.gmra.mxu0 %v56
  %v379 = vpop.f32.mrf.mxu0
  %v380 = vadd.f32 0.0, %v379
  %v381 = vpop.f32.mrf.mxu0
  %v382 = vadd.f32 0.0, %v381
  %v383 = vpop.f32.mrf.mxu0
  %v384 = vadd.f32 0.0, %v383
  %v385 = vpop.f32.mrf.mxu0
  %v386 = vadd.f32 0.0, %v385
  %387 = vmatprep.mubr.bf16.mxu0 0
  %388 = vmatmul.mubr.bf16.gmra.mxu0 %v57
  %v389 = vpop.f32.mrf.mxu0
  %v390 = vadd.f32 0.0, %v389
  %v391 = vpop.f32.mrf.mxu0
  %v392 = vadd.f32 0.0, %v391
  %v393 = vpop.f32.mrf.mxu0
  %v394 = vadd.f32 0.0, %v393
  %v395 = vpop.f32.mrf.mxu0
  %v396 = vadd.f32 0.0, %v395
  %397 = vmatprep.mubr.bf16.mxu0 0
  %398 = vmatmul.mubr.bf16.gmra.mxu0 %v58
  %v399 = vpop.f32.mrf.mxu0
  %v400 = vadd.f32 0.0, %v399
  %v401 = vpop.f32.mrf.mxu0
  %v402 = vadd.f32 0.0, %v401
  %v403 = vpop.f32.mrf.mxu0
  %v404 = vadd.f32 0.0, %v403
  %v405 = vpop.f32.mrf.mxu0
  %v406 = vadd.f32 0.0, %v405
  %407 = vmatprep.mubr.bf16.mxu0 0
  %408 = vmatmul.mubr.bf16.gmra.mxu0 %v59
  %v409 = vpop.f32.mrf.mxu0
  %v410 = vadd.f32 0.0, %v409
  %v411 = vpop.f32.mrf.mxu0
  %v412 = vadd.f32 0.0, %v411
  %v413 = vpop.f32.mrf.mxu0
  %v414 = vadd.f32 0.0, %v413
  %v415 = vpop.f32.mrf.mxu0
  %v416 = vadd.f32 0.0, %v415
  %417 = vmatprep.mubr.bf16.mxu0 0
  %418 = vmatmul.mubr.bf16.gmra.mxu0 %v60
  %v419 = vpop.f32.mrf.mxu0
  %v420 = vadd.f32 0.0, %v419
  %v421 = vpop.f32.mrf.mxu0
  %v422 = vadd.f32 0.0, %v421
  %v423 = vpop.f32.mrf.mxu0
  %v424 = vadd.f32 0.0, %v423
  %v425 = vpop.f32.mrf.mxu0
  %v426 = vadd.f32 0.0, %v425
  %427 = vmatprep.mubr.bf16.mxu0 0
  %428 = vmatmul.mubr.bf16.gmra.mxu0 %v61
  %v429 = vpop.f32.mrf.mxu0
  %v430 = vadd.f32 0.0, %v429
  %v431 = vpop.f32.mrf.mxu0
  %v432 = vadd.f32 0.0, %v431
  %v433 = vpop.f32.mrf.mxu0
  %v434 = vadd.f32 0.0, %v433
  %v435 = vpop.f32.mrf.mxu0
  %v436 = vadd.f32 0.0, %v435
  %437 = vmatprep.mubr.bf16.mxu0 0
  %438 = vmatmul.mubr.bf16.gmra.mxu0 %v62
  %v439 = vpop.f32.mrf.mxu0
  %v440 = vadd.f32 0.0, %v439
  %v441 = vpop.f32.mrf.mxu0
  %v442 = vadd.f32 0.0, %v441
  %v443 = vpop.f32.mrf.mxu0
  %v444 = vadd.f32 0.0, %v443
  %v445 = vpop.f32.mrf.mxu0
  %v446 = vadd.f32 0.0, %v445
  %447 = vdwg.mxu0
  %448 = vmatprep.subr.bf16.mxu0 %v222
  %449 = vmatpush1.bf16.msra.mxu0 %v221
  %450 = vmatprep.subr.bf16.mxu0 %v218
  %451 = vmatpush1.bf16.msra.mxu0 %v217
  %452 = vmatprep.subr.bf16.mxu0 %v214
  %453 = vmatpush1.bf16.msra.mxu0 %v213
  %454 = vmatprep.subr.bf16.mxu0 %v210
  %455 = vmatpush1.bf16.msra.mxu0 %v209
  %456 = vmatprep.subr.bf16.mxu0 %v206
  %457 = vmatpush1.bf16.msra.mxu0 %v205
  %458 = vmatprep.subr.bf16.mxu0 %v202
  %459 = vmatpush1.bf16.msra.mxu0 %v201
  %460 = vmatprep.subr.bf16.mxu0 %v198
  %461 = vmatpush1.bf16.msra.mxu0 %v197
  %462 = vmatprep.subr.bf16.mxu0 %v194
  %463 = vmatpush1.bf16.msra.mxu0 %v193
  %464 = vmatprep.subr.bf16.mxu0 0
  %465 = vmatpush2.bf16.msra.mxu0 0
  %466 = vmatprep.subr.bf16.mxu0 0
  %467 = vmatpush2.bf16.msra.mxu0 0
  %468 = vmatprep.subr.bf16.mxu0 0
  %469 = vmatpush2.bf16.msra.mxu0 0
  %470 = vmatprep.subr.bf16.mxu0 0
  %471 = vmatpush2.bf16.msra.mxu0 0
  %472 = vmatprep.subr.bf16.mxu0 0
  %473 = vmatpush2.bf16.msra.mxu0 0
  %474 = vmatprep.subr.bf16.mxu0 0
  %475 = vmatpush2.bf16.msra.mxu0 0
  %476 = vmatprep.subr.bf16.mxu0 0
  %477 = vmatpush2.bf16.msra.mxu0 0
  %478 = vmatprep.subr.bf16.mxu0 0
  %479 = vmatpush2.bf16.msra.mxu0 0
  %480 = vmatprep.mubr.bf16.mxu0 0
  %481 = vmatmul.mubr.bf16.gmra.mxu0 %v47
  %v482 = vpop.f32.mrf.mxu0
  %v483 = vadd.f32 0.0, %v482
  %v484 = vpop.f32.mrf.mxu0
  %v485 = vadd.f32 0.0, %v484
  %v486 = vpop.f32.mrf.mxu0
  %v487 = vadd.f32 0.0, %v486
  %v488 = vpop.f32.mrf.mxu0
  %v489 = vadd.f32 0.0, %v488
  %490 = vmatprep.mubr.bf16.mxu0 0
  %491 = vmatmul.mubr.bf16.gmra.mxu0 %v48
  %v492 = vpop.f32.mrf.mxu0
  %v493 = vadd.f32 0.0, %v492
  %v494 = vpop.f32.mrf.mxu0
  %v495 = vadd.f32 0.0, %v494
  %v496 = vpop.f32.mrf.mxu0
  %v497 = vadd.f32 0.0, %v496
  %v498 = vpop.f32.mrf.mxu0
  %v499 = vadd.f32 0.0, %v498
  %500 = vmatprep.mubr.bf16.mxu0 0
  %501 = vmatmul.mubr.bf16.gmra.mxu0 %v49
  %v502 = vpop.f32.mrf.mxu0
  %v503 = vadd.f32 0.0, %v502
  %v504 = vpop.f32.mrf.mxu0
  %v505 = vadd.f32 0.0, %v504
  %v506 = vpop.f32.mrf.mxu0
  %v507 = vadd.f32 0.0, %v506
  %v508 = vpop.f32.mrf.mxu0
  %v509 = vadd.f32 0.0, %v508
  %510 = vmatprep.mubr.bf16.mxu0 0
  %511 = vmatmul.mubr.bf16.gmra.mxu0 %v50
  %v512 = vpop.f32.mrf.mxu0
  %v513 = vadd.f32 0.0, %v512
  %v514 = vpop.f32.mrf.mxu0
  %v515 = vadd.f32 0.0, %v514
  %v516 = vpop.f32.mrf.mxu0
  %v517 = vadd.f32 0.0, %v516
  %v518 = vpop.f32.mrf.mxu0
  %v519 = vadd.f32 0.0, %v518
  %520 = vmatprep.mubr.bf16.mxu0 0
  %521 = vmatmul.mubr.bf16.gmra.mxu0 %v51
  %v522 = vpop.f32.mrf.mxu0
  %v523 = vadd.f32 0.0, %v522
  %v524 = vpop.f32.mrf.mxu0
  %v525 = vadd.f32 0.0, %v524
  %v526 = vpop.f32.mrf.mxu0
  %v527 = vadd.f32 0.0, %v526
  %v528 = vpop.f32.mrf.mxu0
  %v529 = vadd.f32 0.0, %v528
  %530 = vmatprep.mubr.bf16.mxu0 0
  %531 = vmatmul.mubr.bf16.gmra.mxu0 %v52
  %v532 = vpop.f32.mrf.mxu0
  %v533 = vadd.f32 0.0, %v532
  %v534 = vpop.f32.mrf.mxu0
  %v535 = vadd.f32 0.0, %v534
  %v536 = vpop.f32.mrf.mxu0
  %v537 = vadd.f32 0.0, %v536
  %v538 = vpop.f32.mrf.mxu0
  %v539 = vadd.f32 0.0, %v538
  %540 = vmatprep.mubr.bf16.mxu0 0
  %541 = vmatmul.mubr.bf16.gmra.mxu0 %v53
  %v542 = vpop.f32.mrf.mxu0
  %v543 = vadd.f32 0.0, %v542
  %v544 = vpop.f32.mrf.mxu0
  %v545 = vadd.f32 0.0, %v544
  %v546 = vpop.f32.mrf.mxu0
  %v547 = vadd.f32 0.0, %v546
  %v548 = vpop.f32.mrf.mxu0
  %v549 = vadd.f32 0.0, %v548
  %550 = vmatprep.mubr.bf16.mxu0 0
  %551 = vmatmul.mubr.bf16.gmra.mxu0 %v54
  %v552 = vpop.f32.mrf.mxu0
  %v553 = vadd.f32 0.0, %v552
  %v554 = vpop.f32.mrf.mxu0
  %v555 = vadd.f32 0.0, %v554
  %v556 = vpop.f32.mrf.mxu0
  %v557 = vadd.f32 0.0, %v556
  %v558 = vpop.f32.mrf.mxu0
  %v559 = vadd.f32 0.0, %v558
  %560 = vmatprep.mubr.bf16.mxu0 0
  %561 = vmatmul.mubr.bf16.gmra.mxu0 %v55
  %v562 = vpop.f32.mrf.mxu0
  %v563 = vadd.f32 0.0, %v562
  %v564 = vpop.f32.mrf.mxu0
  %v565 = vadd.f32 0.0, %v564
  %v566 = vpop.f32.mrf.mxu0
  %v567 = vadd.f32 0.0, %v566
  %v568 = vpop.f32.mrf.mxu0
  %v569 = vadd.f32 0.0, %v568
  %570 = vmatprep.mubr.bf16.mxu0 0
  %571 = vmatmul.mubr.bf16.gmra.mxu0 %v56
  %v572 = vpop.f32.mrf.mxu0
  %v573 = vadd.f32 0.0, %v572
  %v574 = vpop.f32.mrf.mxu0
  %v575 = vadd.f32 0.0, %v574
  %v576 = vpop.f32.mrf.mxu0
  %v577 = vadd.f32 0.0, %v576
  %v578 = vpop.f32.mrf.mxu0
  %v579 = vadd.f32 0.0, %v578
  %580 = vmatprep.mubr.bf16.mxu0 0
  %581 = vmatmul.mubr.bf16.gmra.mxu0 %v57
  %v582 = vpop.f32.mrf.mxu0
  %v583 = vadd.f32 0.0, %v582
  %v584 = vpop.f32.mrf.mxu0
  %v585 = vadd.f32 0.0, %v584
  %v586 = vpop.f32.mrf.mxu0
  %v587 = vadd.f32 0.0, %v586
  %v588 = vpop.f32.mrf.mxu0
  %v589 = vadd.f32 0.0, %v588
  %590 = vmatprep.mubr.bf16.mxu0 0
  %591 = vmatmul.mubr.bf16.gmra.mxu0 %v58
  %v592 = vpop.f32.mrf.mxu0
  %v593 = vadd.f32 0.0, %v592
  %v594 = vpop.f32.mrf.mxu0
  %v595 = vadd.f32 0.0, %v594
  %v596 = vpop.f32.mrf.mxu0
  %v597 = vadd.f32 0.0, %v596
  %v598 = vpop.f32.mrf.mxu0
  %v599 = vadd.f32 0.0, %v598
  %600 = vmatprep.mubr.bf16.mxu0 0
  %601 = vmatmul.mubr.bf16.gmra.mxu0 %v59
  %v602 = vpop.f32.mrf.mxu0
  %v603 = vadd.f32 0.0, %v602
  %v604 = vpop.f32.mrf.mxu0
  %v605 = vadd.f32 0.0, %v604
  %v606 = vpop.f32.mrf.mxu0
  %v607 = vadd.f32 0.0, %v606
  %v608 = vpop.f32.mrf.mxu0
  %v609 = vadd.f32 0.0, %v608
  %610 = vmatprep.mubr.bf16.mxu0 0
  %611 = vmatmul.mubr.bf16.gmra.mxu0 %v60
  %v612 = vpop.f32.mrf.mxu0
  %v613 = vadd.f32 0.0, %v612
  %v614 = vpop.f32.mrf.mxu0
  %v615 = vadd.f32 0.0, %v614
  %v616 = vpop.f32.mrf.mxu0
  %v617 = vadd.f32 0.0, %v616
  %v618 = vpop.f32.mrf.mxu0
  %v619 = vadd.f32 0.0, %v618
  %620 = vmatprep.mubr.bf16.mxu0 0
  %621 = vmatmul.mubr.bf16.gmra.mxu0 %v61
  %v622 = vpop.f32.mrf.mxu0
  %v623 = vadd.f32 0.0, %v622
  %v624 = vpop.f32.mrf.mxu0
  %v625 = vadd.f32 0.0, %v624
  %v626 = vpop.f32.mrf.mxu0
  %v627 = vadd.f32 0.0, %v626
  %v628 = vpop.f32.mrf.mxu0
  %v629 = vadd.f32 0.0, %v628
  %630 = vmatprep.mubr.bf16.mxu0 0
  %631 = vmatmul.mubr.bf16.gmra.mxu0 %v62
  %v632 = vpop.f32.mrf.mxu0
  %v633 = vadd.f32 0.0, %v632
  %v634 = vpop.f32.mrf.mxu0
  %v635 = vadd.f32 0.0, %v634
  %v636 = vpop.f32.mrf.mxu0
  %v637 = vadd.f32 0.0, %v636
  %v638 = vpop.f32.mrf.mxu0
  %v639 = vadd.f32 0.0, %v638
  %640 = vdwg.mxu0
  %v641 = vld [vmem:[%s2] sm:$0xf]
  %v643 = vlaneseq
  %v644 = vshrl.u32 %v643, 7
  %v645 = vsub.s32 0, %v644
  %v646 = vrot.slane %v641, %v645
  %v647 = vlaneseq
  %v648 = vshrl.u32 %v647, 7
  %v649 = vsub.s32 1, %v648
  %v650 = vrot.slane %v641, %v649
  %v651 = vlaneseq
  %v652 = vshrl.u32 %v651, 7
  %v653 = vsub.s32 2, %v652
  %v654 = vrot.slane %v641, %v653
  %v655 = vlaneseq
  %v656 = vshrl.u32 %v655, 7
  %v657 = vsub.s32 3, %v656
  %v658 = vrot.slane %v641, %v657
  %v663 = vadd.f32 %v290, %v646
  %v664 = vadd.f32 %v292, %v650
  %v665 = vadd.f32 %v483, %v654
  %v666 = vadd.f32 %v485, %v658
  %v667 = vadd.f32 %v294, %v646
  %v668 = vadd.f32 %v296, %v650
  %v669 = vadd.f32 %v487, %v654
  %v670 = vadd.f32 %v489, %v658
  %v671 = vadd.f32 %v300, %v646
  %v672 = vadd.f32 %v302, %v650
  %v673 = vadd.f32 %v493, %v654
  %v674 = vadd.f32 %v495, %v658
  %v675 = vadd.f32 %v304, %v646
  %v676 = vadd.f32 %v306, %v650
  %v677 = vadd.f32 %v497, %v654
  %v678 = vadd.f32 %v499, %v658
  %v679 = vadd.f32 %v310, %v646
  %v680 = vadd.f32 %v312, %v650
  %v681 = vadd.f32 %v503, %v654
  %v682 = vadd.f32 %v505, %v658
  %v683 = vadd.f32 %v314, %v646
  %v684 = vadd.f32 %v316, %v650
  %v685 = vadd.f32 %v507, %v654
  %v686 = vadd.f32 %v509, %v658
  %v687 = vadd.f32 %v320, %v646
  %v688 = vadd.f32 %v322, %v650
  %v689 = vadd.f32 %v513, %v654
  %v690 = vadd.f32 %v515, %v658
  %v691 = vadd.f32 %v324, %v646
  %v692 = vadd.f32 %v326, %v650
  %v693 = vadd.f32 %v517, %v654
  %v694 = vadd.f32 %v519, %v658
  %v695 = vadd.f32 %v330, %v646
  %v696 = vadd.f32 %v332, %v650
  %v697 = vadd.f32 %v523, %v654
  %v698 = vadd.f32 %v525, %v658
  %v699 = vadd.f32 %v334, %v646
  %v700 = vadd.f32 %v336, %v650
  %v701 = vadd.f32 %v527, %v654
  %v702 = vadd.f32 %v529, %v658
  %v703 = vadd.f32 %v340, %v646
  %v704 = vadd.f32 %v342, %v650
  %v705 = vadd.f32 %v533, %v654
  %v706 = vadd.f32 %v535, %v658
  %v707 = vadd.f32 %v344, %v646
  %v708 = vadd.f32 %v346, %v650
  %v709 = vadd.f32 %v537, %v654
  %v710 = vadd.f32 %v539, %v658
  %v711 = vadd.f32 %v350, %v646
  %v712 = vadd.f32 %v352, %v650
  %v713 = vadd.f32 %v543, %v654
  %v714 = vadd.f32 %v545, %v658
  %v715 = vadd.f32 %v354, %v646
  %v716 = vadd.f32 %v356, %v650
  %v717 = vadd.f32 %v547, %v654
  %v718 = vadd.f32 %v549, %v658
  %v719 = vadd.f32 %v360, %v646
  %v720 = vadd.f32 %v362, %v650
  %v721 = vadd.f32 %v553, %v654
  %v722 = vadd.f32 %v555, %v658
  %v723 = vadd.f32 %v364, %v646
  %v724 = vadd.f32 %v366, %v650
  %v725 = vadd.f32 %v557, %v654
  %v726 = vadd.f32 %v559, %v658
  %v727 = vadd.f32 %v370, %v646
  %v728 = vadd.f32 %v372, %v650
  %v729 = vadd.f32 %v563, %v654
  %v730 = vadd.f32 %v565, %v658
  %v731 = vadd.f32 %v374, %v646
  %v732 = vadd.f32 %v376, %v650
  %v733 = vadd.f32 %v567, %v654
  %v734 = vadd.f32 %v569, %v658
  %v735 = vadd.f32 %v380, %v646
  %v736 = vadd.f32 %v382, %v650
  %v737 = vadd.f32 %v573, %v654
  %v738 = vadd.f32 %v575, %v658
  %v739 = vadd.f32 %v384, %v646
  %v740 = vadd.f32 %v386, %v650
  %v741 = vadd.f32 %v577, %v654
  %v742 = vadd.f32 %v579, %v658
  %v743 = vadd.f32 %v390, %v646
  %v744 = vadd.f32 %v392, %v650
  %v745 = vadd.f32 %v583, %v654
  %v746 = vadd.f32 %v585, %v658
  %v747 = vadd.f32 %v394, %v646
  %v748 = vadd.f32 %v396, %v650
  %v749 = vadd.f32 %v587, %v654
  %v750 = vadd.f32 %v589, %v658
  %v751 = vadd.f32 %v400, %v646
  %v752 = vadd.f32 %v402, %v650
  %v753 = vadd.f32 %v593, %v654
  %v754 = vadd.f32 %v595, %v658
  %v755 = vadd.f32 %v404, %v646
  %v756 = vadd.f32 %v406, %v650
  %v757 = vadd.f32 %v597, %v654
  %v758 = vadd.f32 %v599, %v658
  %v759 = vadd.f32 %v410, %v646
  %v760 = vadd.f32 %v412, %v650
  %v761 = vadd.f32 %v603, %v654
  %v762 = vadd.f32 %v605, %v658
  %v763 = vadd.f32 %v414, %v646
  %v764 = vadd.f32 %v416, %v650
  %v765 = vadd.f32 %v607, %v654
  %v766 = vadd.f32 %v609, %v658
  %v767 = vadd.f32 %v420, %v646
  %v768 = vadd.f32 %v422, %v650
  %v769 = vadd.f32 %v613, %v654
  %v770 = vadd.f32 %v615, %v658
  %v771 = vadd.f32 %v424, %v646
  %v772 = vadd.f32 %v426, %v650
  %v773 = vadd.f32 %v617, %v654
  %v774 = vadd.f32 %v619, %v658
  %v775 = vadd.f32 %v430, %v646
  %v776 = vadd.f32 %v432, %v650
  %v777 = vadd.f32 %v623, %v654
  %v778 = vadd.f32 %v625, %v658
  %v779 = vadd.f32 %v434, %v646
  %v780 = vadd.f32 %v436, %v650
  %v781 = vadd.f32 %v627, %v654
  %v782 = vadd.f32 %v629, %v658
  %v783 = vadd.f32 %v440, %v646
  %v784 = vadd.f32 %v442, %v650
  %v785 = vadd.f32 %v633, %v654
  %v786 = vadd.f32 %v635, %v658
  %v787 = vadd.f32 %v444, %v646
  %v788 = vadd.f32 %v446, %v650
  %v789 = vadd.f32 %v637, %v654
  %v790 = vadd.f32 %v639, %v658
  %791 = vst [vmem:[%s3] sm:$0xff] %v663
  %792 = vst [vmem:[%s3 + $0x8] sm:$0xff] %v664
  %793 = vst [vmem:[%s3 + $0x10] sm:$0xff] %v665
  %794 = vst [vmem:[%s3 + $0x18] sm:$0xff] %v666
  %795 = vst [vmem:[%s3 + $0x20] sm:$0xff] %v667
  %796 = vst [vmem:[%s3 + $0x28] sm:$0xff] %v668
  %797 = vst [vmem:[%s3 + $0x30] sm:$0xff] %v669
  %798 = vst [vmem:[%s3 + $0x38] sm:$0xff] %v670
  %799 = vst [vmem:[%s3 + $0x40] sm:$0xff] %v671
  %800 = vst [vmem:[%s3 + $0x48] sm:$0xff] %v672
  %801 = vst [vmem:[%s3 + $0x50] sm:$0xff] %v673
  %802 = vst [vmem:[%s3 + $0x58] sm:$0xff] %v674
  %803 = vst [vmem:[%s3 + $0x60] sm:$0xff] %v675
  %804 = vst [vmem:[%s3 + $0x68] sm:$0xff] %v676
  %805 = vst [vmem:[%s3 + $0x70] sm:$0xff] %v677
  %806 = vst [vmem:[%s3 + $0x78] sm:$0xff] %v678
  %807 = vst [vmem:[%s3 + $0x80] sm:$0xff] %v679
  %808 = vst [vmem:[%s3 + $0x88] sm:$0xff] %v680
  %809 = vst [vmem:[%s3 + $0x90] sm:$0xff] %v681
  %810 = vst [vmem:[%s3 + $0x98] sm:$0xff] %v682
  %811 = vst [vmem:[%s3 + $0xa0] sm:$0xff] %v683
  %812 = vst [vmem:[%s3 + $0xa8] sm:$0xff] %v684
  %813 = vst [vmem:[%s3 + $0xb0] sm:$0xff] %v685
  %814 = vst [vmem:[%s3 + $0xb8] sm:$0xff] %v686
  %815 = vst [vmem:[%s3 + $0xc0] sm:$0xff] %v687
  %816 = vst [vmem:[%s3 + $0xc8] sm:$0xff] %v688
  %817 = vst [vmem:[%s3 + $0xd0] sm:$0xff] %v689
  %818 = vst [vmem:[%s3 + $0xd8] sm:$0xff] %v690
  %819 = vst [vmem:[%s3 + $0xe0] sm:$0xff] %v691
  %820 = vst [vmem:[%s3 + $0xe8] sm:$0xff] %v692
  %821 = vst [vmem:[%s3 + $0xf0] sm:$0xff] %v693
  %822 = vst [vmem:[%s3 + $0xf8] sm:$0xff] %v694
  %823 = vst [vmem:[%s3 + $0x100] sm:$0xff] %v695
  %824 = vst [vmem:[%s3 + $0x108] sm:$0xff] %v696
  %825 = vst [vmem:[%s3 + $0x110] sm:$0xff] %v697
  %826 = vst [vmem:[%s3 + $0x118] sm:$0xff] %v698
  %827 = vst [vmem:[%s3 + $0x120] sm:$0xff] %v699
  %828 = vst [vmem:[%s3 + $0x128] sm:$0xff] %v700
  %829 = vst [vmem:[%s3 + $0x130] sm:$0xff] %v701
  %830 = vst [vmem:[%s3 + $0x138] sm:$0xff] %v702
  %831 = vst [vmem:[%s3 + $0x140] sm:$0xff] %v703
  %832 = vst [vmem:[%s3 + $0x148] sm:$0xff] %v704
  %833 = vst [vmem:[%s3 + $0x150] sm:$0xff] %v705
  %834 = vst [vmem:[%s3 + $0x158] sm:$0xff] %v706
  %835 = vst [vmem:[%s3 + $0x160] sm:$0xff] %v707
  %836 = vst [vmem:[%s3 + $0x168] sm:$0xff] %v708
  %837 = vst [vmem:[%s3 + $0x170] sm:$0xff] %v709
  %838 = vst [vmem:[%s3 + $0x178] sm:$0xff] %v710
  %839 = vst [vmem:[%s3 + $0x180] sm:$0xff] %v711
  %840 = vst [vmem:[%s3 + $0x188] sm:$0xff] %v712
  %841 = vst [vmem:[%s3 + $0x190] sm:$0xff] %v713
  %842 = vst [vmem:[%s3 + $0x198] sm:$0xff] %v714
  %843 = vst [vmem:[%s3 + $0x1a0] sm:$0xff] %v715
  %844 = vst [vmem:[%s3 + $0x1a8] sm:$0xff] %v716
  %845 = vst [vmem:[%s3 + $0x1b0] sm:$0xff] %v717
  %846 = vst [vmem:[%s3 + $0x1b8] sm:$0xff] %v718
  %847 = vst [vmem:[%s3 + $0x1c0] sm:$0xff] %v719
  %848 = vst [vmem:[%s3 + $0x1c8] sm:$0xff] %v720
  %849 = vst [vmem:[%s3 + $0x1d0] sm:$0xff] %v721
  %850 = vst [vmem:[%s3 + $0x1d8] sm:$0xff] %v722
  %851 = vst [vmem:[%s3 + $0x1e0] sm:$0xff] %v723
  %852 = vst [vmem:[%s3 + $0x1e8] sm:$0xff] %v724
  %853 = vst [vmem:[%s3 + $0x1f0] sm:$0xff] %v725
  %854 = vst [vmem:[%s3 + $0x1f8] sm:$0xff] %v726
  %855 = vst [vmem:[%s3 + $0x200] sm:$0xff] %v727
  %856 = vst [vmem:[%s3 + $0x208] sm:$0xff] %v728
  %857 = vst [vmem:[%s3 + $0x210] sm:$0xff] %v729
  %858 = vst [vmem:[%s3 + $0x218] sm:$0xff] %v730
  %859 = vst [vmem:[%s3 + $0x220] sm:$0xff] %v731
  %860 = vst [vmem:[%s3 + $0x228] sm:$0xff] %v732
  %861 = vst [vmem:[%s3 + $0x230] sm:$0xff] %v733
  %862 = vst [vmem:[%s3 + $0x238] sm:$0xff] %v734
  %863 = vst [vmem:[%s3 + $0x240] sm:$0xff] %v735
  %864 = vst [vmem:[%s3 + $0x248] sm:$0xff] %v736
  %865 = vst [vmem:[%s3 + $0x250] sm:$0xff] %v737
  %866 = vst [vmem:[%s3 + $0x258] sm:$0xff] %v738
  %867 = vst [vmem:[%s3 + $0x260] sm:$0xff] %v739
  %868 = vst [vmem:[%s3 + $0x268] sm:$0xff] %v740
  %869 = vst [vmem:[%s3 + $0x270] sm:$0xff] %v741
  %870 = vst [vmem:[%s3 + $0x278] sm:$0xff] %v742
  %871 = vst [vmem:[%s3 + $0x280] sm:$0xff] %v743
  %872 = vst [vmem:[%s3 + $0x288] sm:$0xff] %v744
  %873 = vst [vmem:[%s3 + $0x290] sm:$0xff] %v745
  %874 = vst [vmem:[%s3 + $0x298] sm:$0xff] %v746
  %875 = vst [vmem:[%s3 + $0x2a0] sm:$0xff] %v747
  %876 = vst [vmem:[%s3 + $0x2a8] sm:$0xff] %v748
  %877 = vst [vmem:[%s3 + $0x2b0] sm:$0xff] %v749
  %878 = vst [vmem:[%s3 + $0x2b8] sm:$0xff] %v750
  %879 = vst [vmem:[%s3 + $0x2c0] sm:$0xff] %v751
  %880 = vst [vmem:[%s3 + $0x2c8] sm:$0xff] %v752
  %881 = vst [vmem:[%s3 + $0x2d0] sm:$0xff] %v753
  %882 = vst [vmem:[%s3 + $0x2d8] sm:$0xff] %v754
  %883 = vst [vmem:[%s3 + $0x2e0] sm:$0xff] %v755
  %884 = vst [vmem:[%s3 + $0x2e8] sm:$0xff] %v756
  %885 = vst [vmem:[%s3 + $0x2f0] sm:$0xff] %v757
  %886 = vst [vmem:[%s3 + $0x2f8] sm:$0xff] %v758
  %887 = vst [vmem:[%s3 + $0x300] sm:$0xff] %v759
  %888 = vst [vmem:[%s3 + $0x308] sm:$0xff] %v760
  %889 = vst [vmem:[%s3 + $0x310] sm:$0xff] %v761
  %890 = vst [vmem:[%s3 + $0x318] sm:$0xff] %v762
  %891 = vst [vmem:[%s3 + $0x320] sm:$0xff] %v763
  %892 = vst [vmem:[%s3 + $0x328] sm:$0xff] %v764
  %893 = vst [vmem:[%s3 + $0x330] sm:$0xff] %v765
  %894 = vst [vmem:[%s3 + $0x338] sm:$0xff] %v766
  %895 = vst [vmem:[%s3 + $0x340] sm:$0xff] %v767
  %896 = vst [vmem:[%s3 + $0x348] sm:$0xff] %v768
  %897 = vst [vmem:[%s3 + $0x350] sm:$0xff] %v769
  %898 = vst [vmem:[%s3 + $0x358] sm:$0xff] %v770
  %899 = vst [vmem:[%s3 + $0x360] sm:$0xff] %v771
  %900 = vst [vmem:[%s3 + $0x368] sm:$0xff] %v772
  %901 = vst [vmem:[%s3 + $0x370] sm:$0xff] %v773
  %902 = vst [vmem:[%s3 + $0x378] sm:$0xff] %v774
  %903 = vst [vmem:[%s3 + $0x380] sm:$0xff] %v775
  %904 = vst [vmem:[%s3 + $0x388] sm:$0xff] %v776
  %905 = vst [vmem:[%s3 + $0x390] sm:$0xff] %v777
  %906 = vst [vmem:[%s3 + $0x398] sm:$0xff] %v778
  %907 = vst [vmem:[%s3 + $0x3a0] sm:$0xff] %v779
  %908 = vst [vmem:[%s3 + $0x3a8] sm:$0xff] %v780
  %909 = vst [vmem:[%s3 + $0x3b0] sm:$0xff] %v781
  %910 = vst [vmem:[%s3 + $0x3b8] sm:$0xff] %v782
  %911 = vst [vmem:[%s3 + $0x3c0] sm:$0xff] %v783
  %912 = vst [vmem:[%s3 + $0x3c8] sm:$0xff] %v784
  %913 = vst [vmem:[%s3 + $0x3d0] sm:$0xff] %v785
  %914 = vst [vmem:[%s3 + $0x3d8] sm:$0xff] %v786
  %915 = vst [vmem:[%s3 + $0x3e0] sm:$0xff] %v787
  %916 = vst [vmem:[%s3 + $0x3e8] sm:$0xff] %v788
  %917 = vst [vmem:[%s3 + $0x3f0] sm:$0xff] %v789
  %918 = vst [vmem:[%s3 + $0x3f8] sm:$0xff] %v790
  // Predicated region
  $region14: #{rnn_lm_forward.3} parent=0 // pred_check
    _
  $region15: #{rnn_lm_forward.3} parent=0 // pred_check_branch
    %920 = sbr.rel (0) target = $region17
  $region16: #{rnn_lm_forward.3} parent=0 // pred_region
    _
  $region17: #{rnn_lm_forward.3} parent=0 // pred_fallthru
    _
  // Predicated region
  $region18: #{rnn_lm_forward.3} parent=0 // pred_check
    _
  $region19: #{rnn_lm_forward.3} parent=0 // pred_check_branch
    %922 = sbr.rel (0) target = $region21
  $region20: #{rnn_lm_forward.3} parent=0 // pred_region
    _
  $region21: #{rnn_lm_forward.3} parent=0 // pred_fallthru
    _

// kernel: rnn_lm_forward.5
$region0: #{rnn_lm_forward.5}
  #allocation0 [shape = 'u32[]', space=smem, size = 0x4, offset = 0x4, fixed_abs, tag = 'smem constant byte address 0x4 - core index']
  #allocation1 [shape = 'u32[144,128]{1,0:T(1,128)}', space=vmem, size = 0x12000, scoped, tag = 'internal scratch']
  %s0 = inlined_call_operand.vmem [shape: f32[16,16,128], index: 0, kind: input, shape index: {}]
  %s1 = inlined_call_operand.vmem [shape: bf16[128,256], index: 1, kind: input, shape index: {}]
  %s2 = inlined_call_operand.vmem [shape: f32[16,256], index: 2, kind: input, shape index: {}]
  %s3 = inlined_call_operand.hbm [shape: f32[16,16,256], index: 3, kind: output, shape index: {}]
  %s4 = sld [smem:[#allocation0]]
  $region22: #{rnn_lm_forward.5} parent=0
    _
  %s6 = ssub.s32 1, %s4
  %s7 = scalar_select 0, %s6, %s4
  $region1: #{rnn_lm_forward.5} parent=0
    #allocation2 [shape = 'u8[262144]{0}', space=vmem, size = 0x40000, scoped, tag = 'output window, operand 0, single buffered']
    #allocation3 [shape = 's32[1]{0}', space=sflag, size = 0x4, scoped, tag = 'scoped memory for rnn_lm_forward.5']
    %8 = vsyncpa [#allocation3], 0
    // Predicated region
    $region2: #{rnn_lm_forward.5} parent=1 // pred_check
      _
    $region3: #{rnn_lm_forward.5} parent=1 // pred_check_branch
      %10 = sbr.rel (0) target = $region5
    $region4: #{rnn_lm_forward.5} parent=1 // pred_region
      _
    $region5: #{rnn_lm_forward.5} parent=1 // pred_fallthru
      _
    // Predicated region
    $region6: #{rnn_lm_forward.5} parent=1 // pred_check
      _
    $region7: #{rnn_lm_forward.5} parent=1 // pred_check_branch
      %12 = sbr.rel (0) target = $region9
    $region8: #{rnn_lm_forward.5} parent=1 // pred_region
      _
    $region9: #{rnn_lm_forward.5} parent=1 // pred_fallthru
      _
    // Predicated region
    $region10: #{rnn_lm_forward.5} parent=1 // pred_check
      _
    $region11: #{rnn_lm_forward.5} parent=1 // pred_check_branch
      %14 = sbr.rel (0) target = $region13
    $region12: #{rnn_lm_forward.5} parent=1 // pred_region
      _
    $region13: #{rnn_lm_forward.5} parent=1 // pred_fallthru
      _
    %v16 = vld [vmem:[%s0] sm:$0xff]
    %v17 = vld [vmem:[%s0 + $0x8] sm:$0xff]
    %v18 = vld [vmem:[%s0 + $0x10] sm:$0xff]
    %v19 = vld [vmem:[%s0 + $0x18] sm:$0xff]
    %v20 = vld [vmem:[%s0 + $0x20] sm:$0xff]
    %v21 = vld [vmem:[%s0 + $0x28] sm:$0xff]
    %v22 = vld [vmem:[%s0 + $0x30] sm:$0xff]
    %v23 = vld [vmem:[%s0 + $0x38] sm:$0xff]
    %v24 = vld [vmem:[%s0 + $0x40] sm:$0xff]
    %v25 = vld [vmem:[%s0 + $0x48] sm:$0xff]
    %v26 = vld [vmem:[%s0 + $0x50] sm:$0xff]
    %v27 = vld [vmem:[%s0 + $0x58] sm:$0xff]
    %v28 = vld [vmem:[%s0 + $0x60] sm:$0xff]
    %v29 = vld [vmem:[%s0 + $0x68] sm:$0xff]
    %v30 = vld [vmem:[%s0 + $0x70] sm:$0xff]
    %v31 = vld [vmem:[%s0 + $0x78] sm:$0xff]
    %v32 = vld [vmem:[%s0 + $0x80] sm:$0xff]
    %v33 = vld [vmem:[%s0 + $0x88] sm:$0xff]
    %v34 = vld [vmem:[%s0 + $0x90] sm:$0xff]
    %v35 = vld [vmem:[%s0 + $0x98] sm:$0xff]
    %v36 = vld [vmem:[%s0 + $0xa0] sm:$0xff]
    %v37 = vld [vmem:[%s0 + $0xa8] sm:$0xff]
    %v38 = vld [vmem:[%s0 + $0xb0] sm:$0xff]
    %v39 = vld [vmem:[%s0 + $0xb8] sm:$0xff]
    %v40 = vld [vmem:[%s0 + $0xc0] sm:$0xff]
    %v41 = vld [vmem:[%s0 + $0xc8] sm:$0xff]
    %v42 = vld [vmem:[%s0 + $0xd0] sm:$0xff]
    %v43 = vld [vmem:[%s0 + $0xd8] sm:$0xff]
    %v44 = vld [vmem:[%s0 + $0xe0] sm:$0xff]
    %v45 = vld [vmem:[%s0 + $0xe8] sm:$0xff]
    %v46 = vld [vmem:[%s0 + $0xf0] sm:$0xff]
    %v47 = vld [vmem:[%s0 + $0xf8] sm:$0xff]
    %v48 = vpack.c.bf16 %v17, %v16
    %v49 = vpack.c.bf16 %v19, %v18
    %v50 = vpack.c.bf16 %v21, %v20
    %v51 = vpack.c.bf16 %v23, %v22
    %v52 = vpack.c.bf16 %v25, %v24
    %v53 = vpack.c.bf16 %v27, %v26
    %v54 = vpack.c.bf16 %v29, %v28
    %v55 = vpack.c.bf16 %v31, %v30
    %v56 = vpack.c.bf16 %v33, %v32
    %v57 = vpack.c.bf16 %v35, %v34
    %v58 = vpack.c.bf16 %v37, %v36
    %v59 = vpack.c.bf16 %v39, %v38
    %v60 = vpack.c.bf16 %v41, %v40
    %v61 = vpack.c.bf16 %v43, %v42
    %v62 = vpack.c.bf16 %v45, %v44
    %v63 = vpack.c.bf16 %v47, %v46
    %v64 = vld [vmem:[%s1] sm:$0xff]
    %v65 = vld [vmem:[%s1 + $0x8] sm:$0xff]
    %v66 = vld [vmem:[%s1 + $0x10] sm:$0xff]
    %v67 = vld [vmem:[%s1 + $0x18] sm:$0xff]
    %v68 = vld [vmem:[%s1 + $0x20] sm:$0xff]
    %v69 = vld [vmem:[%s1 + $0x28] sm:$0xff]
    %v70 = vld [vmem:[%s1 + $0x30] sm:$0xff]
    %v71 = vld [vmem:[%s1 + $0x38] sm:$0xff]
    %v72 = vld [vmem:[%s1 + $0x40] sm:$0xff]
    %v73 = vld [vmem:[%s1 + $0x48] sm:$0xff]
    %v74 = vld [vmem:[%s1 + $0x50] sm:$0xff]
    %v75 = vld [vmem:[%s1 + $0x58] sm:$0xff]
    %v76 = vld [vmem:[%s1 + $0x60] sm:$0xff]
    %v77 = vld [vmem:[%s1 + $0x68] sm:$0xff]
    %v78 = vld [vmem:[%s1 + $0x70] sm:$0xff]
    %v79 = vld [vmem:[%s1 + $0x78] sm:$0xff]
    %v96 = vunpack.c.l.b16 %v64
    %v97 = vunpack.c.h.b16 %v64
    %v98 = vunpack.c.l.b16 %v65
    %v99 = vunpack.c.h.b16 %v65
    %v100 = vunpack.c.l.b16 %v66
    %v101 = vunpack.c.h.b16 %v66
    %v102 = vunpack.c.l.b16 %v67
    %v103 = vunpack.c.h.b16 %v67
    %v104 = vunpack.c.l.b16 %v68
    %v105 = vunpack.c.h.b16 %v68
    %v106 = vunpack.c.l.b16 %v69
    %v107 = vunpack.c.h.b16 %v69
    %v108 = vunpack.c.l.b16 %v70
    %v109 = vunpack.c.h.b16 %v70
    %v110 = vunpack.c.l.b16 %v71
    %v111 = vunpack.c.h.b16 %v71
    %v112 = vunpack.c.l.b16 %v72
    %v113 = vunpack.c.h.b16 %v72
    %v114 = vunpack.c.l.b16 %v73
    %v115 = vunpack.c.h.b16 %v73
    %v116 = vunpack.c.l.b16 %v74
    %v117 = vunpack.c.h.b16 %v74
    %v118 = vunpack.c.l.b16 %v75
    %v119 = vunpack.c.h.b16 %v75
    %v120 = vunpack.c.l.b16 %v76
    %v121 = vunpack.c.h.b16 %v76
    %v122 = vunpack.c.l.b16 %v77
    %v123 = vunpack.c.h.b16 %v77
    %v124 = vunpack.c.l.b16 %v78
    %v125 = vunpack.c.h.b16 %v78
    %v126 = vunpack.c.l.b16 %v79
    %v127 = vunpack.c.h.b16 %v79
    %v128 = vpack.c.b16 %v98, %v96
    %v129 = vpack.c.b16 %v99, %v97
    %v130 = vpack.c.b16 %v102, %v100
    %v131 = vpack.c.b16 %v103, %v101
    %v132 = vpack.c.b16 %v106, %v104
    %v133 = vpack.c.b16 %v107, %v105
    %v134 = vpack.c.b16 %v110, %v108
    %v135 = vpack.c.b16 %v111, %v109
    %v136 = vpack.c.b16 %v114, %v112
    %v137 = vpack.c.b16 %v115, %v113
    %v138 = vpack.c.b16 %v118, %v116
    %v139 = vpack.c.b16 %v119, %v117
    %v140 = vpack.c.b16 %v122, %v120
    %v141 = vpack.c.b16 %v123, %v121
    %v142 = vpack.c.b16 %v126, %v124
    %v143 = vpack.c.b16 %v127, %v125
    %160 = vmatprep.subr.bf16.mxu0 %v143
    %161 = vmatpush1.bf16.msra.mxu0 %v142
    %162 = vmatprep.subr.bf16.mxu0 %v141
    %163 = vmatpush1.bf16.msra.mxu0 %v140
    %164 = vmatprep.subr.bf16.mxu0 %v139
    %165 = vmatpush1.bf16.msra.mxu0 %v138
    %166 = vmatprep.subr.bf16.mxu0 %v137
    %167 = vmatpush1.bf16.msra.mxu0 %v136
    %168 = vmatprep.subr.bf16.mxu0 %v135
    %169 = vmatpush1.bf16.msra.mxu0 %v134
    %170 = vmatprep.subr.bf16.mxu0 %v133
    %171 = vmatpush1.bf16.msra.mxu0 %v132
    %172 = vmatprep.subr.bf16.mxu0 %v131
    %173 = vmatpush1.bf16.msra.mxu0 %v130
    %174 = vmatprep.subr.bf16.mxu0 %v129
    %175 = vmatpush1.bf16.msra.mxu0 %v128
    %176 = vmatprep.subr.bf16.mxu0 0
    %177 = vmatpush2.bf16.msra.mxu0 0
    %178 = vmatprep.subr.bf16.mxu0 0
    %179 = vmatpush2.bf16.msra.mxu0 0
    %180 = vmatprep.subr.bf16.mxu0 0
    %181 = vmatpush2.bf16.msra.mxu0 0
    %182 = vmatprep.subr.bf16.mxu0 0
    %183 = vmatpush2.bf16.msra.mxu0 0
    %184 = vmatprep.subr.bf16.mxu0 0
    %185 = vmatpush2.bf16.msra.mxu0 0
    %186 = vmatprep.subr.bf16.mxu0 0
    %187 = vmatpush2.bf16.msra.mxu0 0
    %188 = vmatprep.subr.bf16.mxu0 0
    %189 = vmatpush2.bf16.msra.mxu0 0
    %190 = vmatprep.subr.bf16.mxu0 0
    %191 = vmatpush2.bf16.msra.mxu0 0
    %192 = vmatprep.mubr.bf16.mxu0 0
    %193 = vmatmul.mubr.bf16.gmra.mxu0 %v48
    %v194 = vpop.f32.mrf.mxu0
    %v195 = vadd.f32 0.0, %v194
    %v196 = vpop.f32.mrf.mxu0
    %v197 = vadd.f32 0.0, %v196
    %v198 = vpop.f32.mrf.mxu0
    %v199 = vadd.f32 0.0, %v198
    %v200 = vpop.f32.mrf.mxu0
    %v201 = vadd.f32 0.0, %v200
    %202 = vmatprep.mubr.bf16.mxu0 0
    %203 = vmatmul.mubr.bf16.gmra.mxu0 %v49
    %v204 = vpop.f32.mrf.mxu0
    %v205 = vadd.f32 0.0, %v204
    %v206 = vpop.f32.mrf.mxu0
    %v207 = vadd.f32 0.0, %v206
    %v208 = vpop.f32.mrf.mxu0
    %v209 = vadd.f32 0.0, %v208
    %v210 = vpop.f32.mrf.mxu0
    %v211 = vadd.f32 0.0, %v210
    %212 = vmatprep.mubr.bf16.mxu0 0
    %213 = vmatmul.mubr.bf16.gmra.mxu0 %v50
    %v214 = vpop.f32.mrf.mxu0
    %v215 = vadd.f32 0.0, %v214
    %v216 = vpop.f32.mrf.mxu0
    %v217 = vadd.f32 0.0, %v216
    %v218 = vpop.f32.mrf.mxu0
    %v219 = vadd.f32 0.0, %v218
    %v220 = vpop.f32.mrf.mxu0
    %v221 = vadd.f32 0.0, %v220
    %222 = vmatprep.mubr.bf16.mxu0 0
    %223 = vmatmul.mubr.bf16.gmra.mxu0 %v51
    %v224 = vpop.f32.mrf.mxu0
    %v225 = vadd.f32 0.0, %v224
    %v226 = vpop.f32.mrf.mxu0
    %v227 = vadd.f32 0.0, %v226
    %v228 = vpop.f32.mrf.mxu0
    %v229 = vadd.f32 0.0, %v228
    %v230 = vpop.f32.mrf.mxu0
    %v231 = vadd.f32 0.0, %v230
    %232 = vmatprep.mubr.bf16.mxu0 0
    %233 = vmatmul.mubr.bf16.gmra.mxu0 %v52
    %v234 = vpop.f32.mrf.mxu0
    %v235 = vadd.f32 0.0, %v234
    %v236 = vpop.f32.mrf.mxu0
    %v237 = vadd.f32 0.0, %v236
    %v238 = vpop.f32.mrf.mxu0
    %v239 = vadd.f32 0.0, %v238
    %v240 = vpop.f32.mrf.mxu0
    %v241 = vadd.f32 0.0, %v240
    %242 = vmatprep.mubr.bf16.mxu0 0
    %243 = vmatmul.mubr.bf16.gmra.mxu0 %v53
    %v244 = vpop.f32.mrf.mxu0
    %v245 = vadd.f32 0.0, %v244
    %v246 = vpop.f32.mrf.mxu0
    %v247 = vadd.f32 0.0, %v246
    %v248 = vpop.f32.mrf.mxu0
    %v249 = vadd.f32 0.0, %v248
    %v250 = vpop.f32.mrf.mxu0
    %v251 = vadd.f32 0.0, %v250
    %252 = vmatprep.mubr.bf16.mxu0 0
    %253 = vmatmul.mubr.bf16.gmra.mxu0 %v54
    %v254 = vpop.f32.mrf.mxu0
    %v255 = vadd.f32 0.0, %v254
    %v256 = vpop.f32.mrf.mxu0
    %v257 = vadd.f32 0.0, %v256
    %v258 = vpop.f32.mrf.mxu0
    %v259 = vadd.f32 0.0, %v258
    %v260 = vpop.f32.mrf.mxu0
    %v261 = vadd.f32 0.0, %v260
    %262 = vmatprep.mubr.bf16.mxu0 0
    %263 = vmatmul.mubr.bf16.gmra.mxu0 %v55
    %v264 = vpop.f32.mrf.mxu0
    %v265 = vadd.f32 0.0, %v264
    %v266 = vpop.f32.mrf.mxu0
    %v267 = vadd.f32 0.0, %v266
    %v268 = vpop.f32.mrf.mxu0
    %v269 = vadd.f32 0.0, %v268
    %v270 = vpop.f32.mrf.mxu0
    %v271 = vadd.f32 0.0, %v270
    %272 = vmatprep.mubr.bf16.mxu0 0
    %273 = vmatmul.mubr.bf16.gmra.mxu0 %v56
    %v274 = vpop.f32.mrf.mxu0
    %v275 = vadd.f32 0.0, %v274
    %v276 = vpop.f32.mrf.mxu0
    %v277 = vadd.f32 0.0, %v276
    %v278 = vpop.f32.mrf.mxu0
    %v279 = vadd.f32 0.0, %v278
    %v280 = vpop.f32.mrf.mxu0
    %v281 = vadd.f32 0.0, %v280
    %282 = vmatprep.mubr.bf16.mxu0 0
    %283 = vmatmul.mubr.bf16.gmra.mxu0 %v57
    %v284 = vpop.f32.mrf.mxu0
    %v285 = vadd.f32 0.0, %v284
    %v286 = vpop.f32.mrf.mxu0
    %v287 = vadd.f32 0.0, %v286
    %v288 = vpop.f32.mrf.mxu0
    %v289 = vadd.f32 0.0, %v288
    %v290 = vpop.f32.mrf.mxu0
    %v291 = vadd.f32 0.0, %v290
    %292 = vmatprep.mubr.bf16.mxu0 0
    %293 = vmatmul.mubr.bf16.gmra.mxu0 %v58
    %v294 = vpop.f32.mrf.mxu0
    %v295 = vadd.f32 0.0, %v294
    %v296 = vpop.f32.mrf.mxu0
    %v297 = vadd.f32 0.0, %v296
    %v298 = vpop.f32.mrf.mxu0
    %v299 = vadd.f32 0.0, %v298
    %v300 = vpop.f32.mrf.mxu0
    %v301 = vadd.f32 0.0, %v300
    %302 = vmatprep.mubr.bf16.mxu0 0
    %303 = vmatmul.mubr.bf16.gmra.mxu0 %v59
    %v304 = vpop.f32.mrf.mxu0
    %v305 = vadd.f32 0.0, %v304
    %v306 = vpop.f32.mrf.mxu0
    %v307 = vadd.f32 0.0, %v306
    %v308 = vpop.f32.mrf.mxu0
    %v309 = vadd.f32 0.0, %v308
    %v310 = vpop.f32.mrf.mxu0
    %v311 = vadd.f32 0.0, %v310
    %312 = vmatprep.mubr.bf16.mxu0 0
    %313 = vmatmul.mubr.bf16.gmra.mxu0 %v60
    %v314 = vpop.f32.mrf.mxu0
    %v315 = vadd.f32 0.0, %v314
    %v316 = vpop.f32.mrf.mxu0
    %v317 = vadd.f32 0.0, %v316
    %v318 = vpop.f32.mrf.mxu0
    %v319 = vadd.f32 0.0, %v318
    %v320 = vpop.f32.mrf.mxu0
    %v321 = vadd.f32 0.0, %v320
    %322 = vmatprep.mubr.bf16.mxu0 0
    %323 = vmatmul.mubr.bf16.gmra.mxu0 %v61
    %v324 = vpop.f32.mrf.mxu0
    %v325 = vadd.f32 0.0, %v324
    %v326 = vpop.f32.mrf.mxu0
    %v327 = vadd.f32 0.0, %v326
    %v328 = vpop.f32.mrf.mxu0
    %v329 = vadd.f32 0.0, %v328
    %v330 = vpop.f32.mrf.mxu0
    %v331 = vadd.f32 0.0, %v330
    %332 = vmatprep.mubr.bf16.mxu0 0
    %333 = vmatmul.mubr.bf16.gmra.mxu0 %v62
    %v334 = vpop.f32.mrf.mxu0
    %v335 = vadd.f32 0.0, %v334
    %v336 = vpop.f32.mrf.mxu0
    %v337 = vadd.f32 0.0, %v336
    %v338 = vpop.f32.mrf.mxu0
    %v339 = vadd.f32 0.0, %v338
    %v340 = vpop.f32.mrf.mxu0
    %v341 = vadd.f32 0.0, %v340
    %342 = vmatprep.mubr.bf16.mxu0 0
    %343 = vmatmul.mubr.bf16.gmra.mxu0 %v63
    %v344 = vpop.f32.mrf.mxu0
    %v345 = vadd.f32 0.0, %v344
    %v346 = vpop.f32.mrf.mxu0
    %v347 = vadd.f32 0.0, %v346
    %v348 = vpop.f32.mrf.mxu0
    %v349 = vadd.f32 0.0, %v348
    %v350 = vpop.f32.mrf.mxu0
    %v351 = vadd.f32 0.0, %v350
    %352 = vdwg.mxu0
    %v353 = vld [vmem:[%s2] sm:$0xff]
    %v354 = vld [vmem:[%s2 + $0x8] sm:$0xff]
    %v355 = vld [vmem:[%s2 + $0x10] sm:$0xff]
    %v356 = vld [vmem:[%s2 + $0x18] sm:$0xff]
    %v357 = vadd.f32 %v195, %v353
    %v358 = vadd.f32 %v197, %v354
    %v359 = vadd.f32 %v199, %v355
    %v360 = vadd.f32 %v201, %v356
    %v361 = vadd.f32 %v205, %v353
    %v362 = vadd.f32 %v207, %v354
    %v363 = vadd.f32 %v209, %v355
    %v364 = vadd.f32 %v211, %v356
    %v365 = vadd.f32 %v215, %v353
    %v366 = vadd.f32 %v217, %v354
    %v367 = vadd.f32 %v219, %v355
    %v368 = vadd.f32 %v221, %v356
    %v369 = vadd.f32 %v225, %v353
    %v370 = vadd.f32 %v227, %v354
    %v371 = vadd.f32 %v229, %v355
    %v372 = vadd.f32 %v231, %v356
    %v373 = vadd.f32 %v235, %v353
    %v374 = vadd.f32 %v237, %v354
    %v375 = vadd.f32 %v239, %v355
    %v376 = vadd.f32 %v241, %v356
    %v377 = vadd.f32 %v245, %v353
    %v378 = vadd.f32 %v247, %v354
    %v379 = vadd.f32 %v249, %v355
    %v380 = vadd.f32 %v251, %v356
    %v381 = vadd.f32 %v255, %v353
    %v382 = vadd.f32 %v257, %v354
    %v383 = vadd.f32 %v259, %v355
    %v384 = vadd.f32 %v261, %v356
    %v385 = vadd.f32 %v265, %v353
    %v386 = vadd.f32 %v267, %v354
    %v387 = vadd.f32 %v269, %v355
    %v388 = vadd.f32 %v271, %v356
    %v389 = vadd.f32 %v275, %v353
    %v390 = vadd.f32 %v277, %v354
    %v391 = vadd.f32 %v279, %v355
    %v392 = vadd.f32 %v281, %v356
    %v393 = vadd.f32 %v285, %v353
    %v394 = vadd.f32 %v287, %v354
    %v395 = vadd.f32 %v289, %v355
    %v396 = vadd.f32 %v291, %v356
    %v397 = vadd.f32 %v295, %v353
    %v398 = vadd.f32 %v297, %v354
    %v399 = vadd.f32 %v299, %v355
    %v400 = vadd.f32 %v301, %v356
    %v401 = vadd.f32 %v305, %v353
    %v402 = vadd.f32 %v307, %v354
    %v403 = vadd.f32 %v309, %v355
    %v404 = vadd.f32 %v311, %v356
    %v405 = vadd.f32 %v315, %v353
    %v406 = vadd.f32 %v317, %v354
    %v407 = vadd.f32 %v319, %v355
    %v408 = vadd.f32 %v321, %v356
    %v409 = vadd.f32 %v325, %v353
    %v410 = vadd.f32 %v327, %v354
    %v411 = vadd.f32 %v329, %v355
    %v412 = vadd.f32 %v331, %v356
    %v413 = vadd.f32 %v335, %v353
    %v414 = vadd.f32 %v337, %v354
    %v415 = vadd.f32 %v339, %v355
    %v416 = vadd.f32 %v341, %v356
    %v417 = vadd.f32 %v345, %v353
    %v418 = vadd.f32 %v347, %v354
    %v419 = vadd.f32 %v349, %v355
    %v420 = vadd.f32 %v351, %v356
    %421 = vst [vmem:[#allocation2] sm:$0xff] %v357
    %422 = vst [vmem:[#allocation2 + $0x8] sm:$0xff] %v358
    %423 = vst [vmem:[#allocation2 + $0x10] sm:$0xff] %v359
    %424 = vst [vmem:[#allocation2 + $0x18] sm:$0xff] %v360
    %425 = vst [vmem:[#allocation2 + $0x20] sm:$0xff] %v361
    %426 = vst [vmem:[#allocation2 + $0x28] sm:$0xff] %v362
    %427 = vst [vmem:[#allocation2 + $0x30] sm:$0xff] %v363
    %428 = vst [vmem:[#allocation2 + $0x38] sm:$0xff] %v364
    %429 = vst [vmem:[#allocation2 + $0x40] sm:$0xff] %v365
    %430 = vst [vmem:[#allocation2 + $0x48] sm:$0xff] %v366
    %431 = vst [vmem:[#allocation2 + $0x50] sm:$0xff] %v367
    %432 = vst [vmem:[#allocation2 + $0x58] sm:$0xff] %v368
    %433 = vst [vmem:[#allocation2 + $0x60] sm:$0xff] %v369
    %434 = vst [vmem:[#allocation2 + $0x68] sm:$0xff] %v370
    %435 = vst [vmem:[#allocation2 + $0x70] sm:$0xff] %v371
    %436 = vst [vmem:[#allocation2 + $0x78] sm:$0xff] %v372
    %437 = vst [vmem:[#allocation2 + $0x80] sm:$0xff] %v373
    %438 = vst [vmem:[#allocation2 + $0x88] sm:$0xff] %v374
    %439 = vst [vmem:[#allocation2 + $0x90] sm:$0xff] %v375
    %440 = vst [vmem:[#allocation2 + $0x98] sm:$0xff] %v376
    %441 = vst [vmem:[#allocation2 + $0xa0] sm:$0xff] %v377
    %442 = vst [vmem:[#allocation2 + $0xa8] sm:$0xff] %v378
    %443 = vst [vmem:[#allocation2 + $0xb0] sm:$0xff] %v379
    %444 = vst [vmem:[#allocation2 + $0xb8] sm:$0xff] %v380
    %445 = vst [vmem:[#allocation2 + $0xc0] sm:$0xff] %v381
    %446 = vst [vmem:[#allocation2 + $0xc8] sm:$0xff] %v382
    %447 = vst [vmem:[#allocation2 + $0xd0] sm:$0xff] %v383
    %448 = vst [vmem:[#allocation2 + $0xd8] sm:$0xff] %v384
    %449 = vst [vmem:[#allocation2 + $0xe0] sm:$0xff] %v385
    %450 = vst [vmem:[#allocation2 + $0xe8] sm:$0xff] %v386
    %451 = vst [vmem:[#allocation2 + $0xf0] sm:$0xff] %v387
    %452 = vst [vmem:[#allocation2 + $0xf8] sm:$0xff] %v388
    %453 = vst [vmem:[#allocation2 + $0x100] sm:$0xff] %v389
    %454 = vst [vmem:[#allocation2 + $0x108] sm:$0xff] %v390
    %455 = vst [vmem:[#allocation2 + $0x110] sm:$0xff] %v391
    %456 = vst [vmem:[#allocation2 + $0x118] sm:$0xff] %v392
    %457 = vst [vmem:[#allocation2 + $0x120] sm:$0xff] %v393
    %458 = vst [vmem:[#allocation2 + $0x128] sm:$0xff] %v394
    %459 = vst [vmem:[#allocation2 + $0x130] sm:$0xff] %v395
    %460 = vst [vmem:[#allocation2 + $0x138] sm:$0xff] %v396
    %461 = vst [vmem:[#allocation2 + $0x140] sm:$0xff] %v397
    %462 = vst [vmem:[#allocation2 + $0x148] sm:$0xff] %v398
    %463 = vst [vmem:[#allocation2 + $0x150] sm:$0xff] %v399
    %464 = vst [vmem:[#allocation2 + $0x158] sm:$0xff] %v400
    %465 = vst [vmem:[#allocation2 + $0x160] sm:$0xff] %v401
    %466 = vst [vmem:[#allocation2 + $0x168] sm:$0xff] %v402
    %467 = vst [vmem:[#allocation2 + $0x170] sm:$0xff] %v403
    %468 = vst [vmem:[#allocation2 + $0x178] sm:$0xff] %v404
    %469 = vst [vmem:[#allocation2 + $0x180] sm:$0xff] %v405
    %470 = vst [vmem:[#allocation2 + $0x188] sm:$0xff] %v406
    %471 = vst [vmem:[#allocation2 + $0x190] sm:$0xff] %v407
    %472 = vst [vmem:[#allocation2 + $0x198] sm:$0xff] %v408
    %473 = vst [vmem:[#allocation2 + $0x1a0] sm:$0xff] %v409
    %474 = vst [vmem:[#allocation2 + $0x1a8] sm:$0xff] %v410
    %475 = vst [vmem:[#allocation2 + $0x1b0] sm:$0xff] %v411
    %476 = vst [vmem:[#allocation2 + $0x1b8] sm:$0xff] %v412
    %477 = vst [vmem:[#allocation2 + $0x1c0] sm:$0xff] %v413
    %478 = vst [vmem:[#allocation2 + $0x1c8] sm:$0xff] %v414
    %479 = vst [vmem:[#allocation2 + $0x1d0] sm:$0xff] %v415
    %480 = vst [vmem:[#allocation2 + $0x1d8] sm:$0xff] %v416
    %481 = vst [vmem:[#allocation2 + $0x1e0] sm:$0xff] %v417
    %482 = vst [vmem:[#allocation2 + $0x1e8] sm:$0xff] %v418
    %483 = vst [vmem:[#allocation2 + $0x1f0] sm:$0xff] %v419
    %484 = vst [vmem:[#allocation2 + $0x1f8] sm:$0xff] %v420
    // Predicated region
    $region14: #{rnn_lm_forward.5} parent=1 // pred_check
      _
    $region15: #{rnn_lm_forward.5} parent=1 // pred_check_branch
      %486 = sbr.rel (0) target = $region17
    $region16: #{rnn_lm_forward.5} parent=1 // pred_region
      %s488 = ssub.s32 8192, 8192
      %489 = vsyncadd [#allocation3], %s488
      %s490 = sshll.u32 [#allocation2], 4
      %s491 = int_to_ptr.vmem [resolvable:$true] %s490
      %496 = dma.vmem_to_hbm [thread:$0]  %s491, 8192, %s3, [#allocation3], 256, 256, 16
    $region17: #{rnn_lm_forward.5} parent=1 // pred_fallthru
      _
    // Predicated region
    $region18: #{rnn_lm_forward.5} parent=1 // pred_check
      _
    $region19: #{rnn_lm_forward.5} parent=1 // pred_check_branch
      %498 = sbr.rel (0) target = $region21
    $region20: #{rnn_lm_forward.5} parent=1 // pred_region
      %499 = dma.done [#allocation3], 8192
    $region21: #{rnn_lm_forward.5} parent=1 // pred_fallthru
      _
    %500 = vsyncpa [#allocation3], 1

// kernel: rnn_lm_forward.4
$region0: #{rnn_lm_forward.4}
  #allocation0 [shape = 'u32[]', space=smem, size = 0x4, offset = 0x4, fixed_abs, tag = 'smem constant byte address 0x4 - core index']
  #allocation1 [shape = 'u32[144,128]{1,0:T(1,128)}', space=vmem, size = 0x12000, scoped, tag = 'internal scratch']
  #allocation2 [shape = 'f32[8,128]{1,0:T(8,128)}', space=vmem, size = 0x1000, scoped, tag = 'scratch operand']
  #allocation3 [shape = 'f32[8,128]{1,0:T(8,128)}', space=vmem, size = 0x1000, scoped, tag = 'scratch operand']
  %s0 = inlined_call_operand.vmem [shape: f32[16,16,512], index: 0, kind: input, shape index: {}]
  %s1 = inlined_call_operand.vmem [shape: bf16[128,512], index: 1, kind: input, shape index: {}]
  %s2 = inlined_call_operand.vmem [shape: f32[16,16,128], index: 2, kind: output, shape index: {}]
  %s3 = sld [smem:[#allocation0]]
  $region102: #{rnn_lm_forward.4} parent=0
    _
  %s5 = ssub.s32 1, %s3
  %s6 = scalar_select 0, %s5, %s3
  $region1: #{rnn_lm_forward.4} parent=0
    #allocation4 [shape = 'u8[262144]{0}', space=vmem, size = 0x40000, scoped, tag = 'input window, operand 0']
    #allocation5 [shape = 'u8[65536]{0}', space=vmem, size = 0x10000, scoped, tag = 'output window, operand 0']
    loop: start=0, step=1, limit=6
    $region2: #{rnn_lm_forward.4} parent=1 // loop_pre_header
      _
    $region3: #{rnn_lm_forward.4} parent=1 // loop_header
      %s8 = sphi 0, %s12
      %p9 = scmp.ge.s32.totalorder %s8, 6
      %s15 = sphi 0, %s27
      %s16 = sphi 0, %s23
      %s17 = sphi 0, %s15
      %s18 = sphi 0, %s16
      %s19 = sphi 0, %s17
      %s20 = sphi 0, %s18
      %s32 = sphi 0, %s34
      %s35 = sphi 0, %s32
      %s36 = sphi 0, %s35
      %s52 = sphi 0, %s36
      %s56 = sphi 0, %s56
      %s58 = sphi 0, %s56
      %s59 = sphi 0, %s58
      %s73 = sphi 0, %s59
      %s81 = sphi 0, %s83
      %s84 = sphi 0, %s81
      %s85 = sphi 0, %s84
      %s101 = sphi 0, %s85
    $region4: #{rnn_lm_forward.4} parent=1 // loop_header_branch
      %11 = sbr.rel (%p9) target = $region8
    $region5: #{rnn_lm_forward.4} parent=1 // loop_body
      %s13 = ssub.s32 %s8, 1
      %s14 = ssub.s32 %s8, 2
      %s21 = sadd.s32 1, %s16
      %p22 = scmp.ge.s32.totalorder %s21, 2
      %s23 = scalar_select %p22, 0, %s21
      %s24 = sadd.s32 1, %s15
      %s25 = scalar_select %p22, %s24, %s15
      %p26 = scmp.ge.s32.totalorder %s25, 2
      %s27 = scalar_select %p26, 0, %s25
      %s28 = ssub.s32 %s16, %s23
      %s29 = ssub.s32 %s15, %s27
      %s30 = sor.u32 %s28, %s29
      %p31 = scmp.eq.s32.totalorder %s30, 0
      %s33 = sadd.s32 %s32, 1
      %s34 = scalar_select %p31, %s32, %s33
      %p37 = pneg %p31
      %p38 = scmp.eq.s32.totalorder %s8, 3
      %p39 = por %p37, %p38
      %p40 = scmp.ne.s32.totalorder %s32, %s35
      %p41 = scmp.eq.s32.totalorder %s8, 0
      %p42 = por %p40, %p41
      %p43 = scmp.ne.s32.totalorder %s32, %s35
      %p44 = scmp.eq.s32.totalorder %s13, 3
      %p45 = por %p43, %p44
      %p46 = scmp.ne.s32.totalorder %s35, %s36
      %p47 = scmp.eq.s32.totalorder %s13, 0
      %p48 = por %p46, %p47
      %p49 = scmp.ne.s32.totalorder %s35, %s36
      %p50 = scmp.eq.s32.totalorder %s14, 3
      %p51 = por %p49, %p50
      %p53 = scmp.ne.s32.totalorder %s36, %s52
      %p54 = scmp.eq.s32.totalorder %s14, 0
      %p55 = por %p53, %p54
      %s57 = sadd.s32 %s56, 1
      %p60 = scmp.eq.s32.totalorder %s8, 3
      %p61 = scmp.ne.s32.totalorder %s56, %s58
      %p62 = scmp.eq.s32.totalorder %s8, 0
      %p63 = por %p61, %p62
      %p64 = scmp.ne.s32.totalorder %s56, %s58
      %p65 = scmp.eq.s32.totalorder %s13, 3
      %p66 = por %p64, %p65
      %p67 = scmp.ne.s32.totalorder %s58, %s59
      %p68 = scmp.eq.s32.totalorder %s13, 0
      %p69 = por %p67, %p68
      %p70 = scmp.ne.s32.totalorder %s58, %s59
      %p71 = scmp.eq.s32.totalorder %s14, 3
      %p72 = por %p70, %p71
      %p74 = scmp.ne.s32.totalorder %s59, %s73
      %p75 = scmp.eq.s32.totalorder %s14, 0
      %p76 = por %p74, %p75
      %s77 = ssub.s32 %s16, %s23
      %s78 = ssub.s32 %s15, %s27
      %s79 = sor.u32 %s77, %s78
      %p80 = scmp.eq.s32.totalorder %s79, 0
      %s82 = sadd.s32 %s81, 1
      %s83 = scalar_select %p80, %s81, %s82
      %p86 = pneg %p80
      %p87 = scmp.eq.s32.totalorder %s8, 3
      %p88 = por %p86, %p87
      %p89 = scmp.ne.s32.totalorder %s81, %s84
      %p90 = scmp.eq.s32.totalorder %s8, 0
      %p91 = por %p89, %p90
      %p92 = scmp.ne.s32.totalorder %s81, %s84
      %p93 = scmp.eq.s32.totalorder %s13, 3
      %p94 = por %p92, %p93
      %p95 = scmp.ne.s32.totalorder %s84, %s85
      %p96 = scmp.eq.s32.totalorder %s13, 0
      %p97 = por %p95, %p96
      %p98 = scmp.ne.s32.totalorder %s84, %s85
      %p99 = scmp.eq.s32.totalorder %s14, 3
      %p100 = por %p98, %p99
      %p102 = scmp.ne.s32.totalorder %s85, %s101
      %p103 = scmp.eq.s32.totalorder %s14, 0
      %p104 = por %p102, %p103
      %p105 = scmp.le.s32.totalorder 1, %s8
      %p106 = scmp.lt.s32.totalorder %s8, 5
      %p107 = pnand %p105, %p106
      %p108 = pneg %p107
      // Predicated region
      $region9: #{rnn_lm_forward.4} parent=5 // pred_check
        _
      $region10: #{rnn_lm_forward.4} parent=5 // pred_check_branch
        %110 = sbr.rel (%p107) target = $region12
      $region11: #{rnn_lm_forward.4} parent=5 // pred_region
        %s111 = ssub.s32 %s8, 1
        // Predicated region
        $region13: #{rnn_lm_forward.4} parent=11 // pred_check
          %p112 = pneg %p69
        $region14: #{rnn_lm_forward.4} parent=11 // pred_check_branch
          %114 = sbr.rel (%p112) target = $region16
        $region15: #{rnn_lm_forward.4} parent=11 // pred_region
          _
        $region16: #{rnn_lm_forward.4} parent=11 // pred_fallthru
          _
      $region12: #{rnn_lm_forward.4} parent=5 // pred_fallthru
        _
      %p115 = scmp.lt.s32.totalorder %s8, 4
      // Predicated region
      $region17: #{rnn_lm_forward.4} parent=5 // pred_check
        %p116 = pneg %p115
      $region18: #{rnn_lm_forward.4} parent=5 // pred_check_branch
        %118 = sbr.rel (%p116) target = $region20
      $region19: #{rnn_lm_forward.4} parent=5 // pred_region
        // Predicated region
        $region21: #{rnn_lm_forward.4} parent=19 // pred_check
          %p119 = pneg %p42
        $region22: #{rnn_lm_forward.4} parent=19 // pred_check_branch
          %121 = sbr.rel (%p119) target = $region24
        $region23: #{rnn_lm_forward.4} parent=19 // pred_region
          %s122 = sand.u32 %s32, 1
          %s123 = sand.u32 %s32, 1
          %s124 = smul.addr %s123, 256
          %s125 = scalar_lea.vmem [#allocation4], %s124
          %s126 = smul.u32 8, %s16
          %s127 = smul.addr %s15, 4
          %s128 = smul.addr %s126, 8
          %s129 = sadd.s32 %s127, %s128
          %s130 = smul.addr %s129, 8
          %s131 = scalar_lea.vmem %s0, %s130
          // Predicated region
          $region25: #{rnn_lm_forward.4} parent=23 // pred_check
            _
          $region26: #{rnn_lm_forward.4} parent=23 // pred_check_branch
            %133 = sbr.rel (0) target = $region28
          $region27: #{rnn_lm_forward.4} parent=23 // pred_region
            // Predicated region
            $region29: #{rnn_lm_forward.4} parent=27 // pred_check
              _
            $region30: #{rnn_lm_forward.4} parent=27 // pred_check_branch
              %135 = sbr.rel (0) target = $region32
            $region31: #{rnn_lm_forward.4} parent=27 // pred_region
              loop: start=0, step=1, limit=1
              $region33: #{rnn_lm_forward.4} parent=31 // loop_pre_header
                _
              $region34: #{rnn_lm_forward.4} parent=31 // loop_header
                %s137 = sphi 0, %s141
                %p138 = scmp.ge.s32.totalorder %s137, 1
                %s142 = sphi %s131, %s131
                %s143 = sphi %s125, %s125
              $region35: #{rnn_lm_forward.4} parent=31 // loop_header_branch
                %140 = sbr.rel (%p138) target = $region39
              $region36: #{rnn_lm_forward.4} parent=31 // loop_body
                %v144 = vld [vmem:[%s142] sm:$0xff]
                %145 = vst [vmem:[%s143] sm:$0xff] %v144
                %v146 = vld [vmem:[%s142 + $0x8] sm:$0xff]
                %147 = vst [vmem:[%s143 + $0x8] sm:$0xff] %v146
                %v148 = vld [vmem:[%s142 + $0x10] sm:$0xff]
                %149 = vst [vmem:[%s143 + $0x10] sm:$0xff] %v148
                %v150 = vld [vmem:[%s142 + $0x18] sm:$0xff]
                %151 = vst [vmem:[%s143 + $0x18] sm:$0xff] %v150
                %v152 = vld [vmem:[%s142 + $0x40] sm:$0xff]
                %153 = vst [vmem:[%s143 + $0x20] sm:$0xff] %v152
                %v154 = vld [vmem:[%s142 + $0x48] sm:$0xff]
                %155 = vst [vmem:[%s143 + $0x28] sm:$0xff] %v154
                %v156 = vld [vmem:[%s142 + $0x50] sm:$0xff]
                %157 = vst [vmem:[%s143 + $0x30] sm:$0xff] %v156
                %v158 = vld [vmem:[%s142 + $0x58] sm:$0xff]
                %159 = vst [vmem:[%s143 + $0x38] sm:$0xff] %v158
                %v160 = vld [vmem:[%s142 + $0x80] sm:$0xff]
                %161 = vst [vmem:[%s143 + $0x40] sm:$0xff] %v160
                %v162 = vld [vmem:[%s142 + $0x88] sm:$0xff]
                %163 = vst [vmem:[%s143 + $0x48] sm:$0xff] %v162
                %v164 = vld [vmem:[%s142 + $0x90] sm:$0xff]
                %165 = vst [vmem:[%s143 + $0x50] sm:$0xff] %v164
                %v166 = vld [vmem:[%s142 + $0x98] sm:$0xff]
                %167 = vst [vmem:[%s143 + $0x58] sm:$0xff] %v166
                %v168 = vld [vmem:[%s142 + $0xc0] sm:$0xff]
                %169 = vst [vmem:[%s143 + $0x60] sm:$0xff] %v168
                %v170 = vld [vmem:[%s142 + $0xc8] sm:$0xff]
                %171 = vst [vmem:[%s143 + $0x68] sm:$0xff] %v170
                %v172 = vld [vmem:[%s142 + $0xd0] sm:$0xff]
                %173 = vst [vmem:[%s143 + $0x70] sm:$0xff] %v172
                %v174 = vld [vmem:[%s142 + $0xd8] sm:$0xff]
                %175 = vst [vmem:[%s143 + $0x78] sm:$0xff] %v174
                %v176 = vld [vmem:[%s142 + $0x100] sm:$0xff]
                %177 = vst [vmem:[%s143 + $0x80] sm:$0xff] %v176
                %v178 = vld [vmem:[%s142 + $0x108] sm:$0xff]
                %179 = vst [vmem:[%s143 + $0x88] sm:$0xff] %v178
                %v180 = vld [vmem:[%s142 + $0x110] sm:$0xff]
                %181 = vst [vmem:[%s143 + $0x90] sm:$0xff] %v180
                %v182 = vld [vmem:[%s142 + $0x118] sm:$0xff]
                %183 = vst [vmem:[%s143 + $0x98] sm:$0xff] %v182
                %v184 = vld [vmem:[%s142 + $0x140] sm:$0xff]
                %185 = vst [vmem:[%s143 + $0xa0] sm:$0xff] %v184
                %v186 = vld [vmem:[%s142 + $0x148] sm:$0xff]
                %187 = vst [vmem:[%s143 + $0xa8] sm:$0xff] %v186
                %v188 = vld [vmem:[%s142 + $0x150] sm:$0xff]
                %189 = vst [vmem:[%s143 + $0xb0] sm:$0xff] %v188
                %v190 = vld [vmem:[%s142 + $0x158] sm:$0xff]
                %191 = vst [vmem:[%s143 + $0xb8] sm:$0xff] %v190
                %v192 = vld [vmem:[%s142 + $0x180] sm:$0xff]
                %193 = vst [vmem:[%s143 + $0xc0] sm:$0xff] %v192
                %v194 = vld [vmem:[%s142 + $0x188] sm:$0xff]
                %195 = vst [vmem:[%s143 + $0xc8] sm:$0xff] %v194
                %v196 = vld [vmem:[%s142 + $0x190] sm:$0xff]
                %197 = vst [vmem:[%s143 + $0xd0] sm:$0xff] %v196
                %v198 = vld [vmem:[%s142 + $0x198] sm:$0xff]
                %199 = vst [vmem:[%s143 + $0xd8] sm:$0xff] %v198
                %v200 = vld [vmem:[%s142 + $0x1c0] sm:$0xff]
                %201 = vst [vmem:[%s143 + $0xe0] sm:$0xff] %v200
                %v202 = vld [vmem:[%s142 + $0x1c8] sm:$0xff]
                %203 = vst [vmem:[%s143 + $0xe8] sm:$0xff] %v202
                %v204 = vld [vmem:[%s142 + $0x1d0] sm:$0xff]
                %205 = vst [vmem:[%s143 + $0xf0] sm:$0xff] %v204
                %v206 = vld [vmem:[%s142 + $0x1d8] sm:$0xff]
                %207 = vst [vmem:[%s143 + $0xf8] sm:$0xff] %v206
              $region37: #{rnn_lm_forward.4} parent=31 // loop_footer
                %s141 = sadd.s32 1, %s137
              $region38: #{rnn_lm_forward.4} parent=31 // loop_footer_branch
                %136 = sbr.rel target = $region34
              $region39: #{rnn_lm_forward.4} parent=31 // loop_exit
                _
            $region32: #{rnn_lm_forward.4} parent=27 // pred_fallthru
              _
            // Predicated region
            $region40: #{rnn_lm_forward.4} parent=27 // pred_check
              _
            $region41: #{rnn_lm_forward.4} parent=27 // pred_check_branch
              %209 = sbr.rel target = $region43
            $region42: #{rnn_lm_forward.4} parent=27 // pred_region
              _
            $region43: #{rnn_lm_forward.4} parent=27 // pred_fallthru
              _
          $region28: #{rnn_lm_forward.4} parent=23 // pred_fallthru
            _
          %210 = vnop
        $region24: #{rnn_lm_forward.4} parent=19 // pred_fallthru
          _
      $region20: #{rnn_lm_forward.4} parent=5 // pred_fallthru
        _
      %p211 = scmp.le.s32.totalorder 1, %s8
      %p212 = scmp.lt.s32.totalorder %s8, 5
      %p213 = pnand %p211, %p212
      %p214 = pneg %p213
      // Predicated region
      $region44: #{rnn_lm_forward.4} parent=5 // pred_check
        _
      $region45: #{rnn_lm_forward.4} parent=5 // pred_check_branch
        %216 = sbr.rel (%p213) target = $region47
      $region46: #{rnn_lm_forward.4} parent=5 // pred_region
        %s217 = ssub.s32 %s8, 1
        %s218 = sand.u32 %s35, 1
        %s219 = sand.u32 %s35, 1
        %s220 = smul.addr %s219, 256
        %s221 = scalar_lea.vmem [#allocation4], %s220
        // Predicated region
        $region48: #{rnn_lm_forward.4} parent=46 // pred_check
          %p222 = pneg %p48
        $region49: #{rnn_lm_forward.4} parent=46 // pred_check_branch
          %224 = sbr.rel (%p222) target = $region51
        $region50: #{rnn_lm_forward.4} parent=46 // pred_region
          _
        $region51: #{rnn_lm_forward.4} parent=46 // pred_fallthru
          _
        %s225 = sand.u32 %s35, 1
        %s226 = sand.u32 %s35, 1
        %s227 = smul.addr %s226, 256
        %s228 = scalar_lea.vmem [#allocation4], %s227
        %p229 = pneg %p48
        %p230 = pneg %p45
        %p231 = pneg %p69
        %p232 = pneg %p66
        %p233 = pneg %p97
        %p234 = pneg %p94
        %s235 = sand.u32 %s84, 1
        %s236 = sand.u32 %s84, 1
        %s237 = smul.addr %s236, 64
        %s238 = scalar_lea.vmem [#allocation5], %s237
        %s239 = smul.u32 8, %s18
        %s240 = smul.u32 8, %s18
        %p242 = scmp.eq.s32.totalorder %s18, 0
        // Predicated region
        $region52: #{rnn_lm_forward.4} parent=46 // pred_check
          %p243 = pneg %p242
        $region53: #{rnn_lm_forward.4} parent=46 // pred_check_branch
          %245 = sbr.rel (%p243) target = $region55
        $region54: #{rnn_lm_forward.4} parent=46 // pred_region
          %246 = vst [vmem:[#allocation2] sm:$0xff] 0.0
          %247 = vst [vmem:[#allocation3] sm:$0xff] 0.0
        $region55: #{rnn_lm_forward.4} parent=46 // pred_fallthru
          _
        %v248 = vld [vmem:[%s221] sm:$0xff]
        %v249 = vld [vmem:[%s221 + $0x8] sm:$0xff]
        %v250 = vld [vmem:[%s221 + $0x10] sm:$0xff]
        %v251 = vld [vmem:[%s221 + $0x18] sm:$0xff]
        %v252 = vld [vmem:[#allocation2] sm:$0xff]
        %v253 = vpack.c.bf16 %v252, %v252
        %v254 = vld [vmem:[%s1] sm:$0xff]
        %v255 = vld [vmem:[%s1 + $0x8] sm:$0xff]
        %v256 = vld [vmem:[%s1 + $0x10] sm:$0xff]
        %v257 = vld [vmem:[%s1 + $0x18] sm:$0xff]
        %v258 = vld [vmem:[%s1 + $0x20] sm:$0xff]
        %v259 = vld [vmem:[%s1 + $0x28] sm:$0xff]
        %v260 = vld [vmem:[%s1 + $0x30] sm:$0xff]
        %v261 = vld [vmem:[%s1 + $0x38] sm:$0xff]
        %v262 = vld [vmem:[%s1 + $0x40] sm:$0xff]
        %v263 = vld [vmem:[%s1 + $0x48] sm:$0xff]
        %v264 = vld [vmem:[%s1 + $0x50] sm:$0xff]
        %v265 = vld [vmem:[%s1 + $0x58] sm:$0xff]
        %v266 = vld [vmem:[%s1 + $0x60] sm:$0xff]
        %v267 = vld [vmem:[%s1 + $0x68] sm:$0xff]
        %v268 = vld [vmem:[%s1 + $0x70] sm:$0xff]
        %v269 = vld [vmem:[%s1 + $0x78] sm:$0xff]
        %v270 = vld [vmem:[%s1 + $0x80] sm:$0xff]
        %v271 = vld [vmem:[%s1 + $0x88] sm:$0xff]
        %v272 = vld [vmem:[%s1 + $0x90] sm:$0xff]
        %v273 = vld [vmem:[%s1 + $0x98] sm:$0xff]
        %v274 = vld [vmem:[%s1 + $0xa0] sm:$0xff]
        %v275 = vld [vmem:[%s1 + $0xa8] sm:$0xff]
        %v276 = vld [vmem:[%s1 + $0xb0] sm:$0xff]
        %v277 = vld [vmem:[%s1 + $0xb8] sm:$0xff]
        %v278 = vld [vmem:[%s1 + $0xc0] sm:$0xff]
        %v279 = vld [vmem:[%s1 + $0xc8] sm:$0xff]
        %v280 = vld [vmem:[%s1 + $0xd0] sm:$0xff]
        %v281 = vld [vmem:[%s1 + $0xd8] sm:$0xff]
        %v282 = vld [vmem:[%s1 + $0xe0] sm:$0xff]
        %v283 = vld [vmem:[%s1 + $0xe8] sm:$0xff]
        %v284 = vld [vmem:[%s1 + $0xf0] sm:$0xff]
        %v285 = vld [vmem:[%s1 + $0xf8] sm:$0xff]
        %v318 = vunpack.c.l.b16 %v254
        %v319 = vunpack.c.h.b16 %v254
        %v320 = vunpack.c.l.b16 %v255
        %v321 = vunpack.c.h.b16 %v255
        %v322 = vunpack.c.l.b16 %v256
        %v323 = vunpack.c.h.b16 %v256
        %v324 = vunpack.c.l.b16 %v257
        %v325 = vunpack.c.h.b16 %v257
        %v326 = vunpack.c.l.b16 %v258
        %v327 = vunpack.c.h.b16 %v258
        %v328 = vunpack.c.l.b16 %v259
        %v329 = vunpack.c.h.b16 %v259
        %v330 = vunpack.c.l.b16 %v260
        %v331 = vunpack.c.h.b16 %v260
        %v332 = vunpack.c.l.b16 %v261
        %v333 = vunpack.c.h.b16 %v261
        %v334 = vunpack.c.l.b16 %v262
        %v335 = vunpack.c.h.b16 %v262
        %v336 = vunpack.c.l.b16 %v263
        %v337 = vunpack.c.h.b16 %v263
        %v338 = vunpack.c.l.b16 %v264
        %v339 = vunpack.c.h.b16 %v264
        %v340 = vunpack.c.l.b16 %v265
        %v341 = vunpack.c.h.b16 %v265
        %v342 = vunpack.c.l.b16 %v266
        %v343 = vunpack.c.h.b16 %v266
        %v344 = vunpack.c.l.b16 %v267
        %v345 = vunpack.c.h.b16 %v267
        %v346 = vunpack.c.l.b16 %v268
        %v347 = vunpack.c.h.b16 %v268
        %v348 = vunpack.c.l.b16 %v269
        %v349 = vunpack.c.h.b16 %v269
        %v350 = vunpack.c.l.b16 %v270
        %v351 = vunpack.c.h.b16 %v270
        %v352 = vunpack.c.l.b16 %v271
        %v353 = vunpack.c.h.b16 %v271
        %v354 = vunpack.c.l.b16 %v272
        %v355 = vunpack.c.h.b16 %v272
        %v356 = vunpack.c.l.b16 %v273
        %v357 = vunpack.c.h.b16 %v273
        %v358 = vunpack.c.l.b16 %v274
        %v359 = vunpack.c.h.b16 %v274
        %v360 = vunpack.c.l.b16 %v275
        %v361 = vunpack.c.h.b16 %v275
        %v362 = vunpack.c.l.b16 %v276
        %v363 = vunpack.c.h.b16 %v276
        %v364 = vunpack.c.l.b16 %v277
        %v365 = vunpack.c.h.b16 %v277
        %v366 = vunpack.c.l.b16 %v278
        %v367 = vunpack.c.h.b16 %v278
        %v368 = vunpack.c.l.b16 %v279
        %v369 = vunpack.c.h.b16 %v279
        %v370 = vunpack.c.l.b16 %v280
        %v371 = vunpack.c.h.b16 %v280
        %v372 = vunpack.c.l.b16 %v281
        %v373 = vunpack.c.h.b16 %v281
        %v374 = vunpack.c.l.b16 %v282
        %v375 = vunpack.c.h.b16 %v282
        %v376 = vunpack.c.l.b16 %v283
        %v377 = vunpack.c.h.b16 %v283
        %v378 = vunpack.c.l.b16 %v284
        %v379 = vunpack.c.h.b16 %v284
        %v380 = vunpack.c.l.b16 %v285
        %v381 = vunpack.c.h.b16 %v285
        %v382 = vpack.c.b16 %v322, %v318
        %v383 = vpack.c.b16 %v323, %v319
        %v384 = vpack.c.b16 %v324, %v320
        %v385 = vpack.c.b16 %v325, %v321
        %v386 = vpack.c.b16 %v330, %v326
        %v387 = vpack.c.b16 %v331, %v327
        %v388 = vpack.c.b16 %v332, %v328
        %v389 = vpack.c.b16 %v333, %v329
        %v390 = vpack.c.b16 %v338, %v334
        %v391 = vpack.c.b16 %v339, %v335
        %v392 = vpack.c.b16 %v340, %v336
        %v393 = vpack.c.b16 %v341, %v337
        %v394 = vpack.c.b16 %v346, %v342
        %v395 = vpack.c.b16 %v347, %v343
        %v396 = vpack.c.b16 %v348, %v344
        %v397 = vpack.c.b16 %v349, %v345
        %v398 = vpack.c.b16 %v354, %v350
        %v399 = vpack.c.b16 %v355, %v351
        %v400 = vpack.c.b16 %v356, %v352
        %v401 = vpack.c.b16 %v357, %v353
        %v402 = vpack.c.b16 %v362, %v358
        %v403 = vpack.c.b16 %v363, %v359
        %v404 = vpack.c.b16 %v364, %v360
        %v405 = vpack.c.b16 %v365, %v361
        %v406 = vpack.c.b16 %v370, %v366
        %v407 = vpack.c.b16 %v371, %v367
        %v408 = vpack.c.b16 %v372, %v368
        %v409 = vpack.c.b16 %v373, %v369
        %v410 = vpack.c.b16 %v378, %v374
        %v411 = vpack.c.b16 %v379, %v375
        %v412 = vpack.c.b16 %v380, %v376
        %v413 = vpack.c.b16 %v381, %v377
        %446 = vmatprep.subr.bf16.mxu0 %v411
        %447 = vmatpush1.bf16.msra.mxu0 %v410
        %448 = vmatprep.subr.bf16.mxu0 %v407
        %449 = vmatpush1.bf16.msra.mxu0 %v406
        %450 = vmatprep.subr.bf16.mxu0 %v403
        %451 = vmatpush1.bf16.msra.mxu0 %v402
        %452 = vmatprep.subr.bf16.mxu0 %v399
        %453 = vmatpush1.bf16.msra.mxu0 %v398
        %454 = vmatprep.subr.bf16.mxu0 %v395
        %455 = vmatpush1.bf16.msra.mxu0 %v394
        %456 = vmatprep.subr.bf16.mxu0 %v391
        %457 = vmatpush1.bf16.msra.mxu0 %v390
        %458 = vmatprep.subr.bf16.mxu0 %v387
        %459 = vmatpush1.bf16.msra.mxu0 %v386
        %460 = vmatprep.subr.bf16.mxu0 %v383
        %461 = vmatpush1.bf16.msra.mxu0 %v382
        %462 = vmatprep.subr.bf16.mxu0 0
        %463 = vmatpush2.bf16.msra.mxu0 0
        %464 = vmatprep.subr.bf16.mxu0 0
        %465 = vmatpush2.bf16.msra.mxu0 0
        %466 = vmatprep.subr.bf16.mxu0 0
        %467 = vmatpush2.bf16.msra.mxu0 0
        %468 = vmatprep.subr.bf16.mxu0 0
        %469 = vmatpush2.bf16.msra.mxu0 0
        %470 = vmatprep.subr.bf16.mxu0 0
        %471 = vmatpush2.bf16.msra.mxu0 0
        %472 = vmatprep.subr.bf16.mxu0 0
        %473 = vmatpush2.bf16.msra.mxu0 0
        %474 = vmatprep.subr.bf16.mxu0 0
        %475 = vmatpush2.bf16.msra.mxu0 0
        %476 = vmatprep.subr.bf16.mxu0 0
        %477 = vmatpush2.bf16.msra.mxu0 0
        %478 = vmatprep.mubr.bf16.mxu0 0
        %479 = vmatmul.mubr.bf16.gmra.mxu0 %v253
        %v480 = vpop.f32.mrf.mxu0
        %v481 = vadd.f32 0.0, %v480
        %v482 = vpop.f32.mrf.mxu0
        %v483 = vadd.f32 0.0, %v482
        %v484 = vpop.f32.mrf.mxu0
        %v485 = vpop.f32.mrf.mxu0
        %486 = vdwg.mxu0
        %487 = vmatprep.subr.bf16.mxu0 %v413
        %488 = vmatpush1.bf16.msra.mxu0 %v412
        %489 = vmatprep.subr.bf16.mxu0 %v409
        %490 = vmatpush1.bf16.msra.mxu0 %v408
        %491 = vmatprep.subr.bf16.mxu0 %v405
        %492 = vmatpush1.bf16.msra.mxu0 %v404
        %493 = vmatprep.subr.bf16.mxu0 %v401
        %494 = vmatpush1.bf16.msra.mxu0 %v400
        %495 = vmatprep.subr.bf16.mxu0 %v397
        %496 = vmatpush1.bf16.msra.mxu0 %v396
        %497 = vmatprep.subr.bf16.mxu0 %v393
        %498 = vmatpush1.bf16.msra.mxu0 %v392
        %499 = vmatprep.subr.bf16.mxu0 %v389
        %500 = vmatpush1.bf16.msra.mxu0 %v388
        %501 = vmatprep.subr.bf16.mxu0 %v385
        %502 = vmatpush1.bf16.msra.mxu0 %v384
        %503 = vmatprep.subr.bf16.mxu0 0
        %504 = vmatpush2.bf16.msra.mxu0 0
        %505 = vmatprep.subr.bf16.mxu0 0
        %506 = vmatpush2.bf16.msra.mxu0 0
        %507 = vmatprep.subr.bf16.mxu0 0
        %508 = vmatpush2.bf16.msra.mxu0 0
        %509 = vmatprep.subr.bf16.mxu0 0
        %510 = vmatpush2.bf16.msra.mxu0 0
        %511 = vmatprep.subr.bf16.mxu0 0
        %512 = vmatpush2.bf16.msra.mxu0 0
        %513 = vmatprep.subr.bf16.mxu0 0
        %514 = vmatpush2.bf16.msra.mxu0 0
        %515 = vmatprep.subr.bf16.mxu0 0
        %516 = vmatpush2.bf16.msra.mxu0 0
        %517 = vmatprep.subr.bf16.mxu0 0
        %518 = vmatpush2.bf16.msra.mxu0 0
        %519 = vmatprep.mubr.bf16.mxu0 0
        %520 = vmatmul.mubr.bf16.gmra.mxu0 %v253
        %v521 = vpop.f32.mrf.mxu0
        %v522 = vadd.f32 0.0, %v521
        %v523 = vpop.f32.mrf.mxu0
        %v524 = vadd.f32 0.0, %v523
        %v525 = vpop.f32.mrf.mxu0
        %v526 = vpop.f32.mrf.mxu0
        %527 = vdwg.mxu0
        %v528 = vadd.f32 %v248, %v481
        %v529 = vadd.f32 %v249, %v483
        %v530 = vadd.f32 %v250, %v522
        %v531 = vadd.f32 %v251, %v524
        %v532 = vxor.u32 %v528, 2147483648
        %v533 = vmul.f32 %v532, 1.442695
        %v534 = vpow.pop %v533
        %v535 = vadd.f32 %v534, 1.0
        %v536 = vrcp.pop %v535
        %v537 = vmul.f32 1.0, %v536
        %v538 = vxor.u32 %v529, 2147483648
        %v539 = vmul.f32 %v538, 1.442695
        %v540 = vpow.pop %v539
        %v541 = vadd.f32 %v540, 1.0
        %v542 = vrcp.pop %v541
        %v543 = vmul.f32 1.0, %v542
        %v544 = vtanh.pop %v530
        %v545 = vxor.u32 %v531, 2147483648
        %v546 = vmul.f32 %v545, 1.442695
        %v547 = vpow.pop %v546
        %v548 = vadd.f32 %v547, 1.0
        %v549 = vrcp.pop %v548
        %v550 = vmul.f32 1.0, %v549
        %v551 = vld [vmem:[#allocation3] sm:$0xff]
        %v552 = vmul.f32 %v543, %v551
        %v553 = vmul.f32 %v537, %v544
        %v554 = vadd.f32 %v552, %v553
        %v555 = vtanh.pop %v554
        %v556 = vmul.f32 %v550, %v555
        %557 = vst [vmem:[#allocation3] sm:$0xff] %v554
        %558 = vst [vmem:[#allocation2] sm:$0xff] %v556
        %559 = vst [vmem:[%s238] sm:$0xff] %v556
        %s560 = scalar_lea.vmem %s221, 32 [#allocation4]
        %v561 = vld [vmem:[%s560] sm:$0xff]
        %v562 = vld [vmem:[%s560 + $0x8] sm:$0xff]
        %v563 = vld [vmem:[%s560 + $0x10] sm:$0xff]
        %v564 = vld [vmem:[%s560 + $0x18] sm:$0xff]
        %v565 = vld [vmem:[#allocation2] sm:$0xff]
        %v566 = vpack.c.bf16 %v565, %v565
        %v567 = vld [vmem:[%s1] sm:$0xff]
        %v568 = vld [vmem:[%s1 + $0x8] sm:$0xff]
        %v569 = vld [vmem:[%s1 + $0x10] sm:$0xff]
        %v570 = vld [vmem:[%s1 + $0x18] sm:$0xff]
        %v571 = vld [vmem:[%s1 + $0x20] sm:$0xff]
        %v572 = vld [vmem:[%s1 + $0x28] sm:$0xff]
        %v573 = vld [vmem:[%s1 + $0x30] sm:$0xff]
        %v574 = vld [vmem:[%s1 + $0x38] sm:$0xff]
        %v575 = vld [vmem:[%s1 + $0x40] sm:$0xff]
        %v576 = vld [vmem:[%s1 + $0x48] sm:$0xff]
        %v577 = vld [vmem:[%s1 + $0x50] sm:$0xff]
        %v578 = vld [vmem:[%s1 + $0x58] sm:$0xff]
        %v579 = vld [vmem:[%s1 + $0x60] sm:$0xff]
        %v580 = vld [vmem:[%s1 + $0x68] sm:$0xff]
        %v581 = vld [vmem:[%s1 + $0x70] sm:$0xff]
        %v582 = vld [vmem:[%s1 + $0x78] sm:$0xff]
        %v583 = vld [vmem:[%s1 + $0x80] sm:$0xff]
        %v584 = vld [vmem:[%s1 + $0x88] sm:$0xff]
        %v585 = vld [vmem:[%s1 + $0x90] sm:$0xff]
        %v586 = vld [vmem:[%s1 + $0x98] sm:$0xff]
        %v587 = vld [vmem:[%s1 + $0xa0] sm:$0xff]
        %v588 = vld [vmem:[%s1 + $0xa8] sm:$0xff]
        %v589 = vld [vmem:[%s1 + $0xb0] sm:$0xff]
        %v590 = vld [vmem:[%s1 + $0xb8] sm:$0xff]
        %v591 = vld [vmem:[%s1 + $0xc0] sm:$0xff]
        %v592 = vld [vmem:[%s1 + $0xc8] sm:$0xff]
        %v593 = vld [vmem:[%s1 + $0xd0] sm:$0xff]
        %v594 = vld [vmem:[%s1 + $0xd8] sm:$0xff]
        %v595 = vld [vmem:[%s1 + $0xe0] sm:$0xff]
        %v596 = vld [vmem:[%s1 + $0xe8] sm:$0xff]
        %v597 = vld [vmem:[%s1 + $0xf0] sm:$0xff]
        %v598 = vld [vmem:[%s1 + $0xf8] sm:$0xff]
        %v631 = vunpack.c.l.b16 %v567
        %v632 = vunpack.c.h.b16 %v567
        %v633 = vunpack.c.l.b16 %v568
        %v634 = vunpack.c.h.b16 %v568
        %v635 = vunpack.c.l.b16 %v569
        %v636 = vunpack.c.h.b16 %v569
        %v637 = vunpack.c.l.b16 %v570
        %v638 = vunpack.c.h.b16 %v570
        %v639 = vunpack.c.l.b16 %v571
        %v640 = vunpack.c.h.b16 %v571
        %v641 = vunpack.c.l.b16 %v572
        %v642 = vunpack.c.h.b16 %v572
        %v643 = vunpack.c.l.b16 %v573
        %v644 = vunpack.c.h.b16 %v573
        %v645 = vunpack.c.l.b16 %v574
        %v646 = vunpack.c.h.b16 %v574
        %v647 = vunpack.c.l.b16 %v575
        %v648 = vunpack.c.h.b16 %v575
        %v649 = vunpack.c.l.b16 %v576
        %v650 = vunpack.c.h.b16 %v576
        %v651 = vunpack.c.l.b16 %v577
        %v652 = vunpack.c.h.b16 %v577
        %v653 = vunpack.c.l.b16 %v578
        %v654 = vunpack.c.h.b16 %v578
        %v655 = vunpack.c.l.b16 %v579
        %v656 = vunpack.c.h.b16 %v579
        %v657 = vunpack.c.l.b16 %v580
        %v658 = vunpack.c.h.b16 %v580
        %v659 = vunpack.c.l.b16 %v581
        %v660 = vunpack.c.h.b16 %v581
        %v661 = vunpack.c.l.b16 %v582
        %v662 = vunpack.c.h.b16 %v582
        %v663 = vunpack.c.l.b16 %v583
        %v664 = vunpack.c.h.b16 %v583
        %v665 = vunpack.c.l.b16 %v584
        %v666 = vunpack.c.h.b16 %v584
        %v667 = vunpack.c.l.b16 %v585
        %v668 = vunpack.c.h.b16 %v585
        %v669 = vunpack.c.l.b16 %v586
        %v670 = vunpack.c.h.b16 %v586
        %v671 = vunpack.c.l.b16 %v587
        %v672 = vunpack.c.h.b16 %v587
        %v673 = vunpack.c.l.b16 %v588
        %v674 = vunpack.c.h.b16 %v588
        %v675 = vunpack.c.l.b16 %v589
        %v676 = vunpack.c.h.b16 %v589
        %v677 = vunpack.c.l.b16 %v590
        %v678 = vunpack.c.h.b16 %v590
        %v679 = vunpack.c.l.b16 %v591
        %v680 = vunpack.c.h.b16 %v591
        %v681 = vunpack.c.l.b16 %v592
        %v682 = vunpack.c.h.b16 %v592
        %v683 = vunpack.c.l.b16 %v593
        %v684 = vunpack.c.h.b16 %v593
        %v685 = vunpack.c.l.b16 %v594
        %v686 = vunpack.c.h.b16 %v594
        %v687 = vunpack.c.l.b16 %v595
        %v688 = vunpack.c.h.b16 %v595
        %v689 = vunpack.c.l.b16 %v596
        %v690 = vunpack.c.h.b16 %v596
        %v691 = vunpack.c.l.b16 %v597
        %v692 = vunpack.c.h.b16 %v597
        %v693 = vunpack.c.l.b16 %v598
        %v694 = vunpack.c.h.b16 %v598
        %v695 = vpack.c.b16 %v635, %v631
        %v696 = vpack.c.b16 %v636, %v632
        %v697 = vpack.c.b16 %v637, %v633
        %v698 = vpack.c.b16 %v638, %v634
        %v699 = vpack.c.b16 %v643, %v639
        %v700 = vpack.c.b16 %v644, %v640
        %v701 = vpack.c.b16 %v645, %v641
        %v702 = vpack.c.b16 %v646, %v642
        %v703 = vpack.c.b16 %v651, %v647
        %v704 = vpack.c.b16 %v652, %v648
        %v705 = vpack.c.b16 %v653, %v649
        %v706 = vpack.c.b16 %v654, %v650
        %v707 = vpack.c.b16 %v659, %v655
        %v708 = vpack.c.b16 %v660, %v656
        %v709 = vpack.c.b16 %v661, %v657
        %v710 = vpack.c.b16 %v662, %v658
        %v711 = vpack.c.b16 %v667, %v663
        %v712 = vpack.c.b16 %v668, %v664
        %v713 = vpack.c.b16 %v669, %v665
        %v714 = vpack.c.b16 %v670, %v666
        %v715 = vpack.c.b16 %v675, %v671
        %v716 = vpack.c.b16 %v676, %v672
        %v717 = vpack.c.b16 %v677, %v673
        %v718 = vpack.c.b16 %v678, %v674
        %v719 = vpack.c.b16 %v683, %v679
        %v720 = vpack.c.b16 %v684, %v680
        %v721 = vpack.c.b16 %v685, %v681
        %v722 = vpack.c.b16 %v686, %v682
        %v723 = vpack.c.b16 %v691, %v687
        %v724 = vpack.c.b16 %v692, %v688
        %v725 = vpack.c.b16 %v693, %v689
        %v726 = vpack.c.b16 %v694, %v690
        %759 = vmatprep.subr.bf16.mxu0 %v724
        %760 = vmatpush1.bf16.msra.mxu0 %v723
        %761 = vmatprep.subr.bf16.mxu0 %v720
        %762 = vmatpush1.bf16.msra.mxu0 %v719
        %763 = vmatprep.subr.bf16.mxu0 %v716
        %764 = vmatpush1.bf16.msra.mxu0 %v715
        %765 = vmatprep.subr.bf16.mxu0 %v712
        %766 = vmatpush1.bf16.msra.mxu0 %v711
        %767 = vmatprep.subr.bf16.mxu0 %v708
        %768 = vmatpush1.bf16.msra.mxu0 %v707
        %769 = vmatprep.subr.bf16.mxu0 %v704
        %770 = vmatpush1.bf16.msra.mxu0 %v703
        %771 = vmatprep.subr.bf16.mxu0 %v700
        %772 = vmatpush1.bf16.msra.mxu0 %v699
        %773 = vmatprep.subr.bf16.mxu0 %v696
        %774 = vmatpush1.bf16.msra.mxu0 %v695
        %775 = vmatprep.subr.bf16.mxu0 0
        %776 = vmatpush2.bf16.msra.mxu0 0
        %777 = vmatprep.subr.bf16.mxu0 0
        %778 = vmatpush2.bf16.msra.mxu0 0
        %779 = vmatprep.subr.bf16.mxu0 0
        %780 = vmatpush2.bf16.msra.mxu0 0
        %781 = vmatprep.subr.bf16.mxu0 0
        %782 = vmatpush2.bf16.msra.mxu0 0
        %783 = vmatprep.subr.bf16.mxu0 0
        %784 = vmatpush2.bf16.msra.mxu0 0
        %785 = vmatprep.subr.bf16.mxu0 0
        %786 = vmatpush2.bf16.msra.mxu0 0
        %787 = vmatprep.subr.bf16.mxu0 0
        %788 = vmatpush2.bf16.msra.mxu0 0
        %789 = vmatprep.subr.bf16.mxu0 0
        %790 = vmatpush2.bf16.msra.mxu0 0
        %791 = vmatprep.mubr.bf16.mxu0 0
        %792 = vmatmul.mubr.bf16.gmra.mxu0 %v566
        %v793 = vpop.f32.mrf.mxu0
        %v794 = vadd.f32 0.0, %v793
        %v795 = vpop.f32.mrf.mxu0
        %v796 = vadd.f32 0.0, %v795
        %v797 = vpop.f32.mrf.mxu0
        %v798 = vpop.f32.mrf.mxu0
        %799 = vdwg.mxu0
        %800 = vmatprep.subr.bf16.mxu0 %v726
        %801 = vmatpush1.bf16.msra.mxu0 %v725
        %802 = vmatprep.subr.bf16.mxu0 %v722
        %803 = vmatpush1.bf16.msra.mxu0 %v721
        %804 = vmatprep.subr.bf16.mxu0 %v718
        %805 = vmatpush1.bf16.msra.mxu0 %v717
        %806 = vmatprep.subr.bf16.mxu0 %v714
        %807 = vmatpush1.bf16.msra.mxu0 %v713
        %808 = vmatprep.subr.bf16.mxu0 %v710
        %809 = vmatpush1.bf16.msra.mxu0 %v709
        %810 = vmatprep.subr.bf16.mxu0 %v706
        %811 = vmatpush1.bf16.msra.mxu0 %v705
        %812 = vmatprep.subr.bf16.mxu0 %v702
        %813 = vmatpush1.bf16.msra.mxu0 %v701
        %814 = vmatprep.subr.bf16.mxu0 %v698
        %815 = vmatpush1.bf16.msra.mxu0 %v697
        %816 = vmatprep.subr.bf16.mxu0 0
        %817 = vmatpush2.bf16.msra.mxu0 0
        %818 = vmatprep.subr.bf16.mxu0 0
        %819 = vmatpush2.bf16.msra.mxu0 0
        %820 = vmatprep.subr.bf16.mxu0 0
        %821 = vmatpush2.bf16.msra.mxu0 0
        %822 = vmatprep.subr.bf16.mxu0 0
        %823 = vmatpush2.bf16.msra.mxu0 0
        %824 = vmatprep.subr.bf16.mxu0 0
        %825 = vmatpush2.bf16.msra.mxu0 0
        %826 = vmatprep.subr.bf16.mxu0 0
        %827 = vmatpush2.bf16.msra.mxu0 0
        %828 = vmatprep.subr.bf16.mxu0 0
        %829 = vmatpush2.bf16.msra.mxu0 0
        %830 = vmatprep.subr.bf16.mxu0 0
        %831 = vmatpush2.bf16.msra.mxu0 0
        %832 = vmatprep.mubr.bf16.mxu0 0
        %833 = vmatmul.mubr.bf16.gmra.mxu0 %v566
        %v834 = vpop.f32.mrf.mxu0
        %v835 = vadd.f32 0.0, %v834
        %v836 = vpop.f32.mrf.mxu0
        %v837 = vadd.f32 0.0, %v836
        %v838 = vpop.f32.mrf.mxu0
        %v839 = vpop.f32.mrf.mxu0
        %840 = vdwg.mxu0
        %v841 = vadd.f32 %v561, %v794
        %v842 = vadd.f32 %v562, %v796
        %v843 = vadd.f32 %v563, %v835
        %v844 = vadd.f32 %v564, %v837
        %v845 = vxor.u32 %v841, 2147483648
        %v846 = vmul.f32 %v845, 1.442695
        %v847 = vpow.pop %v846
        %v848 = vadd.f32 %v847, 1.0
        %v849 = vrcp.pop %v848
        %v850 = vmul.f32 1.0, %v849
        %v851 = vxor.u32 %v842, 2147483648
        %v852 = vmul.f32 %v851, 1.442695
        %v853 = vpow.pop %v852
        %v854 = vadd.f32 %v853, 1.0
        %v855 = vrcp.pop %v854
        %v856 = vmul.f32 1.0, %v855
        %v857 = vtanh.pop %v843
        %v858 = vxor.u32 %v844, 2147483648
        %v859 = vmul.f32 %v858, 1.442695
        %v860 = vpow.pop %v859
        %v861 = vadd.f32 %v860, 1.0
        %v862 = vrcp.pop %v861
        %v863 = vmul.f32 1.0, %v862
        %v864 = vld [vmem:[#allocation3] sm:$0xff]
        %v865 = vmul.f32 %v856, %v864
        %v866 = vmul.f32 %v850, %v857
        %v867 = vadd.f32 %v865, %v866
        %v868 = vtanh.pop %v867
        %v869 = vmul.f32 %v863, %v868
        %870 = vst [vmem:[#allocation3] sm:$0xff] %v867
        %871 = vst [vmem:[#allocation2] sm:$0xff] %v869
        %s872 = scalar_lea.vmem %s238, 8 [#allocation5]
        %873 = vst [vmem:[%s872] sm:$0xff] %v869
        %s874 = scalar_lea.vmem %s221, 64 [#allocation4]
        %v875 = vld [vmem:[%s874] sm:$0xff]
        %v876 = vld [vmem:[%s874 + $0x8] sm:$0xff]
        %v877 = vld [vmem:[%s874 + $0x10] sm:$0xff]
        %v878 = vld [vmem:[%s874 + $0x18] sm:$0xff]
        %v879 = vld [vmem:[#allocation2] sm:$0xff]
        %v880 = vpack.c.bf16 %v879, %v879
        %v881 = vld [vmem:[%s1] sm:$0xff]
        %v882 = vld [vmem:[%s1 + $0x8] sm:$0xff]
        %v883 = vld [vmem:[%s1 + $0x10] sm:$0xff]
        %v884 = vld [vmem:[%s1 + $0x18] sm:$0xff]
        %v885 = vld [vmem:[%s1 + $0x20] sm:$0xff]
        %v886 = vld [vmem:[%s1 + $0x28] sm:$0xff]
        %v887 = vld [vmem:[%s1 + $0x30] sm:$0xff]
        %v888 = vld [vmem:[%s1 + $0x38] sm:$0xff]
        %v889 = vld [vmem:[%s1 + $0x40] sm:$0xff]
        %v890 = vld [vmem:[%s1 + $0x48] sm:$0xff]
        %v891 = vld [vmem:[%s1 + $0x50] sm:$0xff]
        %v892 = vld [vmem:[%s1 + $0x58] sm:$0xff]
        %v893 = vld [vmem:[%s1 + $0x60] sm:$0xff]
        %v894 = vld [vmem:[%s1 + $0x68] sm:$0xff]
        %v895 = vld [vmem:[%s1 + $0x70] sm:$0xff]
        %v896 = vld [vmem:[%s1 + $0x78] sm:$0xff]
        %v897 = vld [vmem:[%s1 + $0x80] sm:$0xff]
        %v898 = vld [vmem:[%s1 + $0x88] sm:$0xff]
        %v899 = vld [vmem:[%s1 + $0x90] sm:$0xff]
        %v900 = vld [vmem:[%s1 + $0x98] sm:$0xff]
        %v901 = vld [vmem:[%s1 + $0xa0] sm:$0xff]
        %v902 = vld [vmem:[%s1 + $0xa8] sm:$0xff]
        %v903 = vld [vmem:[%s1 + $0xb0] sm:$0xff]
        %v904 = vld [vmem:[%s1 + $0xb8] sm:$0xff]
        %v905 = vld [vmem:[%s1 + $0xc0] sm:$0xff]
        %v906 = vld [vmem:[%s1 + $0xc8] sm:$0xff]
        %v907 = vld [vmem:[%s1 + $0xd0] sm:$0xff]
        %v908 = vld [vmem:[%s1 + $0xd8] sm:$0xff]
        %v909 = vld [vmem:[%s1 + $0xe0] sm:$0xff]
        %v910 = vld [vmem:[%s1 + $0xe8] sm:$0xff]
        %v911 = vld [vmem:[%s1 + $0xf0] sm:$0xff]
        %v912 = vld [vmem:[%s1 + $0xf8] sm:$0xff]
        %v945 = vunpack.c.l.b16 %v881
        %v946 = vunpack.c.h.b16 %v881
        %v947 = vunpack.c.l.b16 %v882
        %v948 = vunpack.c.h.b16 %v882
        %v949 = vunpack.c.l.b16 %v883
        %v950 = vunpack.c.h.b16 %v883
        %v951 = vunpack.c.l.b16 %v884
        %v952 = vunpack.c.h.b16 %v884
        %v953 = vunpack.c.l.b16 %v885
        %v954 = vunpack.c.h.b16 %v885
        %v955 = vunpack.c.l.b16 %v886
        %v956 = vunpack.c.h.b16 %v886
        %v957 = vunpack.c.l.b16 %v887
        %v958 = vunpack.c.h.b16 %v887
        %v959 = vunpack.c.l.b16 %v888
        %v960 = vunpack.c.h.b16 %v888
        %v961 = vunpack.c.l.b16 %v889
        %v962 = vunpack.c.h.b16 %v889
        %v963 = vunpack.c.l.b16 %v890
        %v964 = vunpack.c.h.b16 %v890
        %v965 = vunpack.c.l.b16 %v891
        %v966 = vunpack.c.h.b16 %v891
        %v967 = vunpack.c.l.b16 %v892
        %v968 = vunpack.c.h.b16 %v892
        %v969 = vunpack.c.l.b16 %v893
        %v970 = vunpack.c.h.b16 %v893
        %v971 = vunpack.c.l.b16 %v894
        %v972 = vunpack.c.h.b16 %v894
        %v973 = vunpack.c.l.b16 %v895
        %v974 = vunpack.c.h.b16 %v895
        %v975 = vunpack.c.l.b16 %v896
        %v976 = vunpack.c.h.b16 %v896
        %v977 = vunpack.c.l.b16 %v897
        %v978 = vunpack.c.h.b16 %v897
        %v979 = vunpack.c.l.b16 %v898
        %v980 = vunpack.c.h.b16 %v898
        %v981 = vunpack.c.l.b16 %v899
        %v982 = vunpack.c.h.b16 %v899
        %v983 = vunpack.c.l.b16 %v900
        %v984 = vunpack.c.h.b16 %v900
        %v985 = vunpack.c.l.b16 %v901
        %v986 = vunpack.c.h.b16 %v901
        %v987 = vunpack.c.l.b16 %v902
        %v988 = vunpack.c.h.b16 %v902
        %v989 = vunpack.c.l.b16 %v903
        %v990 = vunpack.c.h.b16 %v903
        %v991 = vunpack.c.l.b16 %v904
        %v992 = vunpack.c.h.b16 %v904
        %v993 = vunpack.c.l.b16 %v905
        %v994 = vunpack.c.h.b16 %v905
        %v995 = vunpack.c.l.b16 %v906
        %v996 = vunpack.c.h.b16 %v906
        %v997 = vunpack.c.l.b16 %v907
        %v998 = vunpack.c.h.b16 %v907
        %v999 = vunpack.c.l.b16 %v908
        %v1000 = vunpack.c.h.b16 %v908
        %v1001 = vunpack.c.l.b16 %v909
        %v1002 = vunpack.c.h.b16 %v909
        %v1003 = vunpack.c.l.b16 %v910
        %v1004 = vunpack.c.h.b16 %v910
        %v1005 = vunpack.c.l.b16 %v911
        %v1006 = vunpack.c.h.b16 %v911
        %v1007 = vunpack.c.l.b16 %v912
        %v1008 = vunpack.c.h.b16 %v912
        %v1009 = vpack.c.b16 %v949, %v945
        %v1010 = vpack.c.b16 %v950, %v946
        %v1011 = vpack.c.b16 %v951, %v947
        %v1012 = vpack.c.b16 %v952, %v948
        %v1013 = vpack.c.b16 %v957, %v953
        %v1014 = vpack.c.b16 %v958, %v954
        %v1015 = vpack.c.b16 %v959, %v955
        %v1016 = vpack.c.b16 %v960, %v956
        %v1017 = vpack.c.b16 %v965, %v961
        %v1018 = vpack.c.b16 %v966, %v962
        %v1019 = vpack.c.b16 %v967, %v963
        %v1020 = vpack.c.b16 %v968, %v964
        %v1021 = vpack.c.b16 %v973, %v969
        %v1022 = vpack.c.b16 %v974, %v970
        %v1023 = vpack.c.b16 %v975, %v971
        %v1024 = vpack.c.b16 %v976, %v972
        %v1025 = vpack.c.b16 %v981, %v977
        %v1026 = vpack.c.b16 %v982, %v978
        %v1027 = vpack.c.b16 %v983, %v979
        %v1028 = vpack.c.b16 %v984, %v980
        %v1029 = vpack.c.b16 %v989, %v985
        %v1030 = vpack.c.b16 %v990, %v986
        %v1031 = vpack.c.b16 %v991, %v987
        %v1032 = vpack.c.b16 %v992, %v988
        %v1033 = vpack.c.b16 %v997, %v993
        %v1034 = vpack.c.b16 %v998, %v994
        %v1035 = vpack.c.b16 %v999, %v995
        %v1036 = vpack.c.b16 %v1000, %v996
        %v1037 = vpack.c.b16 %v1005, %v1001
        %v1038 = vpack.c.b16 %v1006, %v1002
        %v1039 = vpack.c.b16 %v1007, %v1003
        %v1040 = vpack.c.b16 %v1008, %v1004
        %1073 = vmatprep.subr.bf16.mxu0 %v1038
        %1074 = vmatpush1.bf16.msra.mxu0 %v1037
        %1075 = vmatprep.subr.bf16.mxu0 %v1034
        %1076 = vmatpush1.bf16.msra.mxu0 %v1033
        %1077 = vmatprep.subr.bf16.mxu0 %v1030
        %1078 = vmatpush1.bf16.msra.mxu0 %v1029
        %1079 = vmatprep.subr.bf16.mxu0 %v1026
        %1080 = vmatpush1.bf16.msra.mxu0 %v1025
        %1081 = vmatprep.subr.bf16.mxu0 %v1022
        %1082 = vmatpush1.bf16.msra.mxu0 %v1021
        %1083 = vmatprep.subr.bf16.mxu0 %v1018
        %1084 = vmatpush1.bf16.msra.mxu0 %v1017
        %1085 = vmatprep.subr.bf16.mxu0 %v1014
        %1086 = vmatpush1.bf16.msra.mxu0 %v1013
        %1087 = vmatprep.subr.bf16.mxu0 %v1010
        %1088 = vmatpush1.bf16.msra.mxu0 %v1009
        %1089 = vmatprep.subr.bf16.mxu0 0
        %1090 = vmatpush2.bf16.msra.mxu0 0
        %1091 = vmatprep.subr.bf16.mxu0 0
        %1092 = vmatpush2.bf16.msra.mxu0 0
        %1093 = vmatprep.subr.bf16.mxu0 0
        %1094 = vmatpush2.bf16.msra.mxu0 0
        %1095 = vmatprep.subr.bf16.mxu0 0
        %1096 = vmatpush2.bf16.msra.mxu0 0
        %1097 = vmatprep.subr.bf16.mxu0 0
        %1098 = vmatpush2.bf16.msra.mxu0 0
        %1099 = vmatprep.subr.bf16.mxu0 0
        %1100 = vmatpush2.bf16.msra.mxu0 0
        %1101 = vmatprep.subr.bf16.mxu0 0
        %1102 = vmatpush2.bf16.msra.mxu0 0
        %1103 = vmatprep.subr.bf16.mxu0 0
        %1104 = vmatpush2.bf16.msra.mxu0 0
        %1105 = vmatprep.mubr.bf16.mxu0 0
        %1106 = vmatmul.mubr.bf16.gmra.mxu0 %v880
        %v1107 = vpop.f32.mrf.mxu0
        %v1108 = vadd.f32 0.0, %v1107
        %v1109 = vpop.f32.mrf.mxu0
        %v1110 = vadd.f32 0.0, %v1109
        %v1111 = vpop.f32.mrf.mxu0
        %v1112 = vpop.f32.mrf.mxu0
        %1113 = vdwg.mxu0
        %1114 = vmatprep.subr.bf16.mxu0 %v1040
        %1115 = vmatpush1.bf16.msra.mxu0 %v1039
        %1116 = vmatprep.subr.bf16.mxu0 %v1036
        %1117 = vmatpush1.bf16.msra.mxu0 %v1035
        %1118 = vmatprep.subr.bf16.mxu0 %v1032
        %1119 = vmatpush1.bf16.msra.mxu0 %v1031
        %1120 = vmatprep.subr.bf16.mxu0 %v1028
        %1121 = vmatpush1.bf16.msra.mxu0 %v1027
        %1122 = vmatprep.subr.bf16.mxu0 %v1024
        %1123 = vmatpush1.bf16.msra.mxu0 %v1023
        %1124 = vmatprep.subr.bf16.mxu0 %v1020
        %1125 = vmatpush1.bf16.msra.mxu0 %v1019
        %1126 = vmatprep.subr.bf16.mxu0 %v1016
        %1127 = vmatpush1.bf16.msra.mxu0 %v1015
        %1128 = vmatprep.subr.bf16.mxu0 %v1012
        %1129 = vmatpush1.bf16.msra.mxu0 %v1011
        %1130 = vmatprep.subr.bf16.mxu0 0
        %1131 = vmatpush2.bf16.msra.mxu0 0
        %1132 = vmatprep.subr.bf16.mxu0 0
        %1133 = vmatpush2.bf16.msra.mxu0 0
        %1134 = vmatprep.subr.bf16.mxu0 0
        %1135 = vmatpush2.bf16.msra.mxu0 0
        %1136 = vmatprep.subr.bf16.mxu0 0
        %1137 = vmatpush2.bf16.msra.mxu0 0
        %1138 = vmatprep.subr.bf16.mxu0 0
        %1139 = vmatpush2.bf16.msra.mxu0 0
        %1140 = vmatprep.subr.bf16.mxu0 0
        %1141 = vmatpush2.bf16.msra.mxu0 0
        %1142 = vmatprep.subr.bf16.mxu0 0
        %1143 = vmatpush2.bf16.msra.mxu0 0
        %1144 = vmatprep.subr.bf16.mxu0 0
        %1145 = vmatpush2.bf16.msra.mxu0 0
        %1146 = vmatprep.mubr.bf16.mxu0 0
        %1147 = vmatmul.mubr.bf16.gmra.mxu0 %v880
        %v1148 = vpop.f32.mrf.mxu0
        %v1149 = vadd.f32 0.0, %v1148
        %v1150 = vpop.f32.mrf.mxu0
        %v1151 = vadd.f32 0.0, %v1150
        %v1152 = vpop.f32.mrf.mxu0
        %v1153 = vpop.f32.mrf.mxu0
        %1154 = vdwg.mxu0
        %v1155 = vadd.f32 %v875, %v1108
        %v1156 = vadd.f32 %v876, %v1110
        %v1157 = vadd.f32 %v877, %v1149
        %v1158 = vadd.f32 %v878, %v1151
        %v1159 = vxor.u32 %v1155, 2147483648
        %v1160 = vmul.f32 %v1159, 1.442695
        %v1161 = vpow.pop %v1160
        %v1162 = vadd.f32 %v1161, 1.0
        %v1163 = vrcp.pop %v1162
        %v1164 = vmul.f32 1.0, %v1163
        %v1165 = vxor.u32 %v1156, 2147483648
        %v1166 = vmul.f32 %v1165, 1.442695
        %v1167 = vpow.pop %v1166
        %v1168 = vadd.f32 %v1167, 1.0
        %v1169 = vrcp.pop %v1168
        %v1170 = vmul.f32 1.0, %v1169
        %v1171 = vtanh.pop %v1157
        %v1172 = vxor.u32 %v1158, 2147483648
        %v1173 = vmul.f32 %v1172, 1.442695
        %v1174 = vpow.pop %v1173
        %v1175 = vadd.f32 %v1174, 1.0
        %v1176 = vrcp.pop %v1175
        %v1177 = vmul.f32 1.0, %v1176
        %v1178 = vld [vmem:[#allocation3] sm:$0xff]
        %v1179 = vmul.f32 %v1170, %v1178
        %v1180 = vmul.f32 %v1164, %v1171
        %v1181 = vadd.f32 %v1179, %v1180
        %v1182 = vtanh.pop %v1181
        %v1183 = vmul.f32 %v1177, %v1182
        %1184 = vst [vmem:[#allocation3] sm:$0xff] %v1181
        %1185 = vst [vmem:[#allocation2] sm:$0xff] %v1183
        %s1186 = scalar_lea.vmem %s238, 16 [#allocation5]
        %1187 = vst [vmem:[%s1186] sm:$0xff] %v1183
        %s1188 = scalar_lea.vmem %s221, 96 [#allocation4]
        %v1189 = vld [vmem:[%s1188] sm:$0xff]
        %v1190 = vld [vmem:[%s1188 + $0x8] sm:$0xff]
        %v1191 = vld [vmem:[%s1188 + $0x10] sm:$0xff]
        %v1192 = vld [vmem:[%s1188 + $0x18] sm:$0xff]
        %v1193 = vld [vmem:[#allocation2] sm:$0xff]
        %v1194 = vpack.c.bf16 %v1193, %v1193
        %v1195 = vld [vmem:[%s1] sm:$0xff]
        %v1196 = vld [vmem:[%s1 + $0x8] sm:$0xff]
        %v1197 = vld [vmem:[%s1 + $0x10] sm:$0xff]
        %v1198 = vld [vmem:[%s1 + $0x18] sm:$0xff]
        %v1199 = vld [vmem:[%s1 + $0x20] sm:$0xff]
        %v1200 = vld [vmem:[%s1 + $0x28] sm:$0xff]
        %v1201 = vld [vmem:[%s1 + $0x30] sm:$0xff]
        %v1202 = vld [vmem:[%s1 + $0x38] sm:$0xff]
        %v1203 = vld [vmem:[%s1 + $0x40] sm:$0xff]
        %v1204 = vld [vmem:[%s1 + $0x48] sm:$0xff]
        %v1205 = vld [vmem:[%s1 + $0x50] sm:$0xff]
        %v1206 = vld [vmem:[%s1 + $0x58] sm:$0xff]
        %v1207 = vld [vmem:[%s1 + $0x60] sm:$0xff]
        %v1208 = vld [vmem:[%s1 + $0x68] sm:$0xff]
        %v1209 = vld [vmem:[%s1 + $0x70] sm:$0xff]
        %v1210 = vld [vmem:[%s1 + $0x78] sm:$0xff]
        %v1211 = vld [vmem:[%s1 + $0x80] sm:$0xff]
        %v1212 = vld [vmem:[%s1 + $0x88] sm:$0xff]
        %v1213 = vld [vmem:[%s1 + $0x90] sm:$0xff]
        %v1214 = vld [vmem:[%s1 + $0x98] sm:$0xff]
        %v1215 = vld [vmem:[%s1 + $0xa0] sm:$0xff]
        %v1216 = vld [vmem:[%s1 + $0xa8] sm:$0xff]
        %v1217 = vld [vmem:[%s1 + $0xb0] sm:$0xff]
        %v1218 = vld [vmem:[%s1 + $0xb8] sm:$0xff]
        %v1219 = vld [vmem:[%s1 + $0xc0] sm:$0xff]
        %v1220 = vld [vmem:[%s1 + $0xc8] sm:$0xff]
        %v1221 = vld [vmem:[%s1 + $0xd0] sm:$0xff]
        %v1222 = vld [vmem:[%s1 + $0xd8] sm:$0xff]
        %v1223 = vld [vmem:[%s1 + $0xe0] sm:$0xff]
        %v1224 = vld [vmem:[%s1 + $0xe8] sm:$0xff]
        %v1225 = vld [vmem:[%s1 + $0xf0] sm:$0xff]
        %v1226 = vld [vmem:[%s1 + $0xf8] sm:$0xff]
        %v1259 = vunpack.c.l.b16 %v1195
        %v1260 = vunpack.c.h.b16 %v1195
        %v1261 = vunpack.c.l.b16 %v1196
        %v1262 = vunpack.c.h.b16 %v1196
        %v1263 = vunpack.c.l.b16 %v1197
        %v1264 = vunpack.c.h.b16 %v1197
        %v1265 = vunpack.c.l.b16 %v1198
        %v1266 = vunpack.c.h.b16 %v1198
        %v1267 = vunpack.c.l.b16 %v1199
        %v1268 = vunpack.c.h.b16 %v1199
        %v1269 = vunpack.c.l.b16 %v1200
        %v1270 = vunpack.c.h.b16 %v1200
        %v1271 = vunpack.c.l.b16 %v1201
        %v1272 = vunpack.c.h.b16 %v1201
        %v1273 = vunpack.c.l.b16 %v1202
        %v1274 = vunpack.c.h.b16 %v1202
        %v1275 = vunpack.c.l.b16 %v1203
        %v1276 = vunpack.c.h.b16 %v1203
        %v1277 = vunpack.c.l.b16 %v1204
        %v1278 = vunpack.c.h.b16 %v1204
        %v1279 = vunpack.c.l.b16 %v1205
        %v1280 = vunpack.c.h.b16 %v1205
        %v1281 = vunpack.c.l.b16 %v1206
        %v1282 = vunpack.c.h.b16 %v1206
        %v1283 = vunpack.c.l.b16 %v1207
        %v1284 = vunpack.c.h.b16 %v1207
        %v1285 = vunpack.c.l.b16 %v1208
        %v1286 = vunpack.c.h.b16 %v1208
        %v1287 = vunpack.c.l.b16 %v1209
        %v1288 = vunpack.c.h.b16 %v1209
        %v1289 = vunpack.c.l.b16 %v1210
        %v1290 = vunpack.c.h.b16 %v1210
        %v1291 = vunpack.c.l.b16 %v1211
        %v1292 = vunpack.c.h.b16 %v1211
        %v1293 = vunpack.c.l.b16 %v1212
        %v1294 = vunpack.c.h.b16 %v1212
        %v1295 = vunpack.c.l.b16 %v1213
        %v1296 = vunpack.c.h.b16 %v1213
        %v1297 = vunpack.c.l.b16 %v1214
        %v1298 = vunpack.c.h.b16 %v1214
        %v1299 = vunpack.c.l.b16 %v1215
        %v1300 = vunpack.c.h.b16 %v1215
        %v1301 = vunpack.c.l.b16 %v1216
        %v1302 = vunpack.c.h.b16 %v1216
        %v1303 = vunpack.c.l.b16 %v1217
        %v1304 = vunpack.c.h.b16 %v1217
        %v1305 = vunpack.c.l.b16 %v1218
        %v1306 = vunpack.c.h.b16 %v1218
        %v1307 = vunpack.c.l.b16 %v1219
        %v1308 = vunpack.c.h.b16 %v1219
        %v1309 = vunpack.c.l.b16 %v1220
        %v1310 = vunpack.c.h.b16 %v1220
        %v1311 = vunpack.c.l.b16 %v1221
        %v1312 = vunpack.c.h.b16 %v1221
        %v1313 = vunpack.c.l.b16 %v1222
        %v1314 = vunpack.c.h.b16 %v1222
        %v1315 = vunpack.c.l.b16 %v1223
        %v1316 = vunpack.c.h.b16 %v1223
        %v1317 = vunpack.c.l.b16 %v1224
        %v1318 = vunpack.c.h.b16 %v1224
        %v1319 = vunpack.c.l.b16 %v1225
        %v1320 = vunpack.c.h.b16 %v1225
        %v1321 = vunpack.c.l.b16 %v1226
        %v1322 = vunpack.c.h.b16 %v1226
        %v1323 = vpack.c.b16 %v1263, %v1259
        %v1324 = vpack.c.b16 %v1264, %v1260
        %v1325 = vpack.c.b16 %v1265, %v1261
        %v1326 = vpack.c.b16 %v1266, %v1262
        %v1327 = vpack.c.b16 %v1271, %v1267
        %v1328 = vpack.c.b16 %v1272, %v1268
        %v1329 = vpack.c.b16 %v1273, %v1269
        %v1330 = vpack.c.b16 %v1274, %v1270
        %v1331 = vpack.c.b16 %v1279, %v1275
        %v1332 = vpack.c.b16 %v1280, %v1276
        %v1333 = vpack.c.b16 %v1281, %v1277
        %v1334 = vpack.c.b16 %v1282, %v1278
        %v1335 = vpack.c.b16 %v1287, %v1283
        %v1336 = vpack.c.b16 %v1288, %v1284
        %v1337 = vpack.c.b16 %v1289, %v1285
        %v1338 = vpack.c.b16 %v1290, %v1286
        %v1339 = vpack.c.b16 %v1295, %v1291
        %v1340 = vpack.c.b16 %v1296, %v1292
        %v1341 = vpack.c.b16 %v1297, %v1293
        %v1342 = vpack.c.b16 %v1298, %v1294
        %v1343 = vpack.c.b16 %v1303, %v1299
        %v1344 = vpack.c.b16 %v1304, %v1300
        %v1345 = vpack.c.b16 %v1305, %v1301
        %v1346 = vpack.c.b16 %v1306, %v1302
        %v1347 = vpack.c.b16 %v1311, %v1307
        %v1348 = vpack.c.b16 %v1312, %v1308
        %v1349 = vpack.c.b16 %v1313, %v1309
        %v1350 = vpack.c.b16 %v1314, %v1310
        %v1351 = vpack.c.b16 %v1319, %v1315
        %v1352 = vpack.c.b16 %v1320, %v1316
        %v1353 = vpack.c.b16 %v1321, %v1317
        %v1354 = vpack.c.b16 %v1322, %v1318
        %1387 = vmatprep.subr.bf16.mxu0 %v1352
        %1388 = vmatpush1.bf16.msra.mxu0 %v1351
        %1389 = vmatprep.subr.bf16.mxu0 %v1348
        %1390 = vmatpush1.bf16.msra.mxu0 %v1347
        %1391 = vmatprep.subr.bf16.mxu0 %v1344
        %1392 = vmatpush1.bf16.msra.mxu0 %v1343
        %1393 = vmatprep.subr.bf16.mxu0 %v1340
        %1394 = vmatpush1.bf16.msra.mxu0 %v1339
        %1395 = vmatprep.subr.bf16.mxu0 %v1336
        %1396 = vmatpush1.bf16.msra.mxu0 %v1335
        %1397 = vmatprep.subr.bf16.mxu0 %v1332
        %1398 = vmatpush1.bf16.msra.mxu0 %v1331
        %1399 = vmatprep.subr.bf16.mxu0 %v1328
        %1400 = vmatpush1.bf16.msra.mxu0 %v1327
        %1401 = vmatprep.subr.bf16.mxu0 %v1324
        %1402 = vmatpush1.bf16.msra.mxu0 %v1323
        %1403 = vmatprep.subr.bf16.mxu0 0
        %1404 = vmatpush2.bf16.msra.mxu0 0
        %1405 = vmatprep.subr.bf16.mxu0 0
        %1406 = vmatpush2.bf16.msra.mxu0 0
        %1407 = vmatprep.subr.bf16.mxu0 0
        %1408 = vmatpush2.bf16.msra.mxu0 0
        %1409 = vmatprep.subr.bf16.mxu0 0
        %1410 = vmatpush2.bf16.msra.mxu0 0
        %1411 = vmatprep.subr.bf16.mxu0 0
        %1412 = vmatpush2.bf16.msra.mxu0 0
        %1413 = vmatprep.subr.bf16.mxu0 0
        %1414 = vmatpush2.bf16.msra.mxu0 0
        %1415 = vmatprep.subr.bf16.mxu0 0
        %1416 = vmatpush2.bf16.msra.mxu0 0
        %1417 = vmatprep.subr.bf16.mxu0 0
        %1418 = vmatpush2.bf16.msra.mxu0 0
        %1419 = vmatprep.mubr.bf16.mxu0 0
        %1420 = vmatmul.mubr.bf16.gmra.mxu0 %v1194
        %v1421 = vpop.f32.mrf.mxu0
        %v1422 = vadd.f32 0.0, %v1421
        %v1423 = vpop.f32.mrf.mxu0
        %v1424 = vadd.f32 0.0, %v1423
        %v1425 = vpop.f32.mrf.mxu0
        %v1426 = vpop.f32.mrf.mxu0
        %1427 = vdwg.mxu0
        %1428 = vmatprep.subr.bf16.mxu0 %v1354
        %1429 = vmatpush1.bf16.msra.mxu0 %v1353
        %1430 = vmatprep.subr.bf16.mxu0 %v1350
        %1431 = vmatpush1.bf16.msra.mxu0 %v1349
        %1432 = vmatprep.subr.bf16.mxu0 %v1346
        %1433 = vmatpush1.bf16.msra.mxu0 %v1345
        %1434 = vmatprep.subr.bf16.mxu0 %v1342
        %1435 = vmatpush1.bf16.msra.mxu0 %v1341
        %1436 = vmatprep.subr.bf16.mxu0 %v1338
        %1437 = vmatpush1.bf16.msra.mxu0 %v1337
        %1438 = vmatprep.subr.bf16.mxu0 %v1334
        %1439 = vmatpush1.bf16.msra.mxu0 %v1333
        %1440 = vmatprep.subr.bf16.mxu0 %v1330
        %1441 = vmatpush1.bf16.msra.mxu0 %v1329
        %1442 = vmatprep.subr.bf16.mxu0 %v1326
        %1443 = vmatpush1.bf16.msra.mxu0 %v1325
        %1444 = vmatprep.subr.bf16.mxu0 0
        %1445 = vmatpush2.bf16.msra.mxu0 0
        %1446 = vmatprep.subr.bf16.mxu0 0
        %1447 = vmatpush2.bf16.msra.mxu0 0
        %1448 = vmatprep.subr.bf16.mxu0 0
        %1449 = vmatpush2.bf16.msra.mxu0 0
        %1450 = vmatprep.subr.bf16.mxu0 0
        %1451 = vmatpush2.bf16.msra.mxu0 0
        %1452 = vmatprep.subr.bf16.mxu0 0
        %1453 = vmatpush2.bf16.msra.mxu0 0
        %1454 = vmatprep.subr.bf16.mxu0 0
        %1455 = vmatpush2.bf16.msra.mxu0 0
        %1456 = vmatprep.subr.bf16.mxu0 0
        %1457 = vmatpush2.bf16.msra.mxu0 0
        %1458 = vmatprep.subr.bf16.mxu0 0
        %1459 = vmatpush2.bf16.msra.mxu0 0
        %1460 = vmatprep.mubr.bf16.mxu0 0
        %1461 = vmatmul.mubr.bf16.gmra.mxu0 %v1194
        %v1462 = vpop.f32.mrf.mxu0
        %v1463 = vadd.f32 0.0, %v1462
        %v1464 = vpop.f32.mrf.mxu0
        %v1465 = vadd.f32 0.0, %v1464
        %v1466 = vpop.f32.mrf.mxu0
        %v1467 = vpop.f32.mrf.mxu0
        %1468 = vdwg.mxu0
        %v1469 = vadd.f32 %v1189, %v1422
        %v1470 = vadd.f32 %v1190, %v1424
        %v1471 = vadd.f32 %v1191, %v1463
        %v1472 = vadd.f32 %v1192, %v1465
        %v1473 = vxor.u32 %v1469, 2147483648
        %v1474 = vmul.f32 %v1473, 1.442695
        %v1475 = vpow.pop %v1474
        %v1476 = vadd.f32 %v1475, 1.0
        %v1477 = vrcp.pop %v1476
        %v1478 = vmul.f32 1.0, %v1477
        %v1479 = vxor.u32 %v1470, 2147483648
        %v1480 = vmul.f32 %v1479, 1.442695
        %v1481 = vpow.pop %v1480
        %v1482 = vadd.f32 %v1481, 1.0
        %v1483 = vrcp.pop %v1482
        %v1484 = vmul.f32 1.0, %v1483
        %v1485 = vtanh.pop %v1471
        %v1486 = vxor.u32 %v1472, 2147483648
        %v1487 = vmul.f32 %v1486, 1.442695
        %v1488 = vpow.pop %v1487
        %v1489 = vadd.f32 %v1488, 1.0
        %v1490 = vrcp.pop %v1489
        %v1491 = vmul.f32 1.0, %v1490
        %v1492 = vld [vmem:[#allocation3] sm:$0xff]
        %v1493 = vmul.f32 %v1484, %v1492
        %v1494 = vmul.f32 %v1478, %v1485
        %v1495 = vadd.f32 %v1493, %v1494
        %v1496 = vtanh.pop %v1495
        %v1497 = vmul.f32 %v1491, %v1496
        %1498 = vst [vmem:[#allocation3] sm:$0xff] %v1495
        %1499 = vst [vmem:[#allocation2] sm:$0xff] %v1497
        %s1500 = scalar_lea.vmem %s238, 24 [#allocation5]
        %1501 = vst [vmem:[%s1500] sm:$0xff] %v1497
        %s1502 = scalar_lea.vmem %s221, 128 [#allocation4]
        %v1503 = vld [vmem:[%s1502] sm:$0xff]
        %v1504 = vld [vmem:[%s1502 + $0x8] sm:$0xff]
        %v1505 = vld [vmem:[%s1502 + $0x10] sm:$0xff]
        %v1506 = vld [vmem:[%s1502 + $0x18] sm:$0xff]
        %v1507 = vld [vmem:[#allocation2] sm:$0xff]
        %v1508 = vpack.c.bf16 %v1507, %v1507
        %v1509 = vld [vmem:[%s1] sm:$0xff]
        %v1510 = vld [vmem:[%s1 + $0x8] sm:$0xff]
        %v1511 = vld [vmem:[%s1 + $0x10] sm:$0xff]
        %v1512 = vld [vmem:[%s1 + $0x18] sm:$0xff]
        %v1513 = vld [vmem:[%s1 + $0x20] sm:$0xff]
        %v1514 = vld [vmem:[%s1 + $0x28] sm:$0xff]
        %v1515 = vld [vmem:[%s1 + $0x30] sm:$0xff]
        %v1516 = vld [vmem:[%s1 + $0x38] sm:$0xff]
        %v1517 = vld [vmem:[%s1 + $0x40] sm:$0xff]
        %v1518 = vld [vmem:[%s1 + $0x48] sm:$0xff]
        %v1519 = vld [vmem:[%s1 + $0x50] sm:$0xff]
        %v1520 = vld [vmem:[%s1 + $0x58] sm:$0xff]
        %v1521 = vld [vmem:[%s1 + $0x60] sm:$0xff]
        %v1522 = vld [vmem:[%s1 + $0x68] sm:$0xff]
        %v1523 = vld [vmem:[%s1 + $0x70] sm:$0xff]
        %v1524 = vld [vmem:[%s1 + $0x78] sm:$0xff]
        %v1525 = vld [vmem:[%s1 + $0x80] sm:$0xff]
        %v1526 = vld [vmem:[%s1 + $0x88] sm:$0xff]
        %v1527 = vld [vmem:[%s1 + $0x90] sm:$0xff]
        %v1528 = vld [vmem:[%s1 + $0x98] sm:$0xff]
        %v1529 = vld [vmem:[%s1 + $0xa0] sm:$0xff]
        %v1530 = vld [vmem:[%s1 + $0xa8] sm:$0xff]
        %v1531 = vld [vmem:[%s1 + $0xb0] sm:$0xff]
        %v1532 = vld [vmem:[%s1 + $0xb8] sm:$0xff]
        %v1533 = vld [vmem:[%s1 + $0xc0] sm:$0xff]
        %v1534 = vld [vmem:[%s1 + $0xc8] sm:$0xff]
        %v1535 = vld [vmem:[%s1 + $0xd0] sm:$0xff]
        %v1536 = vld [vmem:[%s1 + $0xd8] sm:$0xff]
        %v1537 = vld [vmem:[%s1 + $0xe0] sm:$0xff]
        %v1538 = vld [vmem:[%s1 + $0xe8] sm:$0xff]
        %v1539 = vld [vmem:[%s1 + $0xf0] sm:$0xff]
        %v1540 = vld [vmem:[%s1 + $0xf8] sm:$0xff]
        %v1573 = vunpack.c.l.b16 %v1509
        %v1574 = vunpack.c.h.b16 %v1509
        %v1575 = vunpack.c.l.b16 %v1510
        %v1576 = vunpack.c.h.b16 %v1510
        %v1577 = vunpack.c.l.b16 %v1511
        %v1578 = vunpack.c.h.b16 %v1511
        %v1579 = vunpack.c.l.b16 %v1512
        %v1580 = vunpack.c.h.b16 %v1512
        %v1581 = vunpack.c.l.b16 %v1513
        %v1582 = vunpack.c.h.b16 %v1513
        %v1583 = vunpack.c.l.b16 %v1514
        %v1584 = vunpack.c.h.b16 %v1514
        %v1585 = vunpack.c.l.b16 %v1515
        %v1586 = vunpack.c.h.b16 %v1515
        %v1587 = vunpack.c.l.b16 %v1516
        %v1588 = vunpack.c.h.b16 %v1516
        %v1589 = vunpack.c.l.b16 %v1517
        %v1590 = vunpack.c.h.b16 %v1517
        %v1591 = vunpack.c.l.b16 %v1518
        %v1592 = vunpack.c.h.b16 %v1518
        %v1593 = vunpack.c.l.b16 %v1519
        %v1594 = vunpack.c.h.b16 %v1519
        %v1595 = vunpack.c.l.b16 %v1520
        %v1596 = vunpack.c.h.b16 %v1520
        %v1597 = vunpack.c.l.b16 %v1521
        %v1598 = vunpack.c.h.b16 %v1521
        %v1599 = vunpack.c.l.b16 %v1522
        %v1600 = vunpack.c.h.b16 %v1522
        %v1601 = vunpack.c.l.b16 %v1523
        %v1602 = vunpack.c.h.b16 %v1523
        %v1603 = vunpack.c.l.b16 %v1524
        %v1604 = vunpack.c.h.b16 %v1524
        %v1605 = vunpack.c.l.b16 %v1525
        %v1606 = vunpack.c.h.b16 %v1525
        %v1607 = vunpack.c.l.b16 %v1526
        %v1608 = vunpack.c.h.b16 %v1526
        %v1609 = vunpack.c.l.b16 %v1527
        %v1610 = vunpack.c.h.b16 %v1527
        %v1611 = vunpack.c.l.b16 %v1528
        %v1612 = vunpack.c.h.b16 %v1528
        %v1613 = vunpack.c.l.b16 %v1529
        %v1614 = vunpack.c.h.b16 %v1529
        %v1615 = vunpack.c.l.b16 %v1530
        %v1616 = vunpack.c.h.b16 %v1530
        %v1617 = vunpack.c.l.b16 %v1531
        %v1618 = vunpack.c.h.b16 %v1531
        %v1619 = vunpack.c.l.b16 %v1532
        %v1620 = vunpack.c.h.b16 %v1532
        %v1621 = vunpack.c.l.b16 %v1533
        %v1622 = vunpack.c.h.b16 %v1533
        %v1623 = vunpack.c.l.b16 %v1534
        %v1624 = vunpack.c.h.b16 %v1534
        %v1625 = vunpack.c.l.b16 %v1535
        %v1626 = vunpack.c.h.b16 %v1535
        %v1627 = vunpack.c.l.b16 %v1536
        %v1628 = vunpack.c.h.b16 %v1536
        %v1629 = vunpack.c.l.b16 %v1537
        %v1630 = vunpack.c.h.b16 %v1537
        %v1631 = vunpack.c.l.b16 %v1538
        %v1632 = vunpack.c.h.b16 %v1538
        %v1633 = vunpack.c.l.b16 %v1539
        %v1634 = vunpack.c.h.b16 %v1539
        %v1635 = vunpack.c.l.b16 %v1540
        %v1636 = vunpack.c.h.b16 %v1540
        %v1637 = vpack.c.b16 %v1577, %v1573
        %v1638 = vpack.c.b16 %v1578, %v1574
        %v1639 = vpack.c.b16 %v1579, %v1575
        %v1640 = vpack.c.b16 %v1580, %v1576
        %v1641 = vpack.c.b16 %v1585, %v1581
        %v1642 = vpack.c.b16 %v1586, %v1582
        %v1643 = vpack.c.b16 %v1587, %v1583
        %v1644 = vpack.c.b16 %v1588, %v1584
        %v1645 = vpack.c.b16 %v1593, %v1589
        %v1646 = vpack.c.b16 %v1594, %v1590
        %v1647 = vpack.c.b16 %v1595, %v1591
        %v1648 = vpack.c.b16 %v1596, %v1592
        %v1649 = vpack.c.b16 %v1601, %v1597
        %v1650 = vpack.c.b16 %v1602, %v1598
        %v1651 = vpack.c.b16 %v1603, %v1599
        %v1652 = vpack.c.b16 %v1604, %v1600
        %v1653 = vpack.c.b16 %v1609, %v1605
        %v1654 = vpack.c.b16 %v1610, %v1606
        %v1655 = vpack.c.b16 %v1611, %v1607
        %v1656 = vpack.c.b16 %v1612, %v1608
        %v1657 = vpack.c.b16 %v1617, %v1613
        %v1658 = vpack.c.b16 %v1618, %v1614
        %v1659 = vpack.c.b16 %v1619, %v1615
        %v1660 = vpack.c.b16 %v1620, %v1616
        %v1661 = vpack.c.b16 %v1625, %v1621
        %v1662 = vpack.c.b16 %v1626, %v1622
        %v1663 = vpack.c.b16 %v1627, %v1623
        %v1664 = vpack.c.b16 %v1628, %v1624
        %v1665 = vpack.c.b16 %v1633, %v1629
        %v1666 = vpack.c.b16 %v1634, %v1630
        %v1667 = vpack.c.b16 %v1635, %v1631
        %v1668 = vpack.c.b16 %v1636, %v1632
        %1701 = vmatprep.subr.bf16.mxu0 %v1666
        %1702 = vmatpush1.bf16.msra.mxu0 %v1665
        %1703 = vmatprep.subr.bf16.mxu0 %v1662
        %1704 = vmatpush1.bf16.msra.mxu0 %v1661
        %1705 = vmatprep.subr.bf16.mxu0 %v1658
        %1706 = vmatpush1.bf16.msra.mxu0 %v1657
        %1707 = vmatprep.subr.bf16.mxu0 %v1654
        %1708 = vmatpush1.bf16.msra.mxu0 %v1653
        %1709 = vmatprep.subr.bf16.mxu0 %v1650
        %1710 = vmatpush1.bf16.msra.mxu0 %v1649
        %1711 = vmatprep.subr.bf16.mxu0 %v1646
        %1712 = vmatpush1.bf16.msra.mxu0 %v1645
        %1713 = vmatprep.subr.bf16.mxu0 %v1642
        %1714 = vmatpush1.bf16.msra.mxu0 %v1641
        %1715 = vmatprep.subr.bf16.mxu0 %v1638
        %1716 = vmatpush1.bf16.msra.mxu0 %v1637
        %1717 = vmatprep.subr.bf16.mxu0 0
        %1718 = vmatpush2.bf16.msra.mxu0 0
        %1719 = vmatprep.subr.bf16.mxu0 0
        %1720 = vmatpush2.bf16.msra.mxu0 0
        %1721 = vmatprep.subr.bf16.mxu0 0
        %1722 = vmatpush2.bf16.msra.mxu0 0
        %1723 = vmatprep.subr.bf16.mxu0 0
        %1724 = vmatpush2.bf16.msra.mxu0 0
        %1725 = vmatprep.subr.bf16.mxu0 0
        %1726 = vmatpush2.bf16.msra.mxu0 0
        %1727 = vmatprep.subr.bf16.mxu0 0
        %1728 = vmatpush2.bf16.msra.mxu0 0
        %1729 = vmatprep.subr.bf16.mxu0 0
        %1730 = vmatpush2.bf16.msra.mxu0 0
        %1731 = vmatprep.subr.bf16.mxu0 0
        %1732 = vmatpush2.bf16.msra.mxu0 0
        %1733 = vmatprep.mubr.bf16.mxu0 0
        %1734 = vmatmul.mubr.bf16.gmra.mxu0 %v1508
        %v1735 = vpop.f32.mrf.mxu0
        %v1736 = vadd.f32 0.0, %v1735
        %v1737 = vpop.f32.mrf.mxu0
        %v1738 = vadd.f32 0.0, %v1737
        %v1739 = vpop.f32.mrf.mxu0
        %v1740 = vpop.f32.mrf.mxu0
        %1741 = vdwg.mxu0
        %1742 = vmatprep.subr.bf16.mxu0 %v1668
        %1743 = vmatpush1.bf16.msra.mxu0 %v1667
        %1744 = vmatprep.subr.bf16.mxu0 %v1664
        %1745 = vmatpush1.bf16.msra.mxu0 %v1663
        %1746 = vmatprep.subr.bf16.mxu0 %v1660
        %1747 = vmatpush1.bf16.msra.mxu0 %v1659
        %1748 = vmatprep.subr.bf16.mxu0 %v1656
        %1749 = vmatpush1.bf16.msra.mxu0 %v1655
        %1750 = vmatprep.subr.bf16.mxu0 %v1652
        %1751 = vmatpush1.bf16.msra.mxu0 %v1651
        %1752 = vmatprep.subr.bf16.mxu0 %v1648
        %1753 = vmatpush1.bf16.msra.mxu0 %v1647
        %1754 = vmatprep.subr.bf16.mxu0 %v1644
        %1755 = vmatpush1.bf16.msra.mxu0 %v1643
        %1756 = vmatprep.subr.bf16.mxu0 %v1640
        %1757 = vmatpush1.bf16.msra.mxu0 %v1639
        %1758 = vmatprep.subr.bf16.mxu0 0
        %1759 = vmatpush2.bf16.msra.mxu0 0
        %1760 = vmatprep.subr.bf16.mxu0 0
        %1761 = vmatpush2.bf16.msra.mxu0 0
        %1762 = vmatprep.subr.bf16.mxu0 0
        %1763 = vmatpush2.bf16.msra.mxu0 0
        %1764 = vmatprep.subr.bf16.mxu0 0
        %1765 = vmatpush2.bf16.msra.mxu0 0
        %1766 = vmatprep.subr.bf16.mxu0 0
        %1767 = vmatpush2.bf16.msra.mxu0 0
        %1768 = vmatprep.subr.bf16.mxu0 0
        %1769 = vmatpush2.bf16.msra.mxu0 0
        %1770 = vmatprep.subr.bf16.mxu0 0
        %1771 = vmatpush2.bf16.msra.mxu0 0
        %1772 = vmatprep.subr.bf16.mxu0 0
        %1773 = vmatpush2.bf16.msra.mxu0 0
        %1774 = vmatprep.mubr.bf16.mxu0 0
        %1775 = vmatmul.mubr.bf16.gmra.mxu0 %v1508
        %v1776 = vpop.f32.mrf.mxu0
        %v1777 = vadd.f32 0.0, %v1776
        %v1778 = vpop.f32.mrf.mxu0
        %v1779 = vadd.f32 0.0, %v1778
        %v1780 = vpop.f32.mrf.mxu0
        %v1781 = vpop.f32.mrf.mxu0
        %1782 = vdwg.mxu0
        %v1783 = vadd.f32 %v1503, %v1736
        %v1784 = vadd.f32 %v1504, %v1738
        %v1785 = vadd.f32 %v1505, %v1777
        %v1786 = vadd.f32 %v1506, %v1779
        %v1787 = vxor.u32 %v1783, 2147483648
        %v1788 = vmul.f32 %v1787, 1.442695
        %v1789 = vpow.pop %v1788
        %v1790 = vadd.f32 %v1789, 1.0
        %v1791 = vrcp.pop %v1790
        %v1792 = vmul.f32 1.0, %v1791
        %v1793 = vxor.u32 %v1784, 2147483648
        %v1794 = vmul.f32 %v1793, 1.442695
        %v1795 = vpow.pop %v1794
        %v1796 = vadd.f32 %v1795, 1.0
        %v1797 = vrcp.pop %v1796
        %v1798 = vmul.f32 1.0, %v1797
        %v1799 = vtanh.pop %v1785
        %v1800 = vxor.u32 %v1786, 2147483648
        %v1801 = vmul.f32 %v1800, 1.442695
        %v1802 = vpow.pop %v1801
        %v1803 = vadd.f32 %v1802, 1.0
        %v1804 = vrcp.pop %v1803
        %v1805 = vmul.f32 1.0, %v1804
        %v1806 = vld [vmem:[#allocation3] sm:$0xff]
        %v1807 = vmul.f32 %v1798, %v1806
        %v1808 = vmul.f32 %v1792, %v1799
        %v1809 = vadd.f32 %v1807, %v1808
        %v1810 = vtanh.pop %v1809
        %v1811 = vmul.f32 %v1805, %v1810
        %1812 = vst [vmem:[#allocation3] sm:$0xff] %v1809
        %1813 = vst [vmem:[#allocation2] sm:$0xff] %v1811
        %s1814 = scalar_lea.vmem %s238, 32 [#allocation5]
        %1815 = vst [vmem:[%s1814] sm:$0xff] %v1811
        %s1816 = scalar_lea.vmem %s221, 160 [#allocation4]
        %v1817 = vld [vmem:[%s1816] sm:$0xff]
        %v1818 = vld [vmem:[%s1816 + $0x8] sm:$0xff]
        %v1819 = vld [vmem:[%s1816 + $0x10] sm:$0xff]
        %v1820 = vld [vmem:[%s1816 + $0x18] sm:$0xff]
        %v1821 = vld [vmem:[#allocation2] sm:$0xff]
        %v1822 = vpack.c.bf16 %v1821, %v1821
        %v1823 = vld [vmem:[%s1] sm:$0xff]
        %v1824 = vld [vmem:[%s1 + $0x8] sm:$0xff]
        %v1825 = vld [vmem:[%s1 + $0x10] sm:$0xff]
        %v1826 = vld [vmem:[%s1 + $0x18] sm:$0xff]
        %v1827 = vld [vmem:[%s1 + $0x20] sm:$0xff]
        %v1828 = vld [vmem:[%s1 + $0x28] sm:$0xff]
        %v1829 = vld [vmem:[%s1 + $0x30] sm:$0xff]
        %v1830 = vld [vmem:[%s1 + $0x38] sm:$0xff]
        %v1831 = vld [vmem:[%s1 + $0x40] sm:$0xff]
        %v1832 = vld [vmem:[%s1 + $0x48] sm:$0xff]
        %v1833 = vld [vmem:[%s1 + $0x50] sm:$0xff]
        %v1834 = vld [vmem:[%s1 + $0x58] sm:$0xff]
        %v1835 = vld [vmem:[%s1 + $0x60] sm:$0xff]
        %v1836 = vld [vmem:[%s1 + $0x68] sm:$0xff]
        %v1837 = vld [vmem:[%s1 + $0x70] sm:$0xff]
        %v1838 = vld [vmem:[%s1 + $0x78] sm:$0xff]
        %v1839 = vld [vmem:[%s1 + $0x80] sm:$0xff]
        %v1840 = vld [vmem:[%s1 + $0x88] sm:$0xff]
        %v1841 = vld [vmem:[%s1 + $0x90] sm:$0xff]
        %v1842 = vld [vmem:[%s1 + $0x98] sm:$0xff]
        %v1843 = vld [vmem:[%s1 + $0xa0] sm:$0xff]
        %v1844 = vld [vmem:[%s1 + $0xa8] sm:$0xff]
        %v1845 = vld [vmem:[%s1 + $0xb0] sm:$0xff]
        %v1846 = vld [vmem:[%s1 + $0xb8] sm:$0xff]
        %v1847 = vld [vmem:[%s1 + $0xc0] sm:$0xff]
        %v1848 = vld [vmem:[%s1 + $0xc8] sm:$0xff]
        %v1849 = vld [vmem:[%s1 + $0xd0] sm:$0xff]
        %v1850 = vld [vmem:[%s1 + $0xd8] sm:$0xff]
        %v1851 = vld [vmem:[%s1 + $0xe0] sm:$0xff]
        %v1852 = vld [vmem:[%s1 + $0xe8] sm:$0xff]
        %v1853 = vld [vmem:[%s1 + $0xf0] sm:$0xff]
        %v1854 = vld [vmem:[%s1 + $0xf8] sm:$0xff]
        %v1887 = vunpack.c.l.b16 %v1823
        %v1888 = vunpack.c.h.b16 %v1823
        %v1889 = vunpack.c.l.b16 %v1824
        %v1890 = vunpack.c.h.b16 %v1824
        %v1891 = vunpack.c.l.b16 %v1825
        %v1892 = vunpack.c.h.b16 %v1825
        %v1893 = vunpack.c.l.b16 %v1826
        %v1894 = vunpack.c.h.b16 %v1826
        %v1895 = vunpack.c.l.b16 %v1827
        %v1896 = vunpack.c.h.b16 %v1827
        %v1897 = vunpack.c.l.b16 %v1828
        %v1898 = vunpack.c.h.b16 %v1828
        %v1899 = vunpack.c.l.b16 %v1829
        %v1900 = vunpack.c.h.b16 %v1829
        %v1901 = vunpack.c.l.b16 %v1830
        %v1902 = vunpack.c.h.b16 %v1830
        %v1903 = vunpack.c.l.b16 %v1831
        %v1904 = vunpack.c.h.b16 %v1831
        %v1905 = vunpack.c.l.b16 %v1832
        %v1906 = vunpack.c.h.b16 %v1832
        %v1907 = vunpack.c.l.b16 %v1833
        %v1908 = vunpack.c.h.b16 %v1833
        %v1909 = vunpack.c.l.b16 %v1834
        %v1910 = vunpack.c.h.b16 %v1834
        %v1911 = vunpack.c.l.b16 %v1835
        %v1912 = vunpack.c.h.b16 %v1835
        %v1913 = vunpack.c.l.b16 %v1836
        %v1914 = vunpack.c.h.b16 %v1836
        %v1915 = vunpack.c.l.b16 %v1837
        %v1916 = vunpack.c.h.b16 %v1837
        %v1917 = vunpack.c.l.b16 %v1838
        %v1918 = vunpack.c.h.b16 %v1838
        %v1919 = vunpack.c.l.b16 %v1839
        %v1920 = vunpack.c.h.b16 %v1839
        %v1921 = vunpack.c.l.b16 %v1840
        %v1922 = vunpack.c.h.b16 %v1840
        %v1923 = vunpack.c.l.b16 %v1841
        %v1924 = vunpack.c.h.b16 %v1841
        %v1925 = vunpack.c.l.b16 %v1842
        %v1926 = vunpack.c.h.b16 %v1842
        %v1927 = vunpack.c.l.b16 %v1843
        %v1928 = vunpack.c.h.b16 %v1843
        %v1929 = vunpack.c.l.b16 %v1844
        %v1930 = vunpack.c.h.b16 %v1844
        %v1931 = vunpack.c.l.b16 %v1845
        %v1932 = vunpack.c.h.b16 %v1845
        %v1933 = vunpack.c.l.b16 %v1846
        %v1934 = vunpack.c.h.b16 %v1846
        %v1935 = vunpack.c.l.b16 %v1847
        %v1936 = vunpack.c.h.b16 %v1847
        %v1937 = vunpack.c.l.b16 %v1848
        %v1938 = vunpack.c.h.b16 %v1848
        %v1939 = vunpack.c.l.b16 %v1849
        %v1940 = vunpack.c.h.b16 %v1849
        %v1941 = vunpack.c.l.b16 %v1850
        %v1942 = vunpack.c.h.b16 %v1850
        %v1943 = vunpack.c.l.b16 %v1851
        %v1944 = vunpack.c.h.b16 %v1851
        %v1945 = vunpack.c.l.b16 %v1852
        %v1946 = vunpack.c.h.b16 %v1852
        %v1947 = vunpack.c.l.b16 %v1853
        %v1948 = vunpack.c.h.b16 %v1853
        %v1949 = vunpack.c.l.b16 %v1854
        %v1950 = vunpack.c.h.b16 %v1854
        %v1951 = vpack.c.b16 %v1891, %v1887
        %v1952 = vpack.c.b16 %v1892, %v1888
        %v1953 = vpack.c.b16 %v1893, %v1889
        %v1954 = vpack.c.b16 %v1894, %v1890
        %v1955 = vpack.c.b16 %v1899, %v1895
        %v1956 = vpack.c.b16 %v1900, %v1896
        %v1957 = vpack.c.b16 %v1901, %v1897
        %v1958 = vpack.c.b16 %v1902, %v1898
        %v1959 = vpack.c.b16 %v1907, %v1903
        %v1960 = vpack.c.b16 %v1908, %v1904
        %v1961 = vpack.c.b16 %v1909, %v1905
        %v1962 = vpack.c.b16 %v1910, %v1906
        %v1963 = vpack.c.b16 %v1915, %v1911
        %v1964 = vpack.c.b16 %v1916, %v1912
        %v1965 = vpack.c.b16 %v1917, %v1913
        %v1966 = vpack.c.b16 %v1918, %v1914
        %v1967 = vpack.c.b16 %v1923, %v1919
        %v1968 = vpack.c.b16 %v1924, %v1920
        %v1969 = vpack.c.b16 %v1925, %v1921
        %v1970 = vpack.c.b16 %v1926, %v1922
        %v1971 = vpack.c.b16 %v1931, %v1927
        %v1972 = vpack.c.b16 %v1932, %v1928
        %v1973 = vpack.c.b16 %v1933, %v1929
        %v1974 = vpack.c.b16 %v1934, %v1930
        %v1975 = vpack.c.b16 %v1939, %v1935
        %v1976 = vpack.c.b16 %v1940, %v1936
        %v1977 = vpack.c.b16 %v1941, %v1937
        %v1978 = vpack.c.b16 %v1942, %v1938
        %v1979 = vpack.c.b16 %v1947, %v1943
        %v1980 = vpack.c.b16 %v1948, %v1944
        %v1981 = vpack.c.b16 %v1949, %v1945
        %v1982 = vpack.c.b16 %v1950, %v1946
        %2015 = vmatprep.subr.bf16.mxu0 %v1980
        %2016 = vmatpush1.bf16.msra.mxu0 %v1979
        %2017 = vmatprep.subr.bf16.mxu0 %v1976
        %2018 = vmatpush1.bf16.msra.mxu0 %v1975
        %2019 = vmatprep.subr.bf16.mxu0 %v1972
        %2020 = vmatpush1.bf16.msra.mxu0 %v1971
        %2021 = vmatprep.subr.bf16.mxu0 %v1968
        %2022 = vmatpush1.bf16.msra.mxu0 %v1967
        %2023 = vmatprep.subr.bf16.mxu0 %v1964
        %2024 = vmatpush1.bf16.msra.mxu0 %v1963
        %2025 = vmatprep.subr.bf16.mxu0 %v1960
        %2026 = vmatpush1.bf16.msra.mxu0 %v1959
        %2027 = vmatprep.subr.bf16.mxu0 %v1956
        %2028 = vmatpush1.bf16.msra.mxu0 %v1955
        %2029 = vmatprep.subr.bf16.mxu0 %v1952
        %2030 = vmatpush1.bf16.msra.mxu0 %v1951
        %2031 = vmatprep.subr.bf16.mxu0 0
        %2032 = vmatpush2.bf16.msra.mxu0 0
        %2033 = vmatprep.subr.bf16.mxu0 0
        %2034 = vmatpush2.bf16.msra.mxu0 0
        %2035 = vmatprep.subr.bf16.mxu0 0
        %2036 = vmatpush2.bf16.msra.mxu0 0
        %2037 = vmatprep.subr.bf16.mxu0 0
        %2038 = vmatpush2.bf16.msra.mxu0 0
        %2039 = vmatprep.subr.bf16.mxu0 0
        %2040 = vmatpush2.bf16.msra.mxu0 0
        %2041 = vmatprep.subr.bf16.mxu0 0
        %2042 = vmatpush2.bf16.msra.mxu0 0
        %2043 = vmatprep.subr.bf16.mxu0 0
        %2044 = vmatpush2.bf16.msra.mxu0 0
        %2045 = vmatprep.subr.bf16.mxu0 0
        %2046 = vmatpush2.bf16.msra.mxu0 0
        %2047 = vmatprep.mubr.bf16.mxu0 0
        %2048 = vmatmul.mubr.bf16.gmra.mxu0 %v1822
        %v2049 = vpop.f32.mrf.mxu0
        %v2050 = vadd.f32 0.0, %v2049
        %v2051 = vpop.f32.mrf.mxu0
        %v2052 = vadd.f32 0.0, %v2051
        %v2053 = vpop.f32.mrf.mxu0
        %v2054 = vpop.f32.mrf.mxu0
        %2055 = vdwg.mxu0
        %2056 = vmatprep.subr.bf16.mxu0 %v1982
        %2057 = vmatpush1.bf16.msra.mxu0 %v1981
        %2058 = vmatprep.subr.bf16.mxu0 %v1978
        %2059 = vmatpush1.bf16.msra.mxu0 %v1977
        %2060 = vmatprep.subr.bf16.mxu0 %v1974
        %2061 = vmatpush1.bf16.msra.mxu0 %v1973
        %2062 = vmatprep.subr.bf16.mxu0 %v1970
        %2063 = vmatpush1.bf16.msra.mxu0 %v1969
        %2064 = vmatprep.subr.bf16.mxu0 %v1966
        %2065 = vmatpush1.bf16.msra.mxu0 %v1965
        %2066 = vmatprep.subr.bf16.mxu0 %v1962
        %2067 = vmatpush1.bf16.msra.mxu0 %v1961
        %2068 = vmatprep.subr.bf16.mxu0 %v1958
        %2069 = vmatpush1.bf16.msra.mxu0 %v1957
        %2070 = vmatprep.subr.bf16.mxu0 %v1954
        %2071 = vmatpush1.bf16.msra.mxu0 %v1953
        %2072 = vmatprep.subr.bf16.mxu0 0
        %2073 = vmatpush2.bf16.msra.mxu0 0
        %2074 = vmatprep.subr.bf16.mxu0 0
        %2075 = vmatpush2.bf16.msra.mxu0 0
        %2076 = vmatprep.subr.bf16.mxu0 0
        %2077 = vmatpush2.bf16.msra.mxu0 0
        %2078 = vmatprep.subr.bf16.mxu0 0
        %2079 = vmatpush2.bf16.msra.mxu0 0
        %2080 = vmatprep.subr.bf16.mxu0 0
        %2081 = vmatpush2.bf16.msra.mxu0 0
        %2082 = vmatprep.subr.bf16.mxu0 0
        %2083 = vmatpush2.bf16.msra.mxu0 0
        %2084 = vmatprep.subr.bf16.mxu0 0
        %2085 = vmatpush2.bf16.msra.mxu0 0
        %2086 = vmatprep.subr.bf16.mxu0 0
        %2087 = vmatpush2.bf16.msra.mxu0 0
        %2088 = vmatprep.mubr.bf16.mxu0 0
        %2089 = vmatmul.mubr.bf16.gmra.mxu0 %v1822
        %v2090 = vpop.f32.mrf.mxu0
        %v2091 = vadd.f32 0.0, %v2090
        %v2092 = vpop.f32.mrf.mxu0
        %v2093 = vadd.f32 0.0, %v2092
        %v2094 = vpop.f32.mrf.mxu0
        %v2095 = vpop.f32.mrf.mxu0
        %2096 = vdwg.mxu0
        %v2097 = vadd.f32 %v1817, %v2050
        %v2098 = vadd.f32 %v1818, %v2052
        %v2099 = vadd.f32 %v1819, %v2091
        %v2100 = vadd.f32 %v1820, %v2093
        %v2101 = vxor.u32 %v2097, 2147483648
        %v2102 = vmul.f32 %v2101, 1.442695
        %v2103 = vpow.pop %v2102
        %v2104 = vadd.f32 %v2103, 1.0
        %v2105 = vrcp.pop %v2104
        %v2106 = vmul.f32 1.0, %v2105
        %v2107 = vxor.u32 %v2098, 2147483648
        %v2108 = vmul.f32 %v2107, 1.442695
        %v2109 = vpow.pop %v2108
        %v2110 = vadd.f32 %v2109, 1.0
        %v2111 = vrcp.pop %v2110
        %v2112 = vmul.f32 1.0, %v2111
        %v2113 = vtanh.pop %v2099
        %v2114 = vxor.u32 %v2100, 2147483648
        %v2115 = vmul.f32 %v2114, 1.442695
        %v2116 = vpow.pop %v2115
        %v2117 = vadd.f32 %v2116, 1.0
        %v2118 = vrcp.pop %v2117
        %v2119 = vmul.f32 1.0, %v2118
        %v2120 = vld [vmem:[#allocation3] sm:$0xff]
        %v2121 = vmul.f32 %v2112, %v2120
        %v2122 = vmul.f32 %v2106, %v2113
        %v2123 = vadd.f32 %v2121, %v2122
        %v2124 = vtanh.pop %v2123
        %v2125 = vmul.f32 %v2119, %v2124
        %2126 = vst [vmem:[#allocation3] sm:$0xff] %v2123
        %2127 = vst [vmem:[#allocation2] sm:$0xff] %v2125
        %s2128 = scalar_lea.vmem %s238, 40 [#allocation5]
        %2129 = vst [vmem:[%s2128] sm:$0xff] %v2125
        %s2130 = scalar_lea.vmem %s221, 192 [#allocation4]
        %v2131 = vld [vmem:[%s2130] sm:$0xff]
        %v2132 = vld [vmem:[%s2130 + $0x8] sm:$0xff]
        %v2133 = vld [vmem:[%s2130 + $0x10] sm:$0xff]
        %v2134 = vld [vmem:[%s2130 + $0x18] sm:$0xff]
        %v2135 = vld [vmem:[#allocation2] sm:$0xff]
        %v2136 = vpack.c.bf16 %v2135, %v2135
        %v2137 = vld [vmem:[%s1] sm:$0xff]
        %v2138 = vld [vmem:[%s1 + $0x8] sm:$0xff]
        %v2139 = vld [vmem:[%s1 + $0x10] sm:$0xff]
        %v2140 = vld [vmem:[%s1 + $0x18] sm:$0xff]
        %v2141 = vld [vmem:[%s1 + $0x20] sm:$0xff]
        %v2142 = vld [vmem:[%s1 + $0x28] sm:$0xff]
        %v2143 = vld [vmem:[%s1 + $0x30] sm:$0xff]
        %v2144 = vld [vmem:[%s1 + $0x38] sm:$0xff]
        %v2145 = vld [vmem:[%s1 + $0x40] sm:$0xff]
        %v2146 = vld [vmem:[%s1 + $0x48] sm:$0xff]
        %v2147 = vld [vmem:[%s1 + $0x50] sm:$0xff]
        %v2148 = vld [vmem:[%s1 + $0x58] sm:$0xff]
        %v2149 = vld [vmem:[%s1 + $0x60] sm:$0xff]
        %v2150 = vld [vmem:[%s1 + $0x68] sm:$0xff]
        %v2151 = vld [vmem:[%s1 + $0x70] sm:$0xff]
        %v2152 = vld [vmem:[%s1 + $0x78] sm:$0xff]
        %v2153 = vld [vmem:[%s1 + $0x80] sm:$0xff]
        %v2154 = vld [vmem:[%s1 + $0x88] sm:$0xff]
        %v2155 = vld [vmem:[%s1 + $0x90] sm:$0xff]
        %v2156 = vld [vmem:[%s1 + $0x98] sm:$0xff]
        %v2157 = vld [vmem:[%s1 + $0xa0] sm:$0xff]
        %v2158 = vld [vmem:[%s1 + $0xa8] sm:$0xff]
        %v2159 = vld [vmem:[%s1 + $0xb0] sm:$0xff]
        %v2160 = vld [vmem:[%s1 + $0xb8] sm:$0xff]
        %v2161 = vld [vmem:[%s1 + $0xc0] sm:$0xff]
        %v2162 = vld [vmem:[%s1 + $0xc8] sm:$0xff]
        %v2163 = vld [vmem:[%s1 + $0xd0] sm:$0xff]
        %v2164 = vld [vmem:[%s1 + $0xd8] sm:$0xff]
        %v2165 = vld [vmem:[%s1 + $0xe0] sm:$0xff]
        %v2166 = vld [vmem:[%s1 + $0xe8] sm:$0xff]
        %v2167 = vld [vmem:[%s1 + $0xf0] sm:$0xff]
        %v2168 = vld [vmem:[%s1 + $0xf8] sm:$0xff]
        %v2201 = vunpack.c.l.b16 %v2137
        %v2202 = vunpack.c.h.b16 %v2137
        %v2203 = vunpack.c.l.b16 %v2138
        %v2204 = vunpack.c.h.b16 %v2138
        %v2205 = vunpack.c.l.b16 %v2139
        %v2206 = vunpack.c.h.b16 %v2139
        %v2207 = vunpack.c.l.b16 %v2140
        %v2208 = vunpack.c.h.b16 %v2140
        %v2209 = vunpack.c.l.b16 %v2141
        %v2210 = vunpack.c.h.b16 %v2141
        %v2211 = vunpack.c.l.b16 %v2142
        %v2212 = vunpack.c.h.b16 %v2142
        %v2213 = vunpack.c.l.b16 %v2143
        %v2214 = vunpack.c.h.b16 %v2143
        %v2215 = vunpack.c.l.b16 %v2144
        %v2216 = vunpack.c.h.b16 %v2144
        %v2217 = vunpack.c.l.b16 %v2145
        %v2218 = vunpack.c.h.b16 %v2145
        %v2219 = vunpack.c.l.b16 %v2146
        %v2220 = vunpack.c.h.b16 %v2146
        %v2221 = vunpack.c.l.b16 %v2147
        %v2222 = vunpack.c.h.b16 %v2147
        %v2223 = vunpack.c.l.b16 %v2148
        %v2224 = vunpack.c.h.b16 %v2148
        %v2225 = vunpack.c.l.b16 %v2149
        %v2226 = vunpack.c.h.b16 %v2149
        %v2227 = vunpack.c.l.b16 %v2150
        %v2228 = vunpack.c.h.b16 %v2150
        %v2229 = vunpack.c.l.b16 %v2151
        %v2230 = vunpack.c.h.b16 %v2151
        %v2231 = vunpack.c.l.b16 %v2152
        %v2232 = vunpack.c.h.b16 %v2152
        %v2233 = vunpack.c.l.b16 %v2153
        %v2234 = vunpack.c.h.b16 %v2153
        %v2235 = vunpack.c.l.b16 %v2154
        %v2236 = vunpack.c.h.b16 %v2154
        %v2237 = vunpack.c.l.b16 %v2155
        %v2238 = vunpack.c.h.b16 %v2155
        %v2239 = vunpack.c.l.b16 %v2156
        %v2240 = vunpack.c.h.b16 %v2156
        %v2241 = vunpack.c.l.b16 %v2157
        %v2242 = vunpack.c.h.b16 %v2157
        %v2243 = vunpack.c.l.b16 %v2158
        %v2244 = vunpack.c.h.b16 %v2158
        %v2245 = vunpack.c.l.b16 %v2159
        %v2246 = vunpack.c.h.b16 %v2159
        %v2247 = vunpack.c.l.b16 %v2160
        %v2248 = vunpack.c.h.b16 %v2160
        %v2249 = vunpack.c.l.b16 %v2161
        %v2250 = vunpack.c.h.b16 %v2161
        %v2251 = vunpack.c.l.b16 %v2162
        %v2252 = vunpack.c.h.b16 %v2162
        %v2253 = vunpack.c.l.b16 %v2163
        %v2254 = vunpack.c.h.b16 %v2163
        %v2255 = vunpack.c.l.b16 %v2164
        %v2256 = vunpack.c.h.b16 %v2164
        %v2257 = vunpack.c.l.b16 %v2165
        %v2258 = vunpack.c.h.b16 %v2165
        %v2259 = vunpack.c.l.b16 %v2166
        %v2260 = vunpack.c.h.b16 %v2166
        %v2261 = vunpack.c.l.b16 %v2167
        %v2262 = vunpack.c.h.b16 %v2167
        %v2263 = vunpack.c.l.b16 %v2168
        %v2264 = vunpack.c.h.b16 %v2168
        %v2265 = vpack.c.b16 %v2205, %v2201
        %v2266 = vpack.c.b16 %v2206, %v2202
        %v2267 = vpack.c.b16 %v2207, %v2203
        %v2268 = vpack.c.b16 %v2208, %v2204
        %v2269 = vpack.c.b16 %v2213, %v2209
        %v2270 = vpack.c.b16 %v2214, %v2210
        %v2271 = vpack.c.b16 %v2215, %v2211
        %v2272 = vpack.c.b16 %v2216, %v2212
        %v2273 = vpack.c.b16 %v2221, %v2217
        %v2274 = vpack.c.b16 %v2222, %v2218
        %v2275 = vpack.c.b16 %v2223, %v2219
        %v2276 = vpack.c.b16 %v2224, %v2220
        %v2277 = vpack.c.b16 %v2229, %v2225
        %v2278 = vpack.c.b16 %v2230, %v2226
        %v2279 = vpack.c.b16 %v2231, %v2227
        %v2280 = vpack.c.b16 %v2232, %v2228
        %v2281 = vpack.c.b16 %v2237, %v2233
        %v2282 = vpack.c.b16 %v2238, %v2234
        %v2283 = vpack.c.b16 %v2239, %v2235
        %v2284 = vpack.c.b16 %v2240, %v2236
        %v2285 = vpack.c.b16 %v2245, %v2241
        %v2286 = vpack.c.b16 %v2246, %v2242
        %v2287 = vpack.c.b16 %v2247, %v2243
        %v2288 = vpack.c.b16 %v2248, %v2244
        %v2289 = vpack.c.b16 %v2253, %v2249
        %v2290 = vpack.c.b16 %v2254, %v2250
        %v2291 = vpack.c.b16 %v2255, %v2251
        %v2292 = vpack.c.b16 %v2256, %v2252
        %v2293 = vpack.c.b16 %v2261, %v2257
        %v2294 = vpack.c.b16 %v2262, %v2258
        %v2295 = vpack.c.b16 %v2263, %v2259
        %v2296 = vpack.c.b16 %v2264, %v2260
        %2329 = vmatprep.subr.bf16.mxu0 %v2294
        %2330 = vmatpush1.bf16.msra.mxu0 %v2293
        %2331 = vmatprep.subr.bf16.mxu0 %v2290
        %2332 = vmatpush1.bf16.msra.mxu0 %v2289
        %2333 = vmatprep.subr.bf16.mxu0 %v2286
        %2334 = vmatpush1.bf16.msra.mxu0 %v2285
        %2335 = vmatprep.subr.bf16.mxu0 %v2282
        %2336 = vmatpush1.bf16.msra.mxu0 %v2281
        %2337 = vmatprep.subr.bf16.mxu0 %v2278
        %2338 = vmatpush1.bf16.msra.mxu0 %v2277
        %2339 = vmatprep.subr.bf16.mxu0 %v2274
        %2340 = vmatpush1.bf16.msra.mxu0 %v2273
        %2341 = vmatprep.subr.bf16.mxu0 %v2270
        %2342 = vmatpush1.bf16.msra.mxu0 %v2269
        %2343 = vmatprep.subr.bf16.mxu0 %v2266
        %2344 = vmatpush1.bf16.msra.mxu0 %v2265
        %2345 = vmatprep.subr.bf16.mxu0 0
        %2346 = vmatpush2.bf16.msra.mxu0 0
        %2347 = vmatprep.subr.bf16.mxu0 0
        %2348 = vmatpush2.bf16.msra.mxu0 0
        %2349 = vmatprep.subr.bf16.mxu0 0
        %2350 = vmatpush2.bf16.msra.mxu0 0
        %2351 = vmatprep.subr.bf16.mxu0 0
        %2352 = vmatpush2.bf16.msra.mxu0 0
        %2353 = vmatprep.subr.bf16.mxu0 0
        %2354 = vmatpush2.bf16.msra.mxu0 0
        %2355 = vmatprep.subr.bf16.mxu0 0
        %2356 = vmatpush2.bf16.msra.mxu0 0
        %2357 = vmatprep.subr.bf16.mxu0 0
        %2358 = vmatpush2.bf16.msra.mxu0 0
        %2359 = vmatprep.subr.bf16.mxu0 0
        %2360 = vmatpush2.bf16.msra.mxu0 0
        %2361 = vmatprep.mubr.bf16.mxu0 0
        %2362 = vmatmul.mubr.bf16.gmra.mxu0 %v2136
        %v2363 = vpop.f32.mrf.mxu0
        %v2364 = vadd.f32 0.0, %v2363
        %v2365 = vpop.f32.mrf.mxu0
        %v2366 = vadd.f32 0.0, %v2365
        %v2367 = vpop.f32.mrf.mxu0
        %v2368 = vpop.f32.mrf.mxu0
        %2369 = vdwg.mxu0
        %2370 = vmatprep.subr.bf16.mxu0 %v2296
        %2371 = vmatpush1.bf16.msra.mxu0 %v2295
        %2372 = vmatprep.subr.bf16.mxu0 %v2292
        %2373 = vmatpush1.bf16.msra.mxu0 %v2291
        %2374 = vmatprep.subr.bf16.mxu0 %v2288
        %2375 = vmatpush1.bf16.msra.mxu0 %v2287
        %2376 = vmatprep.subr.bf16.mxu0 %v2284
        %2377 = vmatpush1.bf16.msra.mxu0 %v2283
        %2378 = vmatprep.subr.bf16.mxu0 %v2280
        %2379 = vmatpush1.bf16.msra.mxu0 %v2279
        %2380 = vmatprep.subr.bf16.mxu0 %v2276
        %2381 = vmatpush1.bf16.msra.mxu0 %v2275
        %2382 = vmatprep.subr.bf16.mxu0 %v2272
        %2383 = vmatpush1.bf16.msra.mxu0 %v2271
        %2384 = vmatprep.subr.bf16.mxu0 %v2268
        %2385 = vmatpush1.bf16.msra.mxu0 %v2267
        %2386 = vmatprep.subr.bf16.mxu0 0
        %2387 = vmatpush2.bf16.msra.mxu0 0
        %2388 = vmatprep.subr.bf16.mxu0 0
        %2389 = vmatpush2.bf16.msra.mxu0 0
        %2390 = vmatprep.subr.bf16.mxu0 0
        %2391 = vmatpush2.bf16.msra.mxu0 0
        %2392 = vmatprep.subr.bf16.mxu0 0
        %2393 = vmatpush2.bf16.msra.mxu0 0
        %2394 = vmatprep.subr.bf16.mxu0 0
        %2395 = vmatpush2.bf16.msra.mxu0 0
        %2396 = vmatprep.subr.bf16.mxu0 0
        %2397 = vmatpush2.bf16.msra.mxu0 0
        %2398 = vmatprep.subr.bf16.mxu0 0
        %2399 = vmatpush2.bf16.msra.mxu0 0
        %2400 = vmatprep.subr.bf16.mxu0 0
        %2401 = vmatpush2.bf16.msra.mxu0 0
        %2402 = vmatprep.mubr.bf16.mxu0 0
        %2403 = vmatmul.mubr.bf16.gmra.mxu0 %v2136
        %v2404 = vpop.f32.mrf.mxu0
        %v2405 = vadd.f32 0.0, %v2404
        %v2406 = vpop.f32.mrf.mxu0
        %v2407 = vadd.f32 0.0, %v2406
        %v2408 = vpop.f32.mrf.mxu0
        %v2409 = vpop.f32.mrf.mxu0
        %2410 = vdwg.mxu0
        %v2411 = vadd.f32 %v2131, %v2364
        %v2412 = vadd.f32 %v2132, %v2366
        %v2413 = vadd.f32 %v2133, %v2405
        %v2414 = vadd.f32 %v2134, %v2407
        %v2415 = vxor.u32 %v2411, 2147483648
        %v2416 = vmul.f32 %v2415, 1.442695
        %v2417 = vpow.pop %v2416
        %v2418 = vadd.f32 %v2417, 1.0
        %v2419 = vrcp.pop %v2418
        %v2420 = vmul.f32 1.0, %v2419
        %v2421 = vxor.u32 %v2412, 2147483648
        %v2422 = vmul.f32 %v2421, 1.442695
        %v2423 = vpow.pop %v2422
        %v2424 = vadd.f32 %v2423, 1.0
        %v2425 = vrcp.pop %v2424
        %v2426 = vmul.f32 1.0, %v2425
        %v2427 = vtanh.pop %v2413
        %v2428 = vxor.u32 %v2414, 2147483648
        %v2429 = vmul.f32 %v2428, 1.442695
        %v2430 = vpow.pop %v2429
        %v2431 = vadd.f32 %v2430, 1.0
        %v2432 = vrcp.pop %v2431
        %v2433 = vmul.f32 1.0, %v2432
        %v2434 = vld [vmem:[#allocation3] sm:$0xff]
        %v2435 = vmul.f32 %v2426, %v2434
        %v2436 = vmul.f32 %v2420, %v2427
        %v2437 = vadd.f32 %v2435, %v2436
        %v2438 = vtanh.pop %v2437
        %v2439 = vmul.f32 %v2433, %v2438
        %2440 = vst [vmem:[#allocation3] sm:$0xff] %v2437
        %2441 = vst [vmem:[#allocation2] sm:$0xff] %v2439
        %s2442 = scalar_lea.vmem %s238, 48 [#allocation5]
        %2443 = vst [vmem:[%s2442] sm:$0xff] %v2439
        %s2444 = scalar_lea.vmem %s221, 224 [#allocation4]
        %v2445 = vld [vmem:[%s2444] sm:$0xff]
        %v2446 = vld [vmem:[%s2444 + $0x8] sm:$0xff]
        %v2447 = vld [vmem:[%s2444 + $0x10] sm:$0xff]
        %v2448 = vld [vmem:[%s2444 + $0x18] sm:$0xff]
        %v2449 = vld [vmem:[#allocation2] sm:$0xff]
        %v2450 = vpack.c.bf16 %v2449, %v2449
        %v2451 = vld [vmem:[%s1] sm:$0xff]
        %v2452 = vld [vmem:[%s1 + $0x8] sm:$0xff]
        %v2453 = vld [vmem:[%s1 + $0x10] sm:$0xff]
        %v2454 = vld [vmem:[%s1 + $0x18] sm:$0xff]
        %v2455 = vld [vmem:[%s1 + $0x20] sm:$0xff]
        %v2456 = vld [vmem:[%s1 + $0x28] sm:$0xff]
        %v2457 = vld [vmem:[%s1 + $0x30] sm:$0xff]
        %v2458 = vld [vmem:[%s1 + $0x38] sm:$0xff]
        %v2459 = vld [vmem:[%s1 + $0x40] sm:$0xff]
        %v2460 = vld [vmem:[%s1 + $0x48] sm:$0xff]
        %v2461 = vld [vmem:[%s1 + $0x50] sm:$0xff]
        %v2462 = vld [vmem:[%s1 + $0x58] sm:$0xff]
        %v2463 = vld [vmem:[%s1 + $0x60] sm:$0xff]
        %v2464 = vld [vmem:[%s1 + $0x68] sm:$0xff]
        %v2465 = vld [vmem:[%s1 + $0x70] sm:$0xff]
        %v2466 = vld [vmem:[%s1 + $0x78] sm:$0xff]
        %v2467 = vld [vmem:[%s1 + $0x80] sm:$0xff]
        %v2468 = vld [vmem:[%s1 + $0x88] sm:$0xff]
        %v2469 = vld [vmem:[%s1 + $0x90] sm:$0xff]
        %v2470 = vld [vmem:[%s1 + $0x98] sm:$0xff]
        %v2471 = vld [vmem:[%s1 + $0xa0] sm:$0xff]
        %v2472 = vld [vmem:[%s1 + $0xa8] sm:$0xff]
        %v2473 = vld [vmem:[%s1 + $0xb0] sm:$0xff]
        %v2474 = vld [vmem:[%s1 + $0xb8] sm:$0xff]
        %v2475 = vld [vmem:[%s1 + $0xc0] sm:$0xff]
        %v2476 = vld [vmem:[%s1 + $0xc8] sm:$0xff]
        %v2477 = vld [vmem:[%s1 + $0xd0] sm:$0xff]
        %v2478 = vld [vmem:[%s1 + $0xd8] sm:$0xff]
        %v2479 = vld [vmem:[%s1 + $0xe0] sm:$0xff]
        %v2480 = vld [vmem:[%s1 + $0xe8] sm:$0xff]
        %v2481 = vld [vmem:[%s1 + $0xf0] sm:$0xff]
        %v2482 = vld [vmem:[%s1 + $0xf8] sm:$0xff]
        %v2515 = vunpack.c.l.b16 %v2451
        %v2516 = vunpack.c.h.b16 %v2451
        %v2517 = vunpack.c.l.b16 %v2452
        %v2518 = vunpack.c.h.b16 %v2452
        %v2519 = vunpack.c.l.b16 %v2453
        %v2520 = vunpack.c.h.b16 %v2453
        %v2521 = vunpack.c.l.b16 %v2454
        %v2522 = vunpack.c.h.b16 %v2454
        %v2523 = vunpack.c.l.b16 %v2455
        %v2524 = vunpack.c.h.b16 %v2455
        %v2525 = vunpack.c.l.b16 %v2456
        %v2526 = vunpack.c.h.b16 %v2456
        %v2527 = vunpack.c.l.b16 %v2457
        %v2528 = vunpack.c.h.b16 %v2457
        %v2529 = vunpack.c.l.b16 %v2458
        %v2530 = vunpack.c.h.b16 %v2458
        %v2531 = vunpack.c.l.b16 %v2459
        %v2532 = vunpack.c.h.b16 %v2459
        %v2533 = vunpack.c.l.b16 %v2460
        %v2534 = vunpack.c.h.b16 %v2460
        %v2535 = vunpack.c.l.b16 %v2461
        %v2536 = vunpack.c.h.b16 %v2461
        %v2537 = vunpack.c.l.b16 %v2462
        %v2538 = vunpack.c.h.b16 %v2462
        %v2539 = vunpack.c.l.b16 %v2463
        %v2540 = vunpack.c.h.b16 %v2463
        %v2541 = vunpack.c.l.b16 %v2464
        %v2542 = vunpack.c.h.b16 %v2464
        %v2543 = vunpack.c.l.b16 %v2465
        %v2544 = vunpack.c.h.b16 %v2465
        %v2545 = vunpack.c.l.b16 %v2466
        %v2546 = vunpack.c.h.b16 %v2466
        %v2547 = vunpack.c.l.b16 %v2467
        %v2548 = vunpack.c.h.b16 %v2467
        %v2549 = vunpack.c.l.b16 %v2468
        %v2550 = vunpack.c.h.b16 %v2468
        %v2551 = vunpack.c.l.b16 %v2469
        %v2552 = vunpack.c.h.b16 %v2469
        %v2553 = vunpack.c.l.b16 %v2470
        %v2554 = vunpack.c.h.b16 %v2470
        %v2555 = vunpack.c.l.b16 %v2471
        %v2556 = vunpack.c.h.b16 %v2471
        %v2557 = vunpack.c.l.b16 %v2472
        %v2558 = vunpack.c.h.b16 %v2472
        %v2559 = vunpack.c.l.b16 %v2473
        %v2560 = vunpack.c.h.b16 %v2473
        %v2561 = vunpack.c.l.b16 %v2474
        %v2562 = vunpack.c.h.b16 %v2474
        %v2563 = vunpack.c.l.b16 %v2475
        %v2564 = vunpack.c.h.b16 %v2475
        %v2565 = vunpack.c.l.b16 %v2476
        %v2566 = vunpack.c.h.b16 %v2476
        %v2567 = vunpack.c.l.b16 %v2477
        %v2568 = vunpack.c.h.b16 %v2477
        %v2569 = vunpack.c.l.b16 %v2478
        %v2570 = vunpack.c.h.b16 %v2478
        %v2571 = vunpack.c.l.b16 %v2479
        %v2572 = vunpack.c.h.b16 %v2479
        %v2573 = vunpack.c.l.b16 %v2480
        %v2574 = vunpack.c.h.b16 %v2480
        %v2575 = vunpack.c.l.b16 %v2481
        %v2576 = vunpack.c.h.b16 %v2481
        %v2577 = vunpack.c.l.b16 %v2482
        %v2578 = vunpack.c.h.b16 %v2482
        %v2579 = vpack.c.b16 %v2519, %v2515
        %v2580 = vpack.c.b16 %v2520, %v2516
        %v2581 = vpack.c.b16 %v2521, %v2517
        %v2582 = vpack.c.b16 %v2522, %v2518
        %v2583 = vpack.c.b16 %v2527, %v2523
        %v2584 = vpack.c.b16 %v2528, %v2524
        %v2585 = vpack.c.b16 %v2529, %v2525
        %v2586 = vpack.c.b16 %v2530, %v2526
        %v2587 = vpack.c.b16 %v2535, %v2531
        %v2588 = vpack.c.b16 %v2536, %v2532
        %v2589 = vpack.c.b16 %v2537, %v2533
        %v2590 = vpack.c.b16 %v2538, %v2534
        %v2591 = vpack.c.b16 %v2543, %v2539
        %v2592 = vpack.c.b16 %v2544, %v2540
        %v2593 = vpack.c.b16 %v2545, %v2541
        %v2594 = vpack.c.b16 %v2546, %v2542
        %v2595 = vpack.c.b16 %v2551, %v2547
        %v2596 = vpack.c.b16 %v2552, %v2548
        %v2597 = vpack.c.b16 %v2553, %v2549
        %v2598 = vpack.c.b16 %v2554, %v2550
        %v2599 = vpack.c.b16 %v2559, %v2555
        %v2600 = vpack.c.b16 %v2560, %v2556
        %v2601 = vpack.c.b16 %v2561, %v2557
        %v2602 = vpack.c.b16 %v2562, %v2558
        %v2603 = vpack.c.b16 %v2567, %v2563
        %v2604 = vpack.c.b16 %v2568, %v2564
        %v2605 = vpack.c.b16 %v2569, %v2565
        %v2606 = vpack.c.b16 %v2570, %v2566
        %v2607 = vpack.c.b16 %v2575, %v2571
        %v2608 = vpack.c.b16 %v2576, %v2572
        %v2609 = vpack.c.b16 %v2577, %v2573
        %v2610 = vpack.c.b16 %v2578, %v2574
        %2643 = vmatprep.subr.bf16.mxu0 %v2608
        %2644 = vmatpush1.bf16.msra.mxu0 %v2607
        %2645 = vmatprep.subr.bf16.mxu0 %v2604
        %2646 = vmatpush1.bf16.msra.mxu0 %v2603
        %2647 = vmatprep.subr.bf16.mxu0 %v2600
        %2648 = vmatpush1.bf16.msra.mxu0 %v2599
        %2649 = vmatprep.subr.bf16.mxu0 %v2596
        %2650 = vmatpush1.bf16.msra.mxu0 %v2595
        %2651 = vmatprep.subr.bf16.mxu0 %v2592
        %2652 = vmatpush1.bf16.msra.mxu0 %v2591
        %2653 = vmatprep.subr.bf16.mxu0 %v2588
        %2654 = vmatpush1.bf16.msra.mxu0 %v2587
        %2655 = vmatprep.subr.bf16.mxu0 %v2584
        %2656 = vmatpush1.bf16.msra.mxu0 %v2583
        %2657 = vmatprep.subr.bf16.mxu0 %v2580
        %2658 = vmatpush1.bf16.msra.mxu0 %v2579
        %2659 = vmatprep.subr.bf16.mxu0 0
        %2660 = vmatpush2.bf16.msra.mxu0 0
        %2661 = vmatprep.subr.bf16.mxu0 0
        %2662 = vmatpush2.bf16.msra.mxu0 0
        %2663 = vmatprep.subr.bf16.mxu0 0
        %2664 = vmatpush2.bf16.msra.mxu0 0
        %2665 = vmatprep.subr.bf16.mxu0 0
        %2666 = vmatpush2.bf16.msra.mxu0 0
        %2667 = vmatprep.subr.bf16.mxu0 0
        %2668 = vmatpush2.bf16.msra.mxu0 0
        %2669 = vmatprep.subr.bf16.mxu0 0
        %2670 = vmatpush2.bf16.msra.mxu0 0
        %2671 = vmatprep.subr.bf16.mxu0 0
        %2672 = vmatpush2.bf16.msra.mxu0 0
        %2673 = vmatprep.subr.bf16.mxu0 0
        %2674 = vmatpush2.bf16.msra.mxu0 0
        %2675 = vmatprep.mubr.bf16.mxu0 0
        %2676 = vmatmul.mubr.bf16.gmra.mxu0 %v2450
        %v2677 = vpop.f32.mrf.mxu0
        %v2678 = vadd.f32 0.0, %v2677
        %v2679 = vpop.f32.mrf.mxu0
        %v2680 = vadd.f32 0.0, %v2679
        %v2681 = vpop.f32.mrf.mxu0
        %v2682 = vpop.f32.mrf.mxu0
        %2683 = vdwg.mxu0
        %2684 = vmatprep.subr.bf16.mxu0 %v2610
        %2685 = vmatpush1.bf16.msra.mxu0 %v2609
        %2686 = vmatprep.subr.bf16.mxu0 %v2606
        %2687 = vmatpush1.bf16.msra.mxu0 %v2605
        %2688 = vmatprep.subr.bf16.mxu0 %v2602
        %2689 = vmatpush1.bf16.msra.mxu0 %v2601
        %2690 = vmatprep.subr.bf16.mxu0 %v2598
        %2691 = vmatpush1.bf16.msra.mxu0 %v2597
        %2692 = vmatprep.subr.bf16.mxu0 %v2594
        %2693 = vmatpush1.bf16.msra.mxu0 %v2593
        %2694 = vmatprep.subr.bf16.mxu0 %v2590
        %2695 = vmatpush1.bf16.msra.mxu0 %v2589
        %2696 = vmatprep.subr.bf16.mxu0 %v2586
        %2697 = vmatpush1.bf16.msra.mxu0 %v2585
        %2698 = vmatprep.subr.bf16.mxu0 %v2582
        %2699 = vmatpush1.bf16.msra.mxu0 %v2581
        %2700 = vmatprep.subr.bf16.mxu0 0
        %2701 = vmatpush2.bf16.msra.mxu0 0
        %2702 = vmatprep.subr.bf16.mxu0 0
        %2703 = vmatpush2.bf16.msra.mxu0 0
        %2704 = vmatprep.subr.bf16.mxu0 0
        %2705 = vmatpush2.bf16.msra.mxu0 0
        %2706 = vmatprep.subr.bf16.mxu0 0
        %2707 = vmatpush2.bf16.msra.mxu0 0
        %2708 = vmatprep.subr.bf16.mxu0 0
        %2709 = vmatpush2.bf16.msra.mxu0 0
        %2710 = vmatprep.subr.bf16.mxu0 0
        %2711 = vmatpush2.bf16.msra.mxu0 0
        %2712 = vmatprep.subr.bf16.mxu0 0
        %2713 = vmatpush2.bf16.msra.mxu0 0
        %2714 = vmatprep.subr.bf16.mxu0 0
        %2715 = vmatpush2.bf16.msra.mxu0 0
        %2716 = vmatprep.mubr.bf16.mxu0 0
        %2717 = vmatmul.mubr.bf16.gmra.mxu0 %v2450
        %v2718 = vpop.f32.mrf.mxu0
        %v2719 = vadd.f32 0.0, %v2718
        %v2720 = vpop.f32.mrf.mxu0
        %v2721 = vadd.f32 0.0, %v2720
        %v2722 = vpop.f32.mrf.mxu0
        %v2723 = vpop.f32.mrf.mxu0
        %2724 = vdwg.mxu0
        %v2725 = vadd.f32 %v2445, %v2678
        %v2726 = vadd.f32 %v2446, %v2680
        %v2727 = vadd.f32 %v2447, %v2719
        %v2728 = vadd.f32 %v2448, %v2721
        %v2729 = vxor.u32 %v2725, 2147483648
        %v2730 = vmul.f32 %v2729, 1.442695
        %v2731 = vpow.pop %v2730
        %v2732 = vadd.f32 %v2731, 1.0
        %v2733 = vrcp.pop %v2732
        %v2734 = vmul.f32 1.0, %v2733
        %v2735 = vxor.u32 %v2726, 2147483648
        %v2736 = vmul.f32 %v2735, 1.442695
        %v2737 = vpow.pop %v2736
        %v2738 = vadd.f32 %v2737, 1.0
        %v2739 = vrcp.pop %v2738
        %v2740 = vmul.f32 1.0, %v2739
        %v2741 = vtanh.pop %v2727
        %v2742 = vxor.u32 %v2728, 2147483648
        %v2743 = vmul.f32 %v2742, 1.442695
        %v2744 = vpow.pop %v2743
        %v2745 = vadd.f32 %v2744, 1.0
        %v2746 = vrcp.pop %v2745
        %v2747 = vmul.f32 1.0, %v2746
        %v2748 = vld [vmem:[#allocation3] sm:$0xff]
        %v2749 = vmul.f32 %v2740, %v2748
        %v2750 = vmul.f32 %v2734, %v2741
        %v2751 = vadd.f32 %v2749, %v2750
        %v2752 = vtanh.pop %v2751
        %v2753 = vmul.f32 %v2747, %v2752
        %2754 = vst [vmem:[#allocation3] sm:$0xff] %v2751
        %2755 = vst [vmem:[#allocation2] sm:$0xff] %v2753
        %s2756 = scalar_lea.vmem %s238, 56 [#allocation5]
        %2757 = vst [vmem:[%s2756] sm:$0xff] %v2753
        %s2758 = sand.u32 %s84, 1
        %s2759 = sand.u32 %s84, 1
        %s2760 = smul.addr %s2759, 64
        %s2761 = scalar_lea.vmem [#allocation5], %s2760
        // Predicated region
        $region56: #{rnn_lm_forward.4} parent=46 // pred_check
          %p2762 = pneg %p94
        $region57: #{rnn_lm_forward.4} parent=46 // pred_check_branch
          %2764 = sbr.rel (%p2762) target = $region59
        $region58: #{rnn_lm_forward.4} parent=46 // pred_region
          %s2765 = smul.u32 8, %s18
          %s2766 = smul.addr %s2765, 2
          %s2767 = sadd.s32 %s17, %s2766
          %s2768 = smul.addr %s2767, 8
          %s2769 = scalar_lea.vmem %s2, %s2768
          // Predicated region
          $region60: #{rnn_lm_forward.4} parent=58 // pred_check
            _
          $region61: #{rnn_lm_forward.4} parent=58 // pred_check_branch
            %2771 = sbr.rel (0) target = $region63
          $region62: #{rnn_lm_forward.4} parent=58 // pred_region
            // Predicated region
            $region64: #{rnn_lm_forward.4} parent=62 // pred_check
              _
            $region65: #{rnn_lm_forward.4} parent=62 // pred_check_branch
              %2773 = sbr.rel (0) target = $region67
            $region66: #{rnn_lm_forward.4} parent=62 // pred_region
              // Predicated region
              $region79: #{rnn_lm_forward.4} parent=66 // pred_check
                _
              $region80: #{rnn_lm_forward.4} parent=66 // pred_check_branch
                %2803 = sbr.rel (0) target = $region82
              $region81: #{rnn_lm_forward.4} parent=66 // pred_region
                loop: start=0, step=1, limit=1
                $region83: #{rnn_lm_forward.4} parent=81 // loop_pre_header
                  _
                $region84: #{rnn_lm_forward.4} parent=81 // loop_header
                  %s2805 = sphi 0, %s2809
                  %p2806 = scmp.ge.s32.totalorder %s2805, 1
                  %s2810 = sphi %s2761, %s2761
                  %s2811 = sphi %s2769, %s2769
                $region85: #{rnn_lm_forward.4} parent=81 // loop_header_branch
                  %2808 = sbr.rel (%p2806) target = $region89
                $region86: #{rnn_lm_forward.4} parent=81 // loop_body
                  %v2812 = vld [vmem:[%s2810] sm:$0xff]
                  %2813 = vst [vmem:[%s2811] sm:$0xff] %v2812
                  %v2814 = vld [vmem:[%s2810 + $0x8] sm:$0xff]
                  %2815 = vst [vmem:[%s2811 + $0x10] sm:$0xff] %v2814
                  %v2816 = vld [vmem:[%s2810 + $0x10] sm:$0xff]
                  %2817 = vst [vmem:[%s2811 + $0x20] sm:$0xff] %v2816
                  %v2818 = vld [vmem:[%s2810 + $0x18] sm:$0xff]
                  %2819 = vst [vmem:[%s2811 + $0x30] sm:$0xff] %v2818
                  %v2820 = vld [vmem:[%s2810 + $0x20] sm:$0xff]
                  %2821 = vst [vmem:[%s2811 + $0x40] sm:$0xff] %v2820
                  %v2822 = vld [vmem:[%s2810 + $0x28] sm:$0xff]
                  %2823 = vst [vmem:[%s2811 + $0x50] sm:$0xff] %v2822
                  %v2824 = vld [vmem:[%s2810 + $0x30] sm:$0xff]
                  %2825 = vst [vmem:[%s2811 + $0x60] sm:$0xff] %v2824
                  %v2826 = vld [vmem:[%s2810 + $0x38] sm:$0xff]
                  %2827 = vst [vmem:[%s2811 + $0x70] sm:$0xff] %v2826
                $region87: #{rnn_lm_forward.4} parent=81 // loop_footer
                  %s2809 = sadd.s32 1, %s2805
                $region88: #{rnn_lm_forward.4} parent=81 // loop_footer_branch
                  %2804 = sbr.rel target = $region84
                $region89: #{rnn_lm_forward.4} parent=81 // loop_exit
                  _
              $region82: #{rnn_lm_forward.4} parent=66 // pred_fallthru
                _
              // Predicated region
              $region90: #{rnn_lm_forward.4} parent=66 // pred_check
                _
              $region91: #{rnn_lm_forward.4} parent=66 // pred_check_branch
                %2829 = sbr.rel target = $region93
              $region92: #{rnn_lm_forward.4} parent=66 // pred_region
                _
              $region93: #{rnn_lm_forward.4} parent=66 // pred_fallthru
                _
            $region67: #{rnn_lm_forward.4} parent=62 // pred_fallthru
              _
            // Predicated region
            $region68: #{rnn_lm_forward.4} parent=62 // pred_check
              _
            $region69: #{rnn_lm_forward.4} parent=62 // pred_check_branch
              %2775 = sbr.rel target = $region71
            $region70: #{rnn_lm_forward.4} parent=62 // pred_region
              %s2777 = ssub.s32 256, 1
              loop: start=0, step=1, limit=1
              $region72: #{rnn_lm_forward.4} parent=70 // loop_pre_header
                _
              $region73: #{rnn_lm_forward.4} parent=70 // loop_header
                %s2779 = sphi 0, %s2783
                %p2780 = scmp.ge.s32.totalorder %s2779, 1
                %s2784 = sphi %s2761, %s2761
                %s2785 = sphi %s2769, %s2769
              $region74: #{rnn_lm_forward.4} parent=70 // loop_header_branch
                %2782 = sbr.rel (%p2780) target = $region78
              $region75: #{rnn_lm_forward.4} parent=70 // loop_body
                %v2786 = vld [vmem:[%s2784] sm:%s2777]
                %2787 = vst [vmem:[%s2785] sm:%s2777] %v2786
                %v2788 = vld [vmem:[%s2784 + $0x8] sm:%s2777]
                %2789 = vst [vmem:[%s2785 + $0x10] sm:%s2777] %v2788
                %v2790 = vld [vmem:[%s2784 + $0x10] sm:%s2777]
                %2791 = vst [vmem:[%s2785 + $0x20] sm:%s2777] %v2790
                %v2792 = vld [vmem:[%s2784 + $0x18] sm:%s2777]
                %2793 = vst [vmem:[%s2785 + $0x30] sm:%s2777] %v2792
                %v2794 = vld [vmem:[%s2784 + $0x20] sm:%s2777]
                %2795 = vst [vmem:[%s2785 + $0x40] sm:%s2777] %v2794
                %v2796 = vld [vmem:[%s2784 + $0x28] sm:%s2777]
                %2797 = vst [vmem:[%s2785 + $0x50] sm:%s2777] %v2796
                %v2798 = vld [vmem:[%s2784 + $0x30] sm:%s2777]
                %2799 = vst [vmem:[%s2785 + $0x60] sm:%s2777] %v2798
                %v2800 = vld [vmem:[%s2784 + $0x38] sm:%s2777]
                %2801 = vst [vmem:[%s2785 + $0x70] sm:%s2777] %v2800
              $region76: #{rnn_lm_forward.4} parent=70 // loop_footer
                %s2783 = sadd.s32 1, %s2779
              $region77: #{rnn_lm_forward.4} parent=70 // loop_footer_branch
                %2778 = sbr.rel target = $region73
              $region78: #{rnn_lm_forward.4} parent=70 // loop_exit
                _
            $region71: #{rnn_lm_forward.4} parent=62 // pred_fallthru
              _
          $region63: #{rnn_lm_forward.4} parent=58 // pred_fallthru
            _
          %2830 = vnop
        $region59: #{rnn_lm_forward.4} parent=46 // pred_fallthru
          _
      $region47: #{rnn_lm_forward.4} parent=5 // pred_fallthru
        _
      %p2831 = scmp.le.s32.totalorder 2, %s8
      // Predicated region
      $region94: #{rnn_lm_forward.4} parent=5 // pred_check
        %p2832 = pneg %p2831
      $region95: #{rnn_lm_forward.4} parent=5 // pred_check_branch
        %2834 = sbr.rel (%p2832) target = $region97
      $region96: #{rnn_lm_forward.4} parent=5 // pred_region
        %s2835 = ssub.s32 %s8, 2
        // Predicated region
        $region98: #{rnn_lm_forward.4} parent=96 // pred_check
          %p2836 = pneg %p100
        $region99: #{rnn_lm_forward.4} parent=96 // pred_check_branch
          %2838 = sbr.rel (%p2836) target = $region101
        $region100: #{rnn_lm_forward.4} parent=96 // pred_region
          %s2839 = sand.u32 %s85, 1
          %s2840 = sand.u32 %s85, 1
          %s2841 = smul.addr %s2840, 64
          %s2842 = scalar_lea.vmem [#allocation5], %s2841
        $region101: #{rnn_lm_forward.4} parent=96 // pred_fallthru
          _
      $region97: #{rnn_lm_forward.4} parent=5 // pred_fallthru
        _
    $region6: #{rnn_lm_forward.4} parent=1 // loop_footer
      %s12 = sadd.s32 1, %s8
    $region7: #{rnn_lm_forward.4} parent=1 // loop_footer_branch
      %7 = sbr.rel target = $region3
    $region8: #{rnn_lm_forward.4} parent=1 // loop_exit
      _

</llo_original>
